<compile_context>
chip_gen: v5e
topology: v5e:2x2
jax: 0.10.0
libtpu: 0.0.40
codegen_flags: <defaults>
</compile_context>

<pallas_src>
import functools

import numpy as np
import jax
import jax.numpy as jnp
from jax import lax
from jax.experimental import pallas as pl
from jax.experimental.pallas import tpu as pltpu


# ------------------------------ fused stage kernel --------------------------- #

def _res_stage_kernel(*refs, rep, stride, has_down, h, w, cin, planes, ho, wo):
    """One batch sample per grid step: all BasicBlocks + avg-pool + fc_ann."""
    n_in = 1 + 6 * rep + (3 if has_down else 0) + 2
    in_refs = refs[:n_in]
    out_ref, logit_ref, pred_ref = refs[n_in:n_in + 3]
    pad0_ref, pad_ref, col_ref = refs[n_in + 3:]

    idx = 0
    x_ref = in_refs[idx]; idx += 1
    blocks = []
    for b in range(rep):
        blk = {
            "w1": in_refs[idx], "s1": in_refs[idx + 1], "b1": in_refs[idx + 2],
            "w2": in_refs[idx + 3], "s2": in_refs[idx + 4], "b2": in_refs[idx + 5],
        }
        idx += 6
        if b == 0 and has_down:
            blk["wd"] = in_refs[idx]
            blk["sd"] = in_refs[idx + 1]
            blk["bd"] = in_refs[idx + 2]
            idx += 3
        blocks.append(blk)
    wfc_ref = in_refs[idx]
    bfc_ref = in_refs[idx + 1]

    m = ho * wo

    def conv3x3(src_ref, c, w_ref, s_ref, b_ref, strd, relu):
        """3x3 conv (halo already in src_ref) + folded BN (+ReLU) -> (m, planes)."""
        # im2col: pack the 9 shifted taps along the lane axis of VMEM scratch,
        # then contract once on the MXU: (m, 9*c) @ (9*c, planes).
        for kh in range(3):
            for kw in range(3):
                t = kh * 3 + kw
                if strd == 1:
                    patch = src_ref[kh:kh + ho, kw:kw + wo, :]
                else:
                    patch = src_ref[pl.ds(kh, ho, stride=strd),
                                    pl.ds(kw, wo, stride=strd), :]
                col_ref[:, :, t * c:(t + 1) * c] = patch
        cols = col_ref[:, :, :9 * c].reshape(m, 9 * c)
        y = jnp.dot(cols, w_ref[...], preferred_element_type=jnp.float32)
        y = y * s_ref[...] + b_ref[...]
        if relu:
            y = jnp.maximum(y, 0.0)
        return y

    # Zero the padding halos once per sample (interiors are always overwritten).
    pad0_ref[...] = jnp.zeros_like(pad0_ref)
    pad_ref[...] = jnp.zeros_like(pad_ref)

    # -------------------- block 0 (may be strided / have downsample) ------------
    blk = blocks[0]
    pad0_ref[1:h + 1, 1:w + 1, :] = x_ref[0]
    y = conv3x3(pad0_ref, cin, blk["w1"], blk["s1"], blk["b1"], stride, relu=True)

    if has_down:
        # 1x1 / stride-2 / pad-0 downsample conv + BN (PyTorch hard-codes stride 2).
        xs = pad0_ref[pl.ds(1, ho, stride=stride), pl.ds(1, wo, stride=stride), :]
        res = jnp.dot(xs.reshape(m, cin), blk["wd"][...],
                      preferred_element_type=jnp.float32)
        res = res * blk["sd"][...] + blk["bd"][...]
    else:
        # identity residual (stride == 1 and cin == planes)
        res = pad0_ref[1:h + 1, 1:w + 1, :].reshape(m, planes)

    pad_ref[1:ho + 1, 1:wo + 1, :] = y.reshape(ho, wo, planes)
    y = conv3x3(pad_ref, planes, blk["w2"], blk["s2"], blk["b2"], 1, relu=False)
    act = jnp.maximum(y + res, 0.0)

    # -------------------- remaining (stride-1, planes->planes) blocks -----------
    for b in range(1, rep):
        blk = blocks[b]
        res = act
        pad_ref[1:ho + 1, 1:wo + 1, :] = act.reshape(ho, wo, planes)
        y = conv3x3(pad_ref, planes, blk["w1"], blk["s1"], blk["b1"], 1, relu=True)
        pad_ref[1:ho + 1, 1:wo + 1, :] = y.reshape(ho, wo, planes)
        y = conv3x3(pad_ref, planes, blk["w2"], blk["s2"], blk["b2"], 1, relu=False)
        act = jnp.maximum(y + res, 0.0)

    # -------------------- epilogue: out, adaptive avg-pool(1,1), fc_ann ---------
    out_ref[0] = act.reshape(ho, wo, planes)
    logit = jnp.sum(act, axis=0, keepdims=True) * (1.0 / float(m))     # (1, planes)
    logit_ref[0] = logit
    pred_ref[0] = (jnp.dot(logit, wfc_ref[...], preferred_element_type=jnp.float32)
                   + bfc_ref[...])


# ---------------------------------- wrapper ---------------------------------- #

def res_stage_forward(params, x_nchw):
    """ResStage.forward (use_ann=True). Returns (out[NCHW], logit, pred)."""
    x = jnp.transpose(x_nchw, (0, 2, 3, 1)).astype(jnp.float32)   # NCHW -> NHWC
    n, h, w, cin = x.shape
    blocks = params["blocks"]
    rep = len(blocks)
    planes = blocks[0]["conv1_w"].shape[1]
    stride = blocks[0]["stride"]
    has_down = "down_w" in blocks[0]
    for blk in blocks[1:]:
        assert "down_w" not in blk
    ho = (h + 2 - 3) // stride + 1
    wo = (w + 2 - 3) // stride + 1
    num_class = params["w_fc"].shape[1]

    def full_spec(a):
        nd = a.ndim
        return pl.BlockSpec(a.shape, lambda i, nd=nd: (0,) * nd)

    inputs = [x]
    in_specs = [pl.BlockSpec((1, h, w, cin), lambda i: (i, 0, 0, 0))]

    def add(a):
        inputs.append(a)
        in_specs.append(full_spec(a))

    for b, blk in enumerate(blocks):
        add(blk["conv1_w"]); add(blk["bn1"][0]); add(blk["bn1"][1])
        add(blk["conv2_w"]); add(blk["bn2"][0]); add(blk["bn2"][1])
        if b == 0 and has_down:
            add(blk["down_w"]); add(blk["downbn"][0]); add(blk["downbn"][1])
    add(params["w_fc"]); add(params["b_fc"])

    kernel = functools.partial(
        _res_stage_kernel, rep=rep, stride=stride, has_down=has_down,
        h=h, w=w, cin=cin, planes=planes, ho=ho, wo=wo)

    cmax = max(cin, planes)
    out, logit, pred = pl.pallas_call(
        kernel,
        grid=(n,),
        out_shape=(
            jax.ShapeDtypeStruct((n, ho, wo, planes), jnp.float32),
            jax.ShapeDtypeStruct((n, 1, planes), jnp.float32),
            jax.ShapeDtypeStruct((n, 1, num_class), jnp.float32),
        ),
        in_specs=in_specs,
        out_specs=(
            pl.BlockSpec((1, ho, wo, planes), lambda i: (i, 0, 0, 0)),
            pl.BlockSpec((1, 1, planes), lambda i: (i, 0, 0)),
            pl.BlockSpec((1, 1, num_class), lambda i: (i, 0, 0)),
        ),
        scratch_shapes=[
            pltpu.VMEM((h + 2, w + 2, cin), jnp.float32),       # padded block-0 input
            pltpu.VMEM((ho + 2, wo + 2, planes), jnp.float32),  # padded activations
            pltpu.VMEM((ho, wo, 9 * cmax), jnp.float32),        # im2col columns
        ],
        compiler_params=pltpu.CompilerParams(
            dimension_semantics=("parallel",),   # shard batch across TCs (v7x)
        ),
    )(*inputs)

    out_nchw = jnp.transpose(out, (0, 3, 1, 2))   # NHWC -> NCHW (PyTorch layout)
    return out_nchw, logit.reshape(n, planes), pred.reshape(n, num_class)


# ------------------------- deterministic parameter init ---------------------- #

def _conv_weight_im2col(key, c_o, c_in, k):
    """Mirror ASConv2d.initialize() + ANN weight reconstruction, in im2col layout."""
    w = jax.random.normal(key, (c_o, c_in, k, k), jnp.float32) * (1.0 / np.sqrt(c_in * k * k))
    w_r = np.asarray(w).reshape(k, k, c_o, c_in)                 # reshape (not permute)
    U, s, Vh = np.linalg.svd(w_r, full_matrices=False)
    w_ann = np.matmul(U * s[..., None, :], Vh)                   # == w_r (SVD reconstr.)
    # permute([2,3,0,1]) gives OIHW used by the conv; re-express as HWIO then im2col.
    w_hwio = np.transpose(w_ann, (0, 1, 3, 2))                   # (k, k, c_in, c_o)
    return jnp.asarray(w_hwio.reshape(k * k * c_in, c_o), jnp.float32)


def _bn_params(key, c, eps=1e-5):
    k1, k2 = jax.random.split(key)
    gamma = 1.0 + 0.1 * jax.random.normal(k1, (c,), jnp.float32)
    beta = 0.1 * jax.random.normal(k2, (c,), jnp.float32)
    running_mean = jnp.zeros((c,), jnp.float32)
    running_var = jnp.ones((c,), jnp.float32)
    scale = gamma / jnp.sqrt(running_var + eps)
    bias = beta - running_mean * scale
    return scale.reshape(1, c), bias.reshape(1, c)


def init_basic_block(key, inplanes, planes, stride):
    # PyTorch hard-codes the downsample at stride=2; other (stride=1, inplanes!=planes)
    # configurations would shape-mismatch in the reference forward as well.
    assert stride == 2 or inplanes == planes
    keys = jax.random.split(key, 6)
    p = {
        "conv1_w": _conv_weight_im2col(keys[0], planes, inplanes, 3),
        "bn1": _bn_params(keys[1], planes),
        "conv2_w": _conv_weight_im2col(keys[2], planes, planes, 3),
        "bn2": _bn_params(keys[3], planes),
        "stride": stride,
    }
    if stride != 1 or inplanes != planes:
        p["down_w"] = _conv_weight_im2col(keys[4], planes, inplanes, 1)
        p["downbn"] = _bn_params(keys[5], planes)
    return p


def init_res_stage(key, inplane, plane, stride=1, rep=2, num_class=10):
    keys = jax.random.split(key, rep + 2)
    blocks = [init_basic_block(keys[0], inplane, plane, stride)]
    for i in range(rep - 1):
        blocks.append(init_basic_block(keys[i + 1], plane, plane, 1))
    w_fc = 0.1 * jax.random.normal(keys[rep], (plane, num_class), jnp.float32)
    b_fc = 0.1 * jax.random.normal(keys[rep + 1], (1, num_class), jnp.float32)
    return {"blocks": blocks, "w_fc": w_fc, "b_fc": b_fc}


# ---------------------------- pure-JAX reference ------------------------------ #

def _ref_forward(params, x_nchw):
    hp = lax.Precision.HIGHEST

    def conv(x, w_col, k, stride, pad):
        cin, cout = x.shape[1], w_col.shape[1]
        w_hwio = w_col.reshape(k, k, cin, cout)
        return lax.conv_general_dilated(
            x, w_hwio, (stride, stride), ((pad, pad), (pad, pad)),
            dimension_numbers=("NCHW", "HWIO", "NCHW"), precision=hp)

    def bn(x, sb):
        s, b = sb
        return x * s.reshape(1, -1, 1, 1) + b.reshape(1, -1, 1, 1)

    out = x_nchw
    for blk in params["blocks"]:
        if "down_w" in blk:
            resid = bn(conv(out, blk["down_w"], 1, 2, 0), blk["downbn"])
        else:
            resid = out
        y = jax.nn.relu(bn(conv(out, blk["conv1_w"], 3, blk["stride"], 1), blk["bn1"]))
        y = bn(conv(y, blk["conv2_w"], 3, 1, 1), blk["bn2"])
        out = jax.nn.relu(y + resid)
    logit = out.mean(axis=(2, 3))
    pred = logit @ params["w_fc"] + params["b_fc"]
    return out, logit, pred


# ----------------------------------- main ------------------------------------ #

if __name__ == "__main__":
    key = jax.random.PRNGKey(0)
    k_param, k_x = jax.random.split(key)

    inplane, plane, stride, rep, num_class = 4, 8, 2, 2, 10
    params = init_res_stage(k_param, inplane, plane,
                            stride=stride, rep=rep, num_class=num_class)

    x = jax.random.normal(k_x, (2, inplane, 16, 16), jnp.float32)

    fwd = jax.jit(lambda xx: res_stage_forward(params, xx))
    out, logit, pred = fwd(x)
    jax.block_until_ready((out, logit, pred))

    assert out.shape == (2, plane, 8, 8), out.shape
    assert logit.shape == (2, plane), logit.shape
    assert pred.shape == (2, num_class), pred.shape
    assert bool(jnp.all(jnp.isfinite(out))) and bool(jnp.all(jnp.isfinite(pred)))

    # cross-check against a pure-JAX (XLA conv) reference of the same forward
    ref_out, ref_logit, ref_pred = _ref_forward(params, x)
    for got, want in ((out, ref_out), (logit, ref_logit), (pred, ref_pred)):
        err = float(jnp.max(jnp.abs(got - want)))
        assert err < 5e-2, f"max abs err {err}"

    print("KERNEL_OK")
</pallas_src>

<mosaic_0001>
module attributes {stable_mosaic.version = 11 : i64} {
  func.func @_res_stage_kernel(%arg0: i32, %arg1: memref<1x16x16x4xf32, #tpu.memory_space<vmem>>, %arg2: memref<36x8xf32, #tpu.memory_space<vmem>>, %arg3: memref<1x8xf32, #tpu.memory_space<vmem>>, %arg4: memref<1x8xf32, #tpu.memory_space<vmem>>, %arg5: memref<72x8xf32, #tpu.memory_space<vmem>>, %arg6: memref<1x8xf32, #tpu.memory_space<vmem>>, %arg7: memref<1x8xf32, #tpu.memory_space<vmem>>, %arg8: memref<4x8xf32, #tpu.memory_space<vmem>>, %arg9: memref<1x8xf32, #tpu.memory_space<vmem>>, %arg10: memref<1x8xf32, #tpu.memory_space<vmem>>, %arg11: memref<72x8xf32, #tpu.memory_space<vmem>>, %arg12: memref<1x8xf32, #tpu.memory_space<vmem>>, %arg13: memref<1x8xf32, #tpu.memory_space<vmem>>, %arg14: memref<72x8xf32, #tpu.memory_space<vmem>>, %arg15: memref<1x8xf32, #tpu.memory_space<vmem>>, %arg16: memref<1x8xf32, #tpu.memory_space<vmem>>, %arg17: memref<8x10xf32, #tpu.memory_space<vmem>>, %arg18: memref<1x10xf32, #tpu.memory_space<vmem>>, %arg19: memref<1x8x8x8xf32, #tpu.memory_space<vmem>>, %arg20: memref<1x1x8xf32, #tpu.memory_space<vmem>>, %arg21: memref<1x1x10xf32, #tpu.memory_space<vmem>>, %arg22: memref<18x18x4xf32, #tpu.memory_space<vmem>>, %arg23: memref<10x10x8xf32, #tpu.memory_space<vmem>>, %arg24: memref<8x8x72xf32, #tpu.memory_space<vmem>>) attributes {dimension_semantics = [#tpu.dimension_semantics<parallel>], iteration_bounds = array<i64: 2>, scalar_prefetch = 0 : i64, scratch_operands = 3 : i64, tpu.core_type = #tpu.core_type<tc>, window_params = [{transform_indices = @transform_0, window_bounds = array<i64: 1, 16, 16, 4>}, {pipeline_mode = #tpu.pipeline_mode<synchronous>, transform_indices = @transform_1, window_bounds = array<i64: 36, 8>}, {pipeline_mode = #tpu.pipeline_mode<synchronous>, transform_indices = @transform_2, window_bounds = array<i64: 1, 8>}, {pipeline_mode = #tpu.pipeline_mode<synchronous>, transform_indices = @transform_3, window_bounds = array<i64: 1, 8>}, {pipeline_mode = #tpu.pipeline_mode<synchronous>, transform_indices = @transform_4, window_bounds = array<i64: 72, 8>}, {pipeline_mode = #tpu.pipeline_mode<synchronous>, transform_indices = @transform_5, window_bounds = array<i64: 1, 8>}, {pipeline_mode = #tpu.pipeline_mode<synchronous>, transform_indices = @transform_6, window_bounds = array<i64: 1, 8>}, {pipeline_mode = #tpu.pipeline_mode<synchronous>, transform_indices = @transform_7, window_bounds = array<i64: 4, 8>}, {pipeline_mode = #tpu.pipeline_mode<synchronous>, transform_indices = @transform_8, window_bounds = array<i64: 1, 8>}, {pipeline_mode = #tpu.pipeline_mode<synchronous>, transform_indices = @transform_9, window_bounds = array<i64: 1, 8>}, {pipeline_mode = #tpu.pipeline_mode<synchronous>, transform_indices = @transform_10, window_bounds = array<i64: 72, 8>}, {pipeline_mode = #tpu.pipeline_mode<synchronous>, transform_indices = @transform_11, window_bounds = array<i64: 1, 8>}, {pipeline_mode = #tpu.pipeline_mode<synchronous>, transform_indices = @transform_12, window_bounds = array<i64: 1, 8>}, {pipeline_mode = #tpu.pipeline_mode<synchronous>, transform_indices = @transform_13, window_bounds = array<i64: 72, 8>}, {pipeline_mode = #tpu.pipeline_mode<synchronous>, transform_indices = @transform_14, window_bounds = array<i64: 1, 8>}, {pipeline_mode = #tpu.pipeline_mode<synchronous>, transform_indices = @transform_15, window_bounds = array<i64: 1, 8>}, {pipeline_mode = #tpu.pipeline_mode<synchronous>, transform_indices = @transform_16, window_bounds = array<i64: 8, 10>}, {pipeline_mode = #tpu.pipeline_mode<synchronous>, transform_indices = @transform_17, window_bounds = array<i64: 1, 10>}, {transform_indices = @transform_18, window_bounds = array<i64: 1, 8, 8, 8>}, {transform_indices = @transform_19, window_bounds = array<i64: 1, 1, 8>}, {transform_indices = @transform_20, window_bounds = array<i64: 1, 1, 10>}]} {
    %cst = arith.constant 0.000000e+00 : f32
    %0 = vector.broadcast %cst : f32 to vector<18x18x4xf32>
    %c0 = arith.constant 0 : index
    %c0_0 = arith.constant 0 : index
    %c0_1 = arith.constant 0 : index
    %1 = vector.load %arg22[%c0, %c0_0, %c0_1] : memref<18x18x4xf32, #tpu.memory_space<vmem>>, vector<18x18x4xf32>
    tpu.vector_store %arg22[%c0, %c0_0, %c0_1], %0 {strides = array<i32>} : memref<18x18x4xf32, #tpu.memory_space<vmem>>, vector<18x18x4xf32>,
    %cst_2 = arith.constant 0.000000e+00 : f32
    %2 = vector.broadcast %cst_2 : f32 to vector<10x10x8xf32>
    %c0_3 = arith.constant 0 : index
    %c0_4 = arith.constant 0 : index
    %c0_5 = arith.constant 0 : index
    %3 = vector.load %arg23[%c0_3, %c0_4, %c0_5] : memref<10x10x8xf32, #tpu.memory_space<vmem>>, vector<10x10x8xf32>
    tpu.vector_store %arg23[%c0_3, %c0_4, %c0_5], %2 {strides = array<i32>} : memref<10x10x8xf32, #tpu.memory_space<vmem>>, vector<10x10x8xf32>,
    %c0_6 = arith.constant 0 : index
    %c0_7 = arith.constant 0 : index
    %c0_8 = arith.constant 0 : index
    %c0_9 = arith.constant 0 : index
    %4 = vector.load %arg1[%c0_6, %c0_7, %c0_8, %c0_9] : memref<1x16x16x4xf32, #tpu.memory_space<vmem>>, vector<1x16x16x4xf32>
    %5 = vector.shape_cast %4 : vector<1x16x16x4xf32> to vector<16x16x4xf32>
    %c1 = arith.constant 1 : index
    %c1_10 = arith.constant 1 : index
    %c0_11 = arith.constant 0 : index
    %6 = vector.load %arg22[%c1, %c1_10, %c0_11] : memref<18x18x4xf32, #tpu.memory_space<vmem>>, vector<16x16x4xf32>
    tpu.vector_store %arg22[%c1, %c1_10, %c0_11], %5 {strides = array<i32>} : memref<18x18x4xf32, #tpu.memory_space<vmem>>, vector<16x16x4xf32>,
    %c0_12 = arith.constant 0 : index
    %c0_13 = arith.constant 0 : index
    %c0_14 = arith.constant 0 : index
    %7 = tpu.strided_load %arg22[%c0_12, %c0_13, %c0_14] {strides = array<i32: 2, 2, 1>} : memref<18x18x4xf32, #tpu.memory_space<vmem>>, vector<8x8x4xf32>
    %c0_15 = arith.constant 0 : index
    %c0_16 = arith.constant 0 : index
    %c0_17 = arith.constant 0 : index
    %8 = vector.load %arg24[%c0_15, %c0_16, %c0_17] : memref<8x8x72xf32, #tpu.memory_space<vmem>>, vector<8x8x4xf32>
    tpu.vector_store %arg24[%c0_15, %c0_16, %c0_17], %7 {strides = array<i32>} : memref<8x8x72xf32, #tpu.memory_space<vmem>>, vector<8x8x4xf32>,
    %c0_18 = arith.constant 0 : index
    %c1_19 = arith.constant 1 : index
    %c0_20 = arith.constant 0 : index
    %9 = tpu.strided_load %arg22[%c0_18, %c1_19, %c0_20] {strides = array<i32: 2, 2, 1>} : memref<18x18x4xf32, #tpu.memory_space<vmem>>, vector<8x8x4xf32>
    %c0_21 = arith.constant 0 : index
    %c0_22 = arith.constant 0 : index
    %c4 = arith.constant 4 : index
    %10 = vector.load %arg24[%c0_21, %c0_22, %c4] : memref<8x8x72xf32, #tpu.memory_space<vmem>>, vector<8x8x4xf32>
    tpu.vector_store %arg24[%c0_21, %c0_22, %c4], %9 {strides = array<i32>} : memref<8x8x72xf32, #tpu.memory_space<vmem>>, vector<8x8x4xf32>,
    %c0_23 = arith.constant 0 : index
    %c2 = arith.constant 2 : index
    %c0_24 = arith.constant 0 : index
    %11 = tpu.strided_load %arg22[%c0_23, %c2, %c0_24] {strides = array<i32: 2, 2, 1>} : memref<18x18x4xf32, #tpu.memory_space<vmem>>, vector<8x8x4xf32>
    %c0_25 = arith.constant 0 : index
    %c0_26 = arith.constant 0 : index
    %c8 = arith.constant 8 : index
    %12 = vector.load %arg24[%c0_25, %c0_26, %c8] : memref<8x8x72xf32, #tpu.memory_space<vmem>>, vector<8x8x4xf32>
    tpu.vector_store %arg24[%c0_25, %c0_26, %c8], %11 {strides = array<i32>} : memref<8x8x72xf32, #tpu.memory_space<vmem>>, vector<8x8x4xf32>,
    %c1_27 = arith.constant 1 : index
    %c0_28 = arith.constant 0 : index
    %c0_29 = arith.constant 0 : index
    %13 = tpu.strided_load %arg22[%c1_27, %c0_28, %c0_29] {strides = array<i32: 2, 2, 1>} : memref<18x18x4xf32, #tpu.memory_space<vmem>>, vector<8x8x4xf32>
    %c0_30 = arith.constant 0 : index
    %c0_31 = arith.constant 0 : index
    %c12 = arith.constant 12 : index
    %14 = vector.load %arg24[%c0_30, %c0_31, %c12] : memref<8x8x72xf32, #tpu.memory_space<vmem>>, vector<8x8x4xf32>
    tpu.vector_store %arg24[%c0_30, %c0_31, %c12], %13 {strides = array<i32>} : memref<8x8x72xf32, #tpu.memory_space<vmem>>, vector<8x8x4xf32>,
    %c1_32 = arith.constant 1 : index
    %c1_33 = arith.constant 1 : index
    %c0_34 = arith.constant 0 : index
    %15 = tpu.strided_load %arg22[%c1_32, %c1_33, %c0_34] {strides = array<i32: 2, 2, 1>} : memref<18x18x4xf32, #tpu.memory_space<vmem>>, vector<8x8x4xf32>
    %c0_35 = arith.constant 0 : index
    %c0_36 = arith.constant 0 : index
    %c16 = arith.constant 16 : index
    %16 = vector.load %arg24[%c0_35, %c0_36, %c16] : memref<8x8x72xf32, #tpu.memory_space<vmem>>, vector<8x8x4xf32>
    tpu.vector_store %arg24[%c0_35, %c0_36, %c16], %15 {strides = array<i32>} : memref<8x8x72xf32, #tpu.memory_space<vmem>>, vector<8x8x4xf32>,
    %c1_37 = arith.constant 1 : index
    %c2_38 = arith.constant 2 : index
    %c0_39 = arith.constant 0 : index
    %17 = tpu.strided_load %arg22[%c1_37, %c2_38, %c0_39] {strides = array<i32: 2, 2, 1>} : memref<18x18x4xf32, #tpu.memory_space<vmem>>, vector<8x8x4xf32>
    %c0_40 = arith.constant 0 : index
    %c0_41 = arith.constant 0 : index
    %c20 = arith.constant 20 : index
    %18 = vector.load %arg24[%c0_40, %c0_41, %c20] : memref<8x8x72xf32, #tpu.memory_space<vmem>>, vector<8x8x4xf32>
    tpu.vector_store %arg24[%c0_40, %c0_41, %c20], %17 {strides = array<i32>} : memref<8x8x72xf32, #tpu.memory_space<vmem>>, vector<8x8x4xf32>,
    %c2_42 = arith.constant 2 : index
    %c0_43 = arith.constant 0 : index
    %c0_44 = arith.constant 0 : index
    %19 = tpu.strided_load %arg22[%c2_42, %c0_43, %c0_44] {strides = array<i32: 2, 2, 1>} : memref<18x18x4xf32, #tpu.memory_space<vmem>>, vector<8x8x4xf32>
    %c0_45 = arith.constant 0 : index
    %c0_46 = arith.constant 0 : index
    %c24 = arith.constant 24 : index
    %20 = vector.load %arg24[%c0_45, %c0_46, %c24] : memref<8x8x72xf32, #tpu.memory_space<vmem>>, vector<8x8x4xf32>
    tpu.vector_store %arg24[%c0_45, %c0_46, %c24], %19 {strides = array<i32>} : memref<8x8x72xf32, #tpu.memory_space<vmem>>, vector<8x8x4xf32>,
    %c2_47 = arith.constant 2 : index
    %c1_48 = arith.constant 1 : index
    %c0_49 = arith.constant 0 : index
    %21 = tpu.strided_load %arg22[%c2_47, %c1_48, %c0_49] {strides = array<i32: 2, 2, 1>} : memref<18x18x4xf32, #tpu.memory_space<vmem>>, vector<8x8x4xf32>
    %c0_50 = arith.constant 0 : index
    %c0_51 = arith.constant 0 : index
    %c28 = arith.constant 28 : index
    %22 = vector.load %arg24[%c0_50, %c0_51, %c28] : memref<8x8x72xf32, #tpu.memory_space<vmem>>, vector<8x8x4xf32>
    tpu.vector_store %arg24[%c0_50, %c0_51, %c28], %21 {strides = array<i32>} : memref<8x8x72xf32, #tpu.memory_space<vmem>>, vector<8x8x4xf32>,
    %c2_52 = arith.constant 2 : index
    %c2_53 = arith.constant 2 : index
    %c0_54 = arith.constant 0 : index
    %23 = tpu.strided_load %arg22[%c2_52, %c2_53, %c0_54] {strides = array<i32: 2, 2, 1>} : memref<18x18x4xf32, #tpu.memory_space<vmem>>, vector<8x8x4xf32>
    %c0_55 = arith.constant 0 : index
    %c0_56 = arith.constant 0 : index
    %c32 = arith.constant 32 : index
    %24 = vector.load %arg24[%c0_55, %c0_56, %c32] : memref<8x8x72xf32, #tpu.memory_space<vmem>>, vector<8x8x4xf32>
    tpu.vector_store %arg24[%c0_55, %c0_56, %c32], %23 {strides = array<i32>} : memref<8x8x72xf32, #tpu.memory_space<vmem>>, vector<8x8x4xf32>,
    %c0_57 = arith.constant 0 : index
    %c0_58 = arith.constant 0 : index
    %c0_59 = arith.constant 0 : index
    %25 = vector.load %arg24[%c0_57, %c0_58, %c0_59] : memref<8x8x72xf32, #tpu.memory_space<vmem>>, vector<8x8x36xf32>
    %26 = vector.shape_cast %25 : vector<8x8x36xf32> to vector<64x36xf32>
    %c0_60 = arith.constant 0 : index
    %c0_61 = arith.constant 0 : index
    %27 = vector.load %arg2[%c0_60, %c0_61] : memref<36x8xf32, #tpu.memory_space<vmem>>, vector<36x8xf32>
    %cst_62 = arith.constant dense<0.000000e+00> : vector<64x8xf32>
    %28 = tpu.matmul %26, %27, %cst_62 {dimension_numbers = #tpu.dot_dimension_numbers<[1], [0], [0], [1], [0, 0, 1, 1], [], []>} : vector<64x36xf32>, vector<36x8xf32>, vector<64x8xf32> -> vector<64x8xf32>
    %c0_63 = arith.constant 0 : index
    %c0_64 = arith.constant 0 : index
    %29 = vector.load %arg3[%c0_63, %c0_64] : memref<1x8xf32, #tpu.memory_space<vmem>>, vector<1x8xf32>
    %30 = vector.broadcast %29 : vector<1x8xf32> to vector<64x8xf32>
    %31 = arith.mulf %28, %30 : vector<64x8xf32>
    %c0_65 = arith.constant 0 : index
    %c0_66 = arith.constant 0 : index
    %32 = vector.load %arg4[%c0_65, %c0_66] : memref<1x8xf32, #tpu.memory_space<vmem>>, vector<1x8xf32>
    %33 = vector.broadcast %32 : vector<1x8xf32> to vector<64x8xf32>
    %34 = arith.addf %31, %33 : vector<64x8xf32>
    %cst_67 = arith.constant 0.000000e+00 : f32
    %35 = vector.broadcast %cst_67 : f32 to vector<64x8xf32>
    %36 = arith.maximumf %34, %35 : vector<64x8xf32>
    %c1_68 = arith.constant 1 : index
    %c1_69 = arith.constant 1 : index
    %c0_70 = arith.constant 0 : index
    %37 = tpu.strided_load %arg22[%c1_68, %c1_69, %c0_70] {strides = array<i32: 2, 2, 1>} : memref<18x18x4xf32, #tpu.memory_space<vmem>>, vector<8x8x4xf32>
    %38 = vector.shape_cast %37 : vector<8x8x4xf32> to vector<64x4xf32>
    %c0_71 = arith.constant 0 : index
    %c0_72 = arith.constant 0 : index
    %39 = vector.load %arg8[%c0_71, %c0_72] : memref<4x8xf32, #tpu.memory_space<vmem>>, vector<4x8xf32>
    %cst_73 = arith.constant dense<0.000000e+00> : vector<64x8xf32>
    %40 = tpu.matmul %38, %39, %cst_73 {dimension_numbers = #tpu.dot_dimension_numbers<[1], [0], [0], [1], [0, 0, 1, 1], [], []>} : vector<64x4xf32>, vector<4x8xf32>, vector<64x8xf32> -> vector<64x8xf32>
    %c0_74 = arith.constant 0 : index
    %c0_75 = arith.constant 0 : index
    %41 = vector.load %arg9[%c0_74, %c0_75] : memref<1x8xf32, #tpu.memory_space<vmem>>, vector<1x8xf32>
    %42 = vector.broadcast %41 : vector<1x8xf32> to vector<64x8xf32>
    %43 = arith.mulf %40, %42 : vector<64x8xf32>
    %c0_76 = arith.constant 0 : index
    %c0_77 = arith.constant 0 : index
    %44 = vector.load %arg10[%c0_76, %c0_77] : memref<1x8xf32, #tpu.memory_space<vmem>>, vector<1x8xf32>
    %45 = vector.broadcast %44 : vector<1x8xf32> to vector<64x8xf32>
    %46 = arith.addf %43, %45 : vector<64x8xf32>
    %47 = vector.shape_cast %36 : vector<64x8xf32> to vector<8x8x8xf32>
    %c1_78 = arith.constant 1 : index
    %c1_79 = arith.constant 1 : index
    %c0_80 = arith.constant 0 : index
    %48 = vector.load %arg23[%c1_78, %c1_79, %c0_80] : memref<10x10x8xf32, #tpu.memory_space<vmem>>, vector<8x8x8xf32>
    tpu.vector_store %arg23[%c1_78, %c1_79, %c0_80], %47 {strides = array<i32>} : memref<10x10x8xf32, #tpu.memory_space<vmem>>, vector<8x8x8xf32>,
    %c0_81 = arith.constant 0 : index
    %c0_82 = arith.constant 0 : index
    %c0_83 = arith.constant 0 : index
    %49 = vector.load %arg23[%c0_81, %c0_82, %c0_83] : memref<10x10x8xf32, #tpu.memory_space<vmem>>, vector<8x8x8xf32>
    %c0_84 = arith.constant 0 : index
    %c0_85 = arith.constant 0 : index
    %c0_86 = arith.constant 0 : index
    %50 = vector.load %arg24[%c0_84, %c0_85, %c0_86] : memref<8x8x72xf32, #tpu.memory_space<vmem>>, vector<8x8x8xf32>
    tpu.vector_store %arg24[%c0_84, %c0_85, %c0_86], %49 {strides = array<i32>} : memref<8x8x72xf32, #tpu.memory_space<vmem>>, vector<8x8x8xf32>,
    %c0_87 = arith.constant 0 : index
    %c1_88 = arith.constant 1 : index
    %c0_89 = arith.constant 0 : index
    %51 = vector.load %arg23[%c0_87, %c1_88, %c0_89] : memref<10x10x8xf32, #tpu.memory_space<vmem>>, vector<8x8x8xf32>
    %c0_90 = arith.constant 0 : index
    %c0_91 = arith.constant 0 : index
    %c8_92 = arith.constant 8 : index
    %52 = vector.load %arg24[%c0_90, %c0_91, %c8_92] : memref<8x8x72xf32, #tpu.memory_space<vmem>>, vector<8x8x8xf32>
    tpu.vector_store %arg24[%c0_90, %c0_91, %c8_92], %51 {strides = array<i32>} : memref<8x8x72xf32, #tpu.memory_space<vmem>>, vector<8x8x8xf32>,
    %c0_93 = arith.constant 0 : index
    %c2_94 = arith.constant 2 : index
    %c0_95 = arith.constant 0 : index
    %53 = vector.load %arg23[%c0_93, %c2_94, %c0_95] : memref<10x10x8xf32, #tpu.memory_space<vmem>>, vector<8x8x8xf32>
    %c0_96 = arith.constant 0 : index
    %c0_97 = arith.constant 0 : index
    %c16_98 = arith.constant 16 : index
    %54 = vector.load %arg24[%c0_96, %c0_97, %c16_98] : memref<8x8x72xf32, #tpu.memory_space<vmem>>, vector<8x8x8xf32>
    tpu.vector_store %arg24[%c0_96, %c0_97, %c16_98], %53 {strides = array<i32>} : memref<8x8x72xf32, #tpu.memory_space<vmem>>, vector<8x8x8xf32>,
    %c1_99 = arith.constant 1 : index
    %c0_100 = arith.constant 0 : index
    %c0_101 = arith.constant 0 : index
    %55 = vector.load %arg23[%c1_99, %c0_100, %c0_101] : memref<10x10x8xf32, #tpu.memory_space<vmem>>, vector<8x8x8xf32>
    %c0_102 = arith.constant 0 : index
    %c0_103 = arith.constant 0 : index
    %c24_104 = arith.constant 24 : index
    %56 = vector.load %arg24[%c0_102, %c0_103, %c24_104] : memref<8x8x72xf32, #tpu.memory_space<vmem>>, vector<8x8x8xf32>
    tpu.vector_store %arg24[%c0_102, %c0_103, %c24_104], %55 {strides = array<i32>} : memref<8x8x72xf32, #tpu.memory_space<vmem>>, vector<8x8x8xf32>,
    %c1_105 = arith.constant 1 : index
    %c1_106 = arith.constant 1 : index
    %c0_107 = arith.constant 0 : index
    %57 = vector.load %arg23[%c1_105, %c1_106, %c0_107] : memref<10x10x8xf32, #tpu.memory_space<vmem>>, vector<8x8x8xf32>
    %c0_108 = arith.constant 0 : index
    %c0_109 = arith.constant 0 : index
    %c32_110 = arith.constant 32 : index
    %58 = vector.load %arg24[%c0_108, %c0_109, %c32_110] : memref<8x8x72xf32, #tpu.memory_space<vmem>>, vector<8x8x8xf32>
    tpu.vector_store %arg24[%c0_108, %c0_109, %c32_110], %57 {strides = array<i32>} : memref<8x8x72xf32, #tpu.memory_space<vmem>>, vector<8x8x8xf32>,
    %c1_111 = arith.constant 1 : index
    %c2_112 = arith.constant 2 : index
    %c0_113 = arith.constant 0 : index
    %59 = vector.load %arg23[%c1_111, %c2_112, %c0_113] : memref<10x10x8xf32, #tpu.memory_space<vmem>>, vector<8x8x8xf32>
    %c0_114 = arith.constant 0 : index
    %c0_115 = arith.constant 0 : index
    %c40 = arith.constant 40 : index
    %60 = vector.load %arg24[%c0_114, %c0_115, %c40] : memref<8x8x72xf32, #tpu.memory_space<vmem>>, vector<8x8x8xf32>
    tpu.vector_store %arg24[%c0_114, %c0_115, %c40], %59 {strides = array<i32>} : memref<8x8x72xf32, #tpu.memory_space<vmem>>, vector<8x8x8xf32>,
    %c2_116 = arith.constant 2 : index
    %c0_117 = arith.constant 0 : index
    %c0_118 = arith.constant 0 : index
    %61 = vector.load %arg23[%c2_116, %c0_117, %c0_118] : memref<10x10x8xf32, #tpu.memory_space<vmem>>, vector<8x8x8xf32>
    %c0_119 = arith.constant 0 : index
    %c0_120 = arith.constant 0 : index
    %c48 = arith.constant 48 : index
    %62 = vector.load %arg24[%c0_119, %c0_120, %c48] : memref<8x8x72xf32, #tpu.memory_space<vmem>>, vector<8x8x8xf32>
    tpu.vector_store %arg24[%c0_119, %c0_120, %c48], %61 {strides = array<i32>} : memref<8x8x72xf32, #tpu.memory_space<vmem>>, vector<8x8x8xf32>,
    %c2_121 = arith.constant 2 : index
    %c1_122 = arith.constant 1 : index
    %c0_123 = arith.constant 0 : index
    %63 = vector.load %arg23[%c2_121, %c1_122, %c0_123] : memref<10x10x8xf32, #tpu.memory_space<vmem>>, vector<8x8x8xf32>
    %c0_124 = arith.constant 0 : index
    %c0_125 = arith.constant 0 : index
    %c56 = arith.constant 56 : index
    %64 = vector.load %arg24[%c0_124, %c0_125, %c56] : memref<8x8x72xf32, #tpu.memory_space<vmem>>, vector<8x8x8xf32>
    tpu.vector_store %arg24[%c0_124, %c0_125, %c56], %63 {strides = array<i32>} : memref<8x8x72xf32, #tpu.memory_space<vmem>>, vector<8x8x8xf32>,
    %c2_126 = arith.constant 2 : index
    %c2_127 = arith.constant 2 : index
    %c0_128 = arith.constant 0 : index
    %65 = vector.load %arg23[%c2_126, %c2_127, %c0_128] : memref<10x10x8xf32, #tpu.memory_space<vmem>>, vector<8x8x8xf32>
    %c0_129 = arith.constant 0 : index
    %c0_130 = arith.constant 0 : index
    %c64 = arith.constant 64 : index
    %66 = vector.load %arg24[%c0_129, %c0_130, %c64] : memref<8x8x72xf32, #tpu.memory_space<vmem>>, vector<8x8x8xf32>
    tpu.vector_store %arg24[%c0_129, %c0_130, %c64], %65 {strides = array<i32>} : memref<8x8x72xf32, #tpu.memory_space<vmem>>, vector<8x8x8xf32>,
    %c0_131 = arith.constant 0 : index
    %c0_132 = arith.constant 0 : index
    %c0_133 = arith.constant 0 : index
    %67 = vector.load %arg24[%c0_131, %c0_132, %c0_133] : memref<8x8x72xf32, #tpu.memory_space<vmem>>, vector<8x8x72xf32>
    %68 = vector.shape_cast %67 : vector<8x8x72xf32> to vector<64x72xf32>
    %c0_134 = arith.constant 0 : index
    %c0_135 = arith.constant 0 : index
    %69 = vector.load %arg5[%c0_134, %c0_135] : memref<72x8xf32, #tpu.memory_space<vmem>>, vector<72x8xf32>
    %cst_136 = arith.constant dense<0.000000e+00> : vector<64x8xf32>
    %70 = tpu.matmul %68, %69, %cst_136 {dimension_numbers = #tpu.dot_dimension_numbers<[1], [0], [0], [1], [0, 0, 1, 1], [], []>} : vector<64x72xf32>, vector<72x8xf32>, vector<64x8xf32> -> vector<64x8xf32>
    %c0_137 = arith.constant 0 : index
    %c0_138 = arith.constant 0 : index
    %71 = vector.load %arg6[%c0_137, %c0_138] : memref<1x8xf32, #tpu.memory_space<vmem>>, vector<1x8xf32>
    %72 = vector.broadcast %71 : vector<1x8xf32> to vector<64x8xf32>
    %73 = arith.mulf %70, %72 : vector<64x8xf32>
    %c0_139 = arith.constant 0 : index
    %c0_140 = arith.constant 0 : index
    %74 = vector.load %arg7[%c0_139, %c0_140] : memref<1x8xf32, #tpu.memory_space<vmem>>, vector<1x8xf32>
    %75 = vector.broadcast %74 : vector<1x8xf32> to vector<64x8xf32>
    %76 = arith.addf %73, %75 : vector<64x8xf32>
    %77 = arith.addf %76, %46 : vector<64x8xf32>
    %cst_141 = arith.constant 0.000000e+00 : f32
    %78 = vector.broadcast %cst_141 : f32 to vector<64x8xf32>
    %79 = arith.maximumf %77, %78 : vector<64x8xf32>
    %80 = vector.shape_cast %79 : vector<64x8xf32> to vector<8x8x8xf32>
    %c1_142 = arith.constant 1 : index
    %c1_143 = arith.constant 1 : index
    %c0_144 = arith.constant 0 : index
    %81 = vector.load %arg23[%c1_142, %c1_143, %c0_144] : memref<10x10x8xf32, #tpu.memory_space<vmem>>, vector<8x8x8xf32>
    tpu.vector_store %arg23[%c1_142, %c1_143, %c0_144], %80 {strides = array<i32>} : memref<10x10x8xf32, #tpu.memory_space<vmem>>, vector<8x8x8xf32>,
    %c0_145 = arith.constant 0 : index
    %c0_146 = arith.constant 0 : index
    %c0_147 = arith.constant 0 : index
    %82 = vector.load %arg23[%c0_145, %c0_146, %c0_147] : memref<10x10x8xf32, #tpu.memory_space<vmem>>, vector<8x8x8xf32>
    %c0_148 = arith.constant 0 : index
    %c0_149 = arith.constant 0 : index
    %c0_150 = arith.constant 0 : index
    %83 = vector.load %arg24[%c0_148, %c0_149, %c0_150] : memref<8x8x72xf32, #tpu.memory_space<vmem>>, vector<8x8x8xf32>
    tpu.vector_store %arg24[%c0_148, %c0_149, %c0_150], %82 {strides = array<i32>} : memref<8x8x72xf32, #tpu.memory_space<vmem>>, vector<8x8x8xf32>,
    %c0_151 = arith.constant 0 : index
    %c1_152 = arith.constant 1 : index
    %c0_153 = arith.constant 0 : index
    %84 = vector.load %arg23[%c0_151, %c1_152, %c0_153] : memref<10x10x8xf32, #tpu.memory_space<vmem>>, vector<8x8x8xf32>
    %c0_154 = arith.constant 0 : index
    %c0_155 = arith.constant 0 : index
    %c8_156 = arith.constant 8 : index
    %85 = vector.load %arg24[%c0_154, %c0_155, %c8_156] : memref<8x8x72xf32, #tpu.memory_space<vmem>>, vector<8x8x8xf32>
    tpu.vector_store %arg24[%c0_154, %c0_155, %c8_156], %84 {strides = array<i32>} : memref<8x8x72xf32, #tpu.memory_space<vmem>>, vector<8x8x8xf32>,
    %c0_157 = arith.constant 0 : index
    %c2_158 = arith.constant 2 : index
    %c0_159 = arith.constant 0 : index
    %86 = vector.load %arg23[%c0_157, %c2_158, %c0_159] : memref<10x10x8xf32, #tpu.memory_space<vmem>>, vector<8x8x8xf32>
    %c0_160 = arith.constant 0 : index
    %c0_161 = arith.constant 0 : index
    %c16_162 = arith.constant 16 : index
    %87 = vector.load %arg24[%c0_160, %c0_161, %c16_162] : memref<8x8x72xf32, #tpu.memory_space<vmem>>, vector<8x8x8xf32>
    tpu.vector_store %arg24[%c0_160, %c0_161, %c16_162], %86 {strides = array<i32>} : memref<8x8x72xf32, #tpu.memory_space<vmem>>, vector<8x8x8xf32>,
    %c1_163 = arith.constant 1 : index
    %c0_164 = arith.constant 0 : index
    %c0_165 = arith.constant 0 : index
    %88 = vector.load %arg23[%c1_163, %c0_164, %c0_165] : memref<10x10x8xf32, #tpu.memory_space<vmem>>, vector<8x8x8xf32>
    %c0_166 = arith.constant 0 : index
    %c0_167 = arith.constant 0 : index
    %c24_168 = arith.constant 24 : index
    %89 = vector.load %arg24[%c0_166, %c0_167, %c24_168] : memref<8x8x72xf32, #tpu.memory_space<vmem>>, vector<8x8x8xf32>
    tpu.vector_store %arg24[%c0_166, %c0_167, %c24_168], %88 {strides = array<i32>} : memref<8x8x72xf32, #tpu.memory_space<vmem>>, vector<8x8x8xf32>,
    %c1_169 = arith.constant 1 : index
    %c1_170 = arith.constant 1 : index
    %c0_171 = arith.constant 0 : index
    %90 = vector.load %arg23[%c1_169, %c1_170, %c0_171] : memref<10x10x8xf32, #tpu.memory_space<vmem>>, vector<8x8x8xf32>
    %c0_172 = arith.constant 0 : index
    %c0_173 = arith.constant 0 : index
    %c32_174 = arith.constant 32 : index
    %91 = vector.load %arg24[%c0_172, %c0_173, %c32_174] : memref<8x8x72xf32, #tpu.memory_space<vmem>>, vector<8x8x8xf32>
    tpu.vector_store %arg24[%c0_172, %c0_173, %c32_174], %90 {strides = array<i32>} : memref<8x8x72xf32, #tpu.memory_space<vmem>>, vector<8x8x8xf32>,
    %c1_175 = arith.constant 1 : index
    %c2_176 = arith.constant 2 : index
    %c0_177 = arith.constant 0 : index
    %92 = vector.load %arg23[%c1_175, %c2_176, %c0_177] : memref<10x10x8xf32, #tpu.memory_space<vmem>>, vector<8x8x8xf32>
    %c0_178 = arith.constant 0 : index
    %c0_179 = arith.constant 0 : index
    %c40_180 = arith.constant 40 : index
    %93 = vector.load %arg24[%c0_178, %c0_179, %c40_180] : memref<8x8x72xf32, #tpu.memory_space<vmem>>, vector<8x8x8xf32>
    tpu.vector_store %arg24[%c0_178, %c0_179, %c40_180], %92 {strides = array<i32>} : memref<8x8x72xf32, #tpu.memory_space<vmem>>, vector<8x8x8xf32>,
    %c2_181 = arith.constant 2 : index
    %c0_182 = arith.constant 0 : index
    %c0_183 = arith.constant 0 : index
    %94 = vector.load %arg23[%c2_181, %c0_182, %c0_183] : memref<10x10x8xf32, #tpu.memory_space<vmem>>, vector<8x8x8xf32>
    %c0_184 = arith.constant 0 : index
    %c0_185 = arith.constant 0 : index
    %c48_186 = arith.constant 48 : index
    %95 = vector.load %arg24[%c0_184, %c0_185, %c48_186] : memref<8x8x72xf32, #tpu.memory_space<vmem>>, vector<8x8x8xf32>
    tpu.vector_store %arg24[%c0_184, %c0_185, %c48_186], %94 {strides = array<i32>} : memref<8x8x72xf32, #tpu.memory_space<vmem>>, vector<8x8x8xf32>,
    %c2_187 = arith.constant 2 : index
    %c1_188 = arith.constant 1 : index
    %c0_189 = arith.constant 0 : index
    %96 = vector.load %arg23[%c2_187, %c1_188, %c0_189] : memref<10x10x8xf32, #tpu.memory_space<vmem>>, vector<8x8x8xf32>
    %c0_190 = arith.constant 0 : index
    %c0_191 = arith.constant 0 : index
    %c56_192 = arith.constant 56 : index
    %97 = vector.load %arg24[%c0_190, %c0_191, %c56_192] : memref<8x8x72xf32, #tpu.memory_space<vmem>>, vector<8x8x8xf32>
    tpu.vector_store %arg24[%c0_190, %c0_191, %c56_192], %96 {strides = array<i32>} : memref<8x8x72xf32, #tpu.memory_space<vmem>>, vector<8x8x8xf32>,
    %c2_193 = arith.constant 2 : index
    %c2_194 = arith.constant 2 : index
    %c0_195 = arith.constant 0 : index
    %98 = vector.load %arg23[%c2_193, %c2_194, %c0_195] : memref<10x10x8xf32, #tpu.memory_space<vmem>>, vector<8x8x8xf32>
    %c0_196 = arith.constant 0 : index
    %c0_197 = arith.constant 0 : index
    %c64_198 = arith.constant 64 : index
    %99 = vector.load %arg24[%c0_196, %c0_197, %c64_198] : memref<8x8x72xf32, #tpu.memory_space<vmem>>, vector<8x8x8xf32>
    tpu.vector_store %arg24[%c0_196, %c0_197, %c64_198], %98 {strides = array<i32>} : memref<8x8x72xf32, #tpu.memory_space<vmem>>, vector<8x8x8xf32>,
    %c0_199 = arith.constant 0 : index
    %c0_200 = arith.constant 0 : index
    %c0_201 = arith.constant 0 : index
    %100 = vector.load %arg24[%c0_199, %c0_200, %c0_201] : memref<8x8x72xf32, #tpu.memory_space<vmem>>, vector<8x8x72xf32>
    %101 = vector.shape_cast %100 : vector<8x8x72xf32> to vector<64x72xf32>
    %c0_202 = arith.constant 0 : index
    %c0_203 = arith.constant 0 : index
    %102 = vector.load %arg11[%c0_202, %c0_203] : memref<72x8xf32, #tpu.memory_space<vmem>>, vector<72x8xf32>
    %cst_204 = arith.constant dense<0.000000e+00> : vector<64x8xf32>
    %103 = tpu.matmul %101, %102, %cst_204 {dimension_numbers = #tpu.dot_dimension_numbers<[1], [0], [0], [1], [0, 0, 1, 1], [], []>} : vector<64x72xf32>, vector<72x8xf32>, vector<64x8xf32> -> vector<64x8xf32>
    %c0_205 = arith.constant 0 : index
    %c0_206 = arith.constant 0 : index
    %104 = vector.load %arg12[%c0_205, %c0_206] : memref<1x8xf32, #tpu.memory_space<vmem>>, vector<1x8xf32>
    %105 = vector.broadcast %104 : vector<1x8xf32> to vector<64x8xf32>
    %106 = arith.mulf %103, %105 : vector<64x8xf32>
    %c0_207 = arith.constant 0 : index
    %c0_208 = arith.constant 0 : index
    %107 = vector.load %arg13[%c0_207, %c0_208] : memref<1x8xf32, #tpu.memory_space<vmem>>, vector<1x8xf32>
    %108 = vector.broadcast %107 : vector<1x8xf32> to vector<64x8xf32>
    %109 = arith.addf %106, %108 : vector<64x8xf32>
    %cst_209 = arith.constant 0.000000e+00 : f32
    %110 = vector.broadcast %cst_209 : f32 to vector<64x8xf32>
    %111 = arith.maximumf %109, %110 : vector<64x8xf32>
    %112 = vector.shape_cast %111 : vector<64x8xf32> to vector<8x8x8xf32>
    %c1_210 = arith.constant 1 : index
    %c1_211 = arith.constant 1 : index
    %c0_212 = arith.constant 0 : index
    %113 = vector.load %arg23[%c1_210, %c1_211, %c0_212] : memref<10x10x8xf32, #tpu.memory_space<vmem>>, vector<8x8x8xf32>
    tpu.vector_store %arg23[%c1_210, %c1_211, %c0_212], %112 {strides = array<i32>} : memref<10x10x8xf32, #tpu.memory_space<vmem>>, vector<8x8x8xf32>,
    %c0_213 = arith.constant 0 : index
    %c0_214 = arith.constant 0 : index
    %c0_215 = arith.constant 0 : index
    %114 = vector.load %arg23[%c0_213, %c0_214, %c0_215] : memref<10x10x8xf32, #tpu.memory_space<vmem>>, vector<8x8x8xf32>
    %c0_216 = arith.constant 0 : index
    %c0_217 = arith.constant 0 : index
    %c0_218 = arith.constant 0 : index
    %115 = vector.load %arg24[%c0_216, %c0_217, %c0_218] : memref<8x8x72xf32, #tpu.memory_space<vmem>>, vector<8x8x8xf32>
    tpu.vector_store %arg24[%c0_216, %c0_217, %c0_218], %114 {strides = array<i32>} : memref<8x8x72xf32, #tpu.memory_space<vmem>>, vector<8x8x8xf32>,
    %c0_219 = arith.constant 0 : index
    %c1_220 = arith.constant 1 : index
    %c0_221 = arith.constant 0 : index
    %116 = vector.load %arg23[%c0_219, %c1_220, %c0_221] : memref<10x10x8xf32, #tpu.memory_space<vmem>>, vector<8x8x8xf32>
    %c0_222 = arith.constant 0 : index
    %c0_223 = arith.constant 0 : index
    %c8_224 = arith.constant 8 : index
    %117 = vector.load %arg24[%c0_222, %c0_223, %c8_224] : memref<8x8x72xf32, #tpu.memory_space<vmem>>, vector<8x8x8xf32>
    tpu.vector_store %arg24[%c0_222, %c0_223, %c8_224], %116 {strides = array<i32>} : memref<8x8x72xf32, #tpu.memory_space<vmem>>, vector<8x8x8xf32>,
    %c0_225 = arith.constant 0 : index
    %c2_226 = arith.constant 2 : index
    %c0_227 = arith.constant 0 : index
    %118 = vector.load %arg23[%c0_225, %c2_226, %c0_227] : memref<10x10x8xf32, #tpu.memory_space<vmem>>, vector<8x8x8xf32>
    %c0_228 = arith.constant 0 : index
    %c0_229 = arith.constant 0 : index
    %c16_230 = arith.constant 16 : index
    %119 = vector.load %arg24[%c0_228, %c0_229, %c16_230] : memref<8x8x72xf32, #tpu.memory_space<vmem>>, vector<8x8x8xf32>
    tpu.vector_store %arg24[%c0_228, %c0_229, %c16_230], %118 {strides = array<i32>} : memref<8x8x72xf32, #tpu.memory_space<vmem>>, vector<8x8x8xf32>,
    %c1_231 = arith.constant 1 : index
    %c0_232 = arith.constant 0 : index
    %c0_233 = arith.constant 0 : index
    %120 = vector.load %arg23[%c1_231, %c0_232, %c0_233] : memref<10x10x8xf32, #tpu.memory_space<vmem>>, vector<8x8x8xf32>
    %c0_234 = arith.constant 0 : index
    %c0_235 = arith.constant 0 : index
    %c24_236 = arith.constant 24 : index
    %121 = vector.load %arg24[%c0_234, %c0_235, %c24_236] : memref<8x8x72xf32, #tpu.memory_space<vmem>>, vector<8x8x8xf32>
    tpu.vector_store %arg24[%c0_234, %c0_235, %c24_236], %120 {strides = array<i32>} : memref<8x8x72xf32, #tpu.memory_space<vmem>>, vector<8x8x8xf32>,
    %c1_237 = arith.constant 1 : index
    %c1_238 = arith.constant 1 : index
    %c0_239 = arith.constant 0 : index
    %122 = vector.load %arg23[%c1_237, %c1_238, %c0_239] : memref<10x10x8xf32, #tpu.memory_space<vmem>>, vector<8x8x8xf32>
    %c0_240 = arith.constant 0 : index
    %c0_241 = arith.constant 0 : index
    %c32_242 = arith.constant 32 : index
    %123 = vector.load %arg24[%c0_240, %c0_241, %c32_242] : memref<8x8x72xf32, #tpu.memory_space<vmem>>, vector<8x8x8xf32>
    tpu.vector_store %arg24[%c0_240, %c0_241, %c32_242], %122 {strides = array<i32>} : memref<8x8x72xf32, #tpu.memory_space<vmem>>, vector<8x8x8xf32>,
    %c1_243 = arith.constant 1 : index
    %c2_244 = arith.constant 2 : index
    %c0_245 = arith.constant 0 : index
    %124 = vector.load %arg23[%c1_243, %c2_244, %c0_245] : memref<10x10x8xf32, #tpu.memory_space<vmem>>, vector<8x8x8xf32>
    %c0_246 = arith.constant 0 : index
    %c0_247 = arith.constant 0 : index
    %c40_248 = arith.constant 40 : index
    %125 = vector.load %arg24[%c0_246, %c0_247, %c40_248] : memref<8x8x72xf32, #tpu.memory_space<vmem>>, vector<8x8x8xf32>
    tpu.vector_store %arg24[%c0_246, %c0_247, %c40_248], %124 {strides = array<i32>} : memref<8x8x72xf32, #tpu.memory_space<vmem>>, vector<8x8x8xf32>,
    %c2_249 = arith.constant 2 : index
    %c0_250 = arith.constant 0 : index
    %c0_251 = arith.constant 0 : index
    %126 = vector.load %arg23[%c2_249, %c0_250, %c0_251] : memref<10x10x8xf32, #tpu.memory_space<vmem>>, vector<8x8x8xf32>
    %c0_252 = arith.constant 0 : index
    %c0_253 = arith.constant 0 : index
    %c48_254 = arith.constant 48 : index
    %127 = vector.load %arg24[%c0_252, %c0_253, %c48_254] : memref<8x8x72xf32, #tpu.memory_space<vmem>>, vector<8x8x8xf32>
    tpu.vector_store %arg24[%c0_252, %c0_253, %c48_254], %126 {strides = array<i32>} : memref<8x8x72xf32, #tpu.memory_space<vmem>>, vector<8x8x8xf32>,
    %c2_255 = arith.constant 2 : index
    %c1_256 = arith.constant 1 : index
    %c0_257 = arith.constant 0 : index
    %128 = vector.load %arg23[%c2_255, %c1_256, %c0_257] : memref<10x10x8xf32, #tpu.memory_space<vmem>>, vector<8x8x8xf32>
    %c0_258 = arith.constant 0 : index
    %c0_259 = arith.constant 0 : index
    %c56_260 = arith.constant 56 : index
    %129 = vector.load %arg24[%c0_258, %c0_259, %c56_260] : memref<8x8x72xf32, #tpu.memory_space<vmem>>, vector<8x8x8xf32>
    tpu.vector_store %arg24[%c0_258, %c0_259, %c56_260], %128 {strides = array<i32>} : memref<8x8x72xf32, #tpu.memory_space<vmem>>, vector<8x8x8xf32>,
    %c2_261 = arith.constant 2 : index
    %c2_262 = arith.constant 2 : index
    %c0_263 = arith.constant 0 : index
    %130 = vector.load %arg23[%c2_261, %c2_262, %c0_263] : memref<10x10x8xf32, #tpu.memory_space<vmem>>, vector<8x8x8xf32>
    %c0_264 = arith.constant 0 : index
    %c0_265 = arith.constant 0 : index
    %c64_266 = arith.constant 64 : index
    %131 = vector.load %arg24[%c0_264, %c0_265, %c64_266] : memref<8x8x72xf32, #tpu.memory_space<vmem>>, vector<8x8x8xf32>
    tpu.vector_store %arg24[%c0_264, %c0_265, %c64_266], %130 {strides = array<i32>} : memref<8x8x72xf32, #tpu.memory_space<vmem>>, vector<8x8x8xf32>,
    %c0_267 = arith.constant 0 : index
    %c0_268 = arith.constant 0 : index
    %c0_269 = arith.constant 0 : index
    %132 = vector.load %arg24[%c0_267, %c0_268, %c0_269] : memref<8x8x72xf32, #tpu.memory_space<vmem>>, vector<8x8x72xf32>
    %133 = vector.shape_cast %132 : vector<8x8x72xf32> to vector<64x72xf32>
    %c0_270 = arith.constant 0 : index
    %c0_271 = arith.constant 0 : index
    %134 = vector.load %arg14[%c0_270, %c0_271] : memref<72x8xf32, #tpu.memory_space<vmem>>, vector<72x8xf32>
    %cst_272 = arith.constant dense<0.000000e+00> : vector<64x8xf32>
    %135 = tpu.matmul %133, %134, %cst_272 {dimension_numbers = #tpu.dot_dimension_numbers<[1], [0], [0], [1], [0, 0, 1, 1], [], []>} : vector<64x72xf32>, vector<72x8xf32>, vector<64x8xf32> -> vector<64x8xf32>
    %c0_273 = arith.constant 0 : index
    %c0_274 = arith.constant 0 : index
    %136 = vector.load %arg15[%c0_273, %c0_274] : memref<1x8xf32, #tpu.memory_space<vmem>>, vector<1x8xf32>
    %137 = vector.broadcast %136 : vector<1x8xf32> to vector<64x8xf32>
    %138 = arith.mulf %135, %137 : vector<64x8xf32>
    %c0_275 = arith.constant 0 : index
    %c0_276 = arith.constant 0 : index
    %139 = vector.load %arg16[%c0_275, %c0_276] : memref<1x8xf32, #tpu.memory_space<vmem>>, vector<1x8xf32>
    %140 = vector.broadcast %139 : vector<1x8xf32> to vector<64x8xf32>
    %141 = arith.addf %138, %140 : vector<64x8xf32>
    %142 = arith.addf %141, %79 : vector<64x8xf32>
    %cst_277 = arith.constant 0.000000e+00 : f32
    %143 = vector.broadcast %cst_277 : f32 to vector<64x8xf32>
    %144 = arith.maximumf %142, %143 : vector<64x8xf32>
    %145 = vector.shape_cast %144 : vector<64x8xf32> to vector<8x8x8xf32>
    %c0_278 = arith.constant 0 : index
    %c0_279 = arith.constant 0 : index
    %c0_280 = arith.constant 0 : index
    %c0_281 = arith.constant 0 : index
    %146 = vector.load %arg19[%c0_278, %c0_279, %c0_280, %c0_281] : memref<1x8x8x8xf32, #tpu.memory_space<vmem>>, vector<1x8x8x8xf32>
    %147 = vector.shape_cast %146 : vector<1x8x8x8xf32> to vector<8x8x8xf32>
    %148 = vector.shape_cast %145 : vector<8x8x8xf32> to vector<1x8x8x8xf32>
    tpu.vector_store %arg19[%c0_278, %c0_279, %c0_280, %c0_281], %148 {strides = array<i32>} : memref<1x8x8x8xf32, #tpu.memory_space<vmem>>, vector<1x8x8x8xf32>,
    %cst_282 = arith.constant dense<0.000000e+00> : vector<8xf32>
    %149 = vector.multi_reduction <add>, %144, %cst_282 [0] : vector<64x8xf32> to vector<8xf32>
    %150 = vector.shape_cast %149 : vector<8xf32> to vector<1x8xf32>
    %cst_283 = arith.constant 1.562500e-02 : f32
    %151 = vector.broadcast %cst_283 : f32 to vector<1x8xf32>
    %152 = arith.mulf %150, %151 : vector<1x8xf32>
    %c0_284 = arith.constant 0 : index
    %c0_285 = arith.constant 0 : index
    %c0_286 = arith.constant 0 : index
    %153 = vector.load %arg20[%c0_284, %c0_285, %c0_286] : memref<1x1x8xf32, #tpu.memory_space<vmem>>, vector<1x1x8xf32>
    %154 = vector.shape_cast %153 : vector<1x1x8xf32> to vector<1x8xf32>
    %155 = vector.shape_cast %152 : vector<1x8xf32> to vector<1x1x8xf32>
    tpu.vector_store %arg20[%c0_284, %c0_285, %c0_286], %155 {strides = array<i32>} : memref<1x1x8xf32, #tpu.memory_space<vmem>>, vector<1x1x8xf32>,
    %c0_287 = arith.constant 0 : index
    %c0_288 = arith.constant 0 : index
    %156 = vector.load %arg17[%c0_287, %c0_288] : memref<8x10xf32, #tpu.memory_space<vmem>>, vector<8x10xf32>
    %cst_289 = arith.constant dense<0.000000e+00> : vector<1x10xf32>
    %157 = tpu.matmul %152, %156, %cst_289 {dimension_numbers = #tpu.dot_dimension_numbers<[1], [0], [0], [1], [0, 0, 1, 1], [], []>} : vector<1x8xf32>, vector<8x10xf32>, vector<1x10xf32> -> vector<1x10xf32>
    %c0_290 = arith.constant 0 : index
    %c0_291 = arith.constant 0 : index
    %158 = vector.load %arg18[%c0_290, %c0_291] : memref<1x10xf32, #tpu.memory_space<vmem>>, vector<1x10xf32>
    %159 = arith.addf %157, %158 : vector<1x10xf32>
    %c0_292 = arith.constant 0 : index
    %c0_293 = arith.constant 0 : index
    %c0_294 = arith.constant 0 : index
    %160 = vector.load %arg21[%c0_292, %c0_293, %c0_294] : memref<1x1x10xf32, #tpu.memory_space<vmem>>, vector<1x1x10xf32>
    %161 = vector.shape_cast %160 : vector<1x1x10xf32> to vector<1x10xf32>
    %162 = vector.shape_cast %159 : vector<1x10xf32> to vector<1x1x10xf32>
    tpu.vector_store %arg21[%c0_292, %c0_293, %c0_294], %162 {strides = array<i32>} : memref<1x1x10xf32, #tpu.memory_space<vmem>>, vector<1x1x10xf32>,
    return
  }
  func.func @transform_0(%arg0: i32) -> (i32, i32, i32, i32) {
    %c0_i32 = arith.constant 0 : i32
    %c0_i32_0 = arith.constant 0 : i32
    %c0_i32_1 = arith.constant 0 : i32
    %c0_i32_2 = arith.constant 0 : i32
    return %arg0, %c0_i32, %c0_i32_0, %c0_i32_1 : i32, i32, i32, i32
  }
  func.func @transform_1(%arg0: i32) -> (i32, i32) {
    %c0_i32 = arith.constant 0 : i32
    %c0_i32_0 = arith.constant 0 : i32
    %c0_i32_1 = arith.constant 0 : i32
    return %c0_i32, %c0_i32_0 : i32, i32
  }
  func.func @transform_2(%arg0: i32) -> (i32, i32) {
    %c0_i32 = arith.constant 0 : i32
    %c0_i32_0 = arith.constant 0 : i32
    %c0_i32_1 = arith.constant 0 : i32
    return %c0_i32, %c0_i32_0 : i32, i32
  }
  func.func @transform_3(%arg0: i32) -> (i32, i32) {
    %c0_i32 = arith.constant 0 : i32
    %c0_i32_0 = arith.constant 0 : i32
    %c0_i32_1 = arith.constant 0 : i32
    return %c0_i32, %c0_i32_0 : i32, i32
  }
  func.func @transform_4(%arg0: i32) -> (i32, i32) {
    %c0_i32 = arith.constant 0 : i32
    %c0_i32_0 = arith.constant 0 : i32
    %c0_i32_1 = arith.constant 0 : i32
    return %c0_i32, %c0_i32_0 : i32, i32
  }
  func.func @transform_5(%arg0: i32) -> (i32, i32) {
    %c0_i32 = arith.constant 0 : i32
    %c0_i32_0 = arith.constant 0 : i32
    %c0_i32_1 = arith.constant 0 : i32
    return %c0_i32, %c0_i32_0 : i32, i32
  }
  func.func @transform_6(%arg0: i32) -> (i32, i32) {
    %c0_i32 = arith.constant 0 : i32
    %c0_i32_0 = arith.constant 0 : i32
    %c0_i32_1 = arith.constant 0 : i32
    return %c0_i32, %c0_i32_0 : i32, i32
  }
  func.func @transform_7(%arg0: i32) -> (i32, i32) {
    %c0_i32 = arith.constant 0 : i32
    %c0_i32_0 = arith.constant 0 : i32
    %c0_i32_1 = arith.constant 0 : i32
    return %c0_i32, %c0_i32_0 : i32, i32
  }
  func.func @transform_8(%arg0: i32) -> (i32, i32) {
    %c0_i32 = arith.constant 0 : i32
    %c0_i32_0 = arith.constant 0 : i32
    %c0_i32_1 = arith.constant 0 : i32
    return %c0_i32, %c0_i32_0 : i32, i32
  }
  func.func @transform_9(%arg0: i32) -> (i32, i32) {
    %c0_i32 = arith.constant 0 : i32
    %c0_i32_0 = arith.constant 0 : i32
    %c0_i32_1 = arith.constant 0 : i32
    return %c0_i32, %c0_i32_0 : i32, i32
  }
  func.func @transform_10(%arg0: i32) -> (i32, i32) {
    %c0_i32 = arith.constant 0 : i32
    %c0_i32_0 = arith.constant 0 : i32
    %c0_i32_1 = arith.constant 0 : i32
    return %c0_i32, %c0_i32_0 : i32, i32
  }
  func.func @transform_11(%arg0: i32) -> (i32, i32) {
    %c0_i32 = arith.constant 0 : i32
    %c0_i32_0 = arith.constant 0 : i32
    %c0_i32_1 = arith.constant 0 : i32
    return %c0_i32, %c0_i32_0 : i32, i32
  }
  func.func @transform_12(%arg0: i32) -> (i32, i32) {
    %c0_i32 = arith.constant 0 : i32
    %c0_i32_0 = arith.constant 0 : i32
    %c0_i32_1 = arith.constant 0 : i32
    return %c0_i32, %c0_i32_0 : i32, i32
  }
  func.func @transform_13(%arg0: i32) -> (i32, i32) {
    %c0_i32 = arith.constant 0 : i32
    %c0_i32_0 = arith.constant 0 : i32
    %c0_i32_1 = arith.constant 0 : i32
    return %c0_i32, %c0_i32_0 : i32, i32
  }
  func.func @transform_14(%arg0: i32) -> (i32, i32) {
    %c0_i32 = arith.constant 0 : i32
    %c0_i32_0 = arith.constant 0 : i32
    %c0_i32_1 = arith.constant 0 : i32
    return %c0_i32, %c0_i32_0 : i32, i32
  }
  func.func @transform_15(%arg0: i32) -> (i32, i32) {
    %c0_i32 = arith.constant 0 : i32
    %c0_i32_0 = arith.constant 0 : i32
    %c0_i32_1 = arith.constant 0 : i32
    return %c0_i32, %c0_i32_0 : i32, i32
  }
  func.func @transform_16(%arg0: i32) -> (i32, i32) {
    %c0_i32 = arith.constant 0 : i32
    %c0_i32_0 = arith.constant 0 : i32
    %c0_i32_1 = arith.constant 0 : i32
    return %c0_i32, %c0_i32_0 : i32, i32
  }
  func.func @transform_17(%arg0: i32) -> (i32, i32) {
    %c0_i32 = arith.constant 0 : i32
    %c0_i32_0 = arith.constant 0 : i32
    %c0_i32_1 = arith.constant 0 : i32
    return %c0_i32, %c0_i32_0 : i32, i32
  }
  func.func @transform_18(%arg0: i32) -> (i32, i32, i32, i32) {
    %c0_i32 = arith.constant 0 : i32
    %c0_i32_0 = arith.constant 0 : i32
    %c0_i32_1 = arith.constant 0 : i32
    %c0_i32_2 = arith.constant 0 : i32
    return %arg0, %c0_i32, %c0_i32_0, %c0_i32_1 : i32, i32, i32, i32
  }
  func.func @transform_19(%arg0: i32) -> (i32, i32, i32) {
    %c0_i32 = arith.constant 0 : i32
    %c0_i32_0 = arith.constant 0 : i32
    %c0_i32_1 = arith.constant 0 : i32
    return %arg0, %c0_i32, %c0_i32_0 : i32, i32, i32
  }
  func.func @transform_20(%arg0: i32) -> (i32, i32, i32) {
    %c0_i32 = arith.constant 0 : i32
    %c0_i32_0 = arith.constant 0 : i32
    %c0_i32_1 = arith.constant 0 : i32
    return %arg0, %c0_i32, %c0_i32_0 : i32, i32, i32
  }
}

</mosaic_0001>

<llo_original>
// kernel: _lambda_.1
$region0: #{_lambda_.1}
  #allocation0 [shape = 'u32[]', space=smem, size = 0x4, offset = 0x4, fixed_abs, tag = 'smem constant byte address 0x4 - core index']
  #allocation1 [shape = 'u32[72,128]{1,0:T(1,128)}', space=vmem, size = 0x9000, scoped, tag = 'internal scratch']
  #allocation2 [shape = 'f32[18,18,4]{2,1,0:T(8,128)}', space=vmem, size = 0x36000, scoped, tag = 'scratch operand']
  #allocation3 [shape = 'f32[10,10,8]{2,1,0:T(8,128)}', space=vmem, size = 0x14000, scoped, tag = 'scratch operand']
  #allocation4 [shape = 'f32[8,8,72]{2,1,0:T(8,128)}', space=vmem, size = 0x8000, scoped, tag = 'scratch operand']
  %s0 = inlined_call_operand.vmem [shape: f32[2,16,16,4], index: 0, kind: input, shape index: {}]
  %s1 = inlined_call_operand.vmem [shape: f32[36,8], index: 1, kind: input, shape index: {}]
  %s2 = inlined_call_operand.vmem [shape: f32[1,8], index: 2, kind: input, shape index: {}]
  %s3 = inlined_call_operand.vmem [shape: f32[1,8], index: 3, kind: input, shape index: {}]
  %s4 = inlined_call_operand.vmem [shape: f32[72,8], index: 4, kind: input, shape index: {}]
  %s5 = inlined_call_operand.vmem [shape: f32[1,8], index: 5, kind: input, shape index: {}]
  %s6 = inlined_call_operand.vmem [shape: f32[1,8], index: 6, kind: input, shape index: {}]
  %s7 = inlined_call_operand.vmem [shape: f32[4,8], index: 7, kind: input, shape index: {}]
  %s8 = inlined_call_operand.vmem [shape: f32[1,8], index: 8, kind: input, shape index: {}]
  %s9 = inlined_call_operand.vmem [shape: f32[1,8], index: 9, kind: input, shape index: {}]
  %s10 = inlined_call_operand.vmem [shape: f32[72,8], index: 10, kind: input, shape index: {}]
  %s11 = inlined_call_operand.vmem [shape: f32[1,8], index: 11, kind: input, shape index: {}]
  %s12 = inlined_call_operand.vmem [shape: f32[1,8], index: 12, kind: input, shape index: {}]
  %s13 = inlined_call_operand.vmem [shape: f32[72,8], index: 13, kind: input, shape index: {}]
  %s14 = inlined_call_operand.vmem [shape: f32[1,8], index: 14, kind: input, shape index: {}]
  %s15 = inlined_call_operand.vmem [shape: f32[1,8], index: 15, kind: input, shape index: {}]
  %s16 = inlined_call_operand.vmem [shape: f32[8,10], index: 16, kind: input, shape index: {}]
  %s17 = inlined_call_operand.vmem [shape: f32[1,10], index: 17, kind: input, shape index: {}]
  %s18 = inlined_call_operand.vmem [shape: f32[2,8,8,8], index: 18, kind: output, shape index: {0}]
  %s19 = inlined_call_operand.hbm [shape: f32[2,1,8], index: 19, kind: output, shape index: {1}]
  %s20 = inlined_call_operand.hbm [shape: f32[2,1,10], index: 20, kind: output, shape index: {2}]
  %21 = xla_tuple %s18, %s19, %s20
  %s22 = sld [smem:[#allocation0]]
  $region121: #{_lambda_.1} parent=0
    _
  %s24 = ssub.s32 1, %s22
  %s25 = scalar_select 0, %s24, %s22
  $region1: #{_lambda_.1} parent=0
    #allocation5 [shape = 'u8[1024]{0}', space=vmem, size = 0x400, scoped, tag = 'output window, operand 1']
    #allocation6 [shape = 's32[2]{0}', space=sflag, size = 0x8, scoped, tag = 'scoped memory for _lambda_.1']
    #allocation7 [shape = 'u8[1024]{0}', space=vmem, size = 0x400, scoped, tag = 'output window, operand 2']
    #allocation8 [shape = 's32[2]{0}', space=sflag, size = 0x8, scoped, tag = 'scoped memory for _lambda_.1']
    %26 = vsyncpa [#allocation6], 0
    %s27 = scalar_lea.sflag [#allocation6], 1
    %28 = vsyncpa %s27, 0
    %29 = vsyncpa [#allocation8], 0
    %s30 = scalar_lea.sflag [#allocation8], 1
    %31 = vsyncpa %s30, 0
    loop: start=0, step=1, limit=4
    $region2: #{_lambda_.1} parent=1 // loop_pre_header
      _
    $region3: #{_lambda_.1} parent=1 // loop_header
      %s33 = sphi 0, %s37
      %p34 = scmp.ge.s32.totalorder %s33, 4
      %s43 = sphi 0, %s45
      %s46 = sphi 0, %s43
      %s47 = sphi 0, %s46
      %s63 = sphi 0, %s47
      %s67 = sphi 0, %s67
      %s69 = sphi 0, %s67
      %s70 = sphi 0, %s69
      %s84 = sphi 0, %s70
      %s88 = sphi 0, %s88
      %s90 = sphi 0, %s88
      %s91 = sphi 0, %s90
      %s105 = sphi 0, %s91
      %s109 = sphi 0, %s109
      %s111 = sphi 0, %s109
      %s112 = sphi 0, %s111
      %s126 = sphi 0, %s112
      %s130 = sphi 0, %s130
      %s132 = sphi 0, %s130
      %s133 = sphi 0, %s132
      %s147 = sphi 0, %s133
      %s151 = sphi 0, %s151
      %s153 = sphi 0, %s151
      %s154 = sphi 0, %s153
      %s168 = sphi 0, %s154
      %s172 = sphi 0, %s172
      %s174 = sphi 0, %s172
      %s175 = sphi 0, %s174
      %s189 = sphi 0, %s175
      %s193 = sphi 0, %s193
      %s195 = sphi 0, %s193
      %s196 = sphi 0, %s195
      %s210 = sphi 0, %s196
      %s214 = sphi 0, %s214
      %s216 = sphi 0, %s214
      %s217 = sphi 0, %s216
      %s231 = sphi 0, %s217
      %s235 = sphi 0, %s235
      %s237 = sphi 0, %s235
      %s238 = sphi 0, %s237
      %s252 = sphi 0, %s238
      %s256 = sphi 0, %s256
      %s258 = sphi 0, %s256
      %s259 = sphi 0, %s258
      %s273 = sphi 0, %s259
      %s277 = sphi 0, %s277
      %s279 = sphi 0, %s277
      %s280 = sphi 0, %s279
      %s294 = sphi 0, %s280
      %s298 = sphi 0, %s298
      %s300 = sphi 0, %s298
      %s301 = sphi 0, %s300
      %s315 = sphi 0, %s301
      %s319 = sphi 0, %s319
      %s321 = sphi 0, %s319
      %s322 = sphi 0, %s321
      %s336 = sphi 0, %s322
      %s340 = sphi 0, %s340
      %s342 = sphi 0, %s340
      %s343 = sphi 0, %s342
      %s357 = sphi 0, %s343
      %s361 = sphi 0, %s361
      %s363 = sphi 0, %s361
      %s364 = sphi 0, %s363
      %s378 = sphi 0, %s364
      %s382 = sphi 0, %s382
      %s384 = sphi 0, %s382
      %s385 = sphi 0, %s384
      %s399 = sphi 0, %s385
      %s403 = sphi 0, %s403
      %s405 = sphi 0, %s403
      %s406 = sphi 0, %s405
      %s420 = sphi 0, %s406
      %s426 = sphi 0, %s428
      %s429 = sphi 0, %s426
      %s430 = sphi 0, %s429
      %s446 = sphi 0, %s430
      %s452 = sphi 0, %s454
      %s455 = sphi 0, %s452
      %s456 = sphi 0, %s455
      %s472 = sphi 0, %s456
      %s478 = sphi 0, %s480
      %s481 = sphi 0, %s478
      %s482 = sphi 0, %s481
      %s498 = sphi 0, %s482
    $region4: #{_lambda_.1} parent=1 // loop_header_branch
      %36 = sbr.rel (%p34) target = $region8
    $region5: #{_lambda_.1} parent=1 // loop_body
      %s38 = ssub.s32 %s33, 1
      %s39 = ssub.s32 %s33, 2
      %s40 = sadd.s32 %s33, 1
      %s41 = ssub.s32 %s33, %s40
      %p42 = scmp.eq.s32.totalorder %s41, 0
      %s44 = sadd.s32 %s43, 1
      %s45 = scalar_select %p42, %s43, %s44
      %p48 = pneg %p42
      %p49 = scmp.eq.s32.totalorder %s33, 1
      %p50 = por %p48, %p49
      %p51 = scmp.ne.s32.totalorder %s43, %s46
      %p52 = scmp.eq.s32.totalorder %s33, 0
      %p53 = por %p51, %p52
      %p54 = scmp.ne.s32.totalorder %s43, %s46
      %p55 = scmp.eq.s32.totalorder %s38, 1
      %p56 = por %p54, %p55
      %p57 = scmp.ne.s32.totalorder %s46, %s47
      %p58 = scmp.eq.s32.totalorder %s38, 0
      %p59 = por %p57, %p58
      %p60 = scmp.ne.s32.totalorder %s46, %s47
      %p61 = scmp.eq.s32.totalorder %s39, 1
      %p62 = por %p60, %p61
      %p64 = scmp.ne.s32.totalorder %s47, %s63
      %p65 = scmp.eq.s32.totalorder %s39, 0
      %p66 = por %p64, %p65
      %s68 = sadd.s32 %s67, 1
      %p71 = scmp.eq.s32.totalorder %s33, 1
      %p72 = scmp.ne.s32.totalorder %s67, %s69
      %p73 = scmp.eq.s32.totalorder %s33, 0
      %p74 = por %p72, %p73
      %p75 = scmp.ne.s32.totalorder %s67, %s69
      %p76 = scmp.eq.s32.totalorder %s38, 1
      %p77 = por %p75, %p76
      %p78 = scmp.ne.s32.totalorder %s69, %s70
      %p79 = scmp.eq.s32.totalorder %s38, 0
      %p80 = por %p78, %p79
      %p81 = scmp.ne.s32.totalorder %s69, %s70
      %p82 = scmp.eq.s32.totalorder %s39, 1
      %p83 = por %p81, %p82
      %p85 = scmp.ne.s32.totalorder %s70, %s84
      %p86 = scmp.eq.s32.totalorder %s39, 0
      %p87 = por %p85, %p86
      %s89 = sadd.s32 %s88, 1
      %p92 = scmp.eq.s32.totalorder %s33, 1
      %p93 = scmp.ne.s32.totalorder %s88, %s90
      %p94 = scmp.eq.s32.totalorder %s33, 0
      %p95 = por %p93, %p94
      %p96 = scmp.ne.s32.totalorder %s88, %s90
      %p97 = scmp.eq.s32.totalorder %s38, 1
      %p98 = por %p96, %p97
      %p99 = scmp.ne.s32.totalorder %s90, %s91
      %p100 = scmp.eq.s32.totalorder %s38, 0
      %p101 = por %p99, %p100
      %p102 = scmp.ne.s32.totalorder %s90, %s91
      %p103 = scmp.eq.s32.totalorder %s39, 1
      %p104 = por %p102, %p103
      %p106 = scmp.ne.s32.totalorder %s91, %s105
      %p107 = scmp.eq.s32.totalorder %s39, 0
      %p108 = por %p106, %p107
      %s110 = sadd.s32 %s109, 1
      %p113 = scmp.eq.s32.totalorder %s33, 1
      %p114 = scmp.ne.s32.totalorder %s109, %s111
      %p115 = scmp.eq.s32.totalorder %s33, 0
      %p116 = por %p114, %p115
      %p117 = scmp.ne.s32.totalorder %s109, %s111
      %p118 = scmp.eq.s32.totalorder %s38, 1
      %p119 = por %p117, %p118
      %p120 = scmp.ne.s32.totalorder %s111, %s112
      %p121 = scmp.eq.s32.totalorder %s38, 0
      %p122 = por %p120, %p121
      %p123 = scmp.ne.s32.totalorder %s111, %s112
      %p124 = scmp.eq.s32.totalorder %s39, 1
      %p125 = por %p123, %p124
      %p127 = scmp.ne.s32.totalorder %s112, %s126
      %p128 = scmp.eq.s32.totalorder %s39, 0
      %p129 = por %p127, %p128
      %s131 = sadd.s32 %s130, 1
      %p134 = scmp.eq.s32.totalorder %s33, 1
      %p135 = scmp.ne.s32.totalorder %s130, %s132
      %p136 = scmp.eq.s32.totalorder %s33, 0
      %p137 = por %p135, %p136
      %p138 = scmp.ne.s32.totalorder %s130, %s132
      %p139 = scmp.eq.s32.totalorder %s38, 1
      %p140 = por %p138, %p139
      %p141 = scmp.ne.s32.totalorder %s132, %s133
      %p142 = scmp.eq.s32.totalorder %s38, 0
      %p143 = por %p141, %p142
      %p144 = scmp.ne.s32.totalorder %s132, %s133
      %p145 = scmp.eq.s32.totalorder %s39, 1
      %p146 = por %p144, %p145
      %p148 = scmp.ne.s32.totalorder %s133, %s147
      %p149 = scmp.eq.s32.totalorder %s39, 0
      %p150 = por %p148, %p149
      %s152 = sadd.s32 %s151, 1
      %p155 = scmp.eq.s32.totalorder %s33, 1
      %p156 = scmp.ne.s32.totalorder %s151, %s153
      %p157 = scmp.eq.s32.totalorder %s33, 0
      %p158 = por %p156, %p157
      %p159 = scmp.ne.s32.totalorder %s151, %s153
      %p160 = scmp.eq.s32.totalorder %s38, 1
      %p161 = por %p159, %p160
      %p162 = scmp.ne.s32.totalorder %s153, %s154
      %p163 = scmp.eq.s32.totalorder %s38, 0
      %p164 = por %p162, %p163
      %p165 = scmp.ne.s32.totalorder %s153, %s154
      %p166 = scmp.eq.s32.totalorder %s39, 1
      %p167 = por %p165, %p166
      %p169 = scmp.ne.s32.totalorder %s154, %s168
      %p170 = scmp.eq.s32.totalorder %s39, 0
      %p171 = por %p169, %p170
      %s173 = sadd.s32 %s172, 1
      %p176 = scmp.eq.s32.totalorder %s33, 1
      %p177 = scmp.ne.s32.totalorder %s172, %s174
      %p178 = scmp.eq.s32.totalorder %s33, 0
      %p179 = por %p177, %p178
      %p180 = scmp.ne.s32.totalorder %s172, %s174
      %p181 = scmp.eq.s32.totalorder %s38, 1
      %p182 = por %p180, %p181
      %p183 = scmp.ne.s32.totalorder %s174, %s175
      %p184 = scmp.eq.s32.totalorder %s38, 0
      %p185 = por %p183, %p184
      %p186 = scmp.ne.s32.totalorder %s174, %s175
      %p187 = scmp.eq.s32.totalorder %s39, 1
      %p188 = por %p186, %p187
      %p190 = scmp.ne.s32.totalorder %s175, %s189
      %p191 = scmp.eq.s32.totalorder %s39, 0
      %p192 = por %p190, %p191
      %s194 = sadd.s32 %s193, 1
      %p197 = scmp.eq.s32.totalorder %s33, 1
      %p198 = scmp.ne.s32.totalorder %s193, %s195
      %p199 = scmp.eq.s32.totalorder %s33, 0
      %p200 = por %p198, %p199
      %p201 = scmp.ne.s32.totalorder %s193, %s195
      %p202 = scmp.eq.s32.totalorder %s38, 1
      %p203 = por %p201, %p202
      %p204 = scmp.ne.s32.totalorder %s195, %s196
      %p205 = scmp.eq.s32.totalorder %s38, 0
      %p206 = por %p204, %p205
      %p207 = scmp.ne.s32.totalorder %s195, %s196
      %p208 = scmp.eq.s32.totalorder %s39, 1
      %p209 = por %p207, %p208
      %p211 = scmp.ne.s32.totalorder %s196, %s210
      %p212 = scmp.eq.s32.totalorder %s39, 0
      %p213 = por %p211, %p212
      %s215 = sadd.s32 %s214, 1
      %p218 = scmp.eq.s32.totalorder %s33, 1
      %p219 = scmp.ne.s32.totalorder %s214, %s216
      %p220 = scmp.eq.s32.totalorder %s33, 0
      %p221 = por %p219, %p220
      %p222 = scmp.ne.s32.totalorder %s214, %s216
      %p223 = scmp.eq.s32.totalorder %s38, 1
      %p224 = por %p222, %p223
      %p225 = scmp.ne.s32.totalorder %s216, %s217
      %p226 = scmp.eq.s32.totalorder %s38, 0
      %p227 = por %p225, %p226
      %p228 = scmp.ne.s32.totalorder %s216, %s217
      %p229 = scmp.eq.s32.totalorder %s39, 1
      %p230 = por %p228, %p229
      %p232 = scmp.ne.s32.totalorder %s217, %s231
      %p233 = scmp.eq.s32.totalorder %s39, 0
      %p234 = por %p232, %p233
      %s236 = sadd.s32 %s235, 1
      %p239 = scmp.eq.s32.totalorder %s33, 1
      %p240 = scmp.ne.s32.totalorder %s235, %s237
      %p241 = scmp.eq.s32.totalorder %s33, 0
      %p242 = por %p240, %p241
      %p243 = scmp.ne.s32.totalorder %s235, %s237
      %p244 = scmp.eq.s32.totalorder %s38, 1
      %p245 = por %p243, %p244
      %p246 = scmp.ne.s32.totalorder %s237, %s238
      %p247 = scmp.eq.s32.totalorder %s38, 0
      %p248 = por %p246, %p247
      %p249 = scmp.ne.s32.totalorder %s237, %s238
      %p250 = scmp.eq.s32.totalorder %s39, 1
      %p251 = por %p249, %p250
      %p253 = scmp.ne.s32.totalorder %s238, %s252
      %p254 = scmp.eq.s32.totalorder %s39, 0
      %p255 = por %p253, %p254
      %s257 = sadd.s32 %s256, 1
      %p260 = scmp.eq.s32.totalorder %s33, 1
      %p261 = scmp.ne.s32.totalorder %s256, %s258
      %p262 = scmp.eq.s32.totalorder %s33, 0
      %p263 = por %p261, %p262
      %p264 = scmp.ne.s32.totalorder %s256, %s258
      %p265 = scmp.eq.s32.totalorder %s38, 1
      %p266 = por %p264, %p265
      %p267 = scmp.ne.s32.totalorder %s258, %s259
      %p268 = scmp.eq.s32.totalorder %s38, 0
      %p269 = por %p267, %p268
      %p270 = scmp.ne.s32.totalorder %s258, %s259
      %p271 = scmp.eq.s32.totalorder %s39, 1
      %p272 = por %p270, %p271
      %p274 = scmp.ne.s32.totalorder %s259, %s273
      %p275 = scmp.eq.s32.totalorder %s39, 0
      %p276 = por %p274, %p275
      %s278 = sadd.s32 %s277, 1
      %p281 = scmp.eq.s32.totalorder %s33, 1
      %p282 = scmp.ne.s32.totalorder %s277, %s279
      %p283 = scmp.eq.s32.totalorder %s33, 0
      %p284 = por %p282, %p283
      %p285 = scmp.ne.s32.totalorder %s277, %s279
      %p286 = scmp.eq.s32.totalorder %s38, 1
      %p287 = por %p285, %p286
      %p288 = scmp.ne.s32.totalorder %s279, %s280
      %p289 = scmp.eq.s32.totalorder %s38, 0
      %p290 = por %p288, %p289
      %p291 = scmp.ne.s32.totalorder %s279, %s280
      %p292 = scmp.eq.s32.totalorder %s39, 1
      %p293 = por %p291, %p292
      %p295 = scmp.ne.s32.totalorder %s280, %s294
      %p296 = scmp.eq.s32.totalorder %s39, 0
      %p297 = por %p295, %p296
      %s299 = sadd.s32 %s298, 1
      %p302 = scmp.eq.s32.totalorder %s33, 1
      %p303 = scmp.ne.s32.totalorder %s298, %s300
      %p304 = scmp.eq.s32.totalorder %s33, 0
      %p305 = por %p303, %p304
      %p306 = scmp.ne.s32.totalorder %s298, %s300
      %p307 = scmp.eq.s32.totalorder %s38, 1
      %p308 = por %p306, %p307
      %p309 = scmp.ne.s32.totalorder %s300, %s301
      %p310 = scmp.eq.s32.totalorder %s38, 0
      %p311 = por %p309, %p310
      %p312 = scmp.ne.s32.totalorder %s300, %s301
      %p313 = scmp.eq.s32.totalorder %s39, 1
      %p314 = por %p312, %p313
      %p316 = scmp.ne.s32.totalorder %s301, %s315
      %p317 = scmp.eq.s32.totalorder %s39, 0
      %p318 = por %p316, %p317
      %s320 = sadd.s32 %s319, 1
      %p323 = scmp.eq.s32.totalorder %s33, 1
      %p324 = scmp.ne.s32.totalorder %s319, %s321
      %p325 = scmp.eq.s32.totalorder %s33, 0
      %p326 = por %p324, %p325
      %p327 = scmp.ne.s32.totalorder %s319, %s321
      %p328 = scmp.eq.s32.totalorder %s38, 1
      %p329 = por %p327, %p328
      %p330 = scmp.ne.s32.totalorder %s321, %s322
      %p331 = scmp.eq.s32.totalorder %s38, 0
      %p332 = por %p330, %p331
      %p333 = scmp.ne.s32.totalorder %s321, %s322
      %p334 = scmp.eq.s32.totalorder %s39, 1
      %p335 = por %p333, %p334
      %p337 = scmp.ne.s32.totalorder %s322, %s336
      %p338 = scmp.eq.s32.totalorder %s39, 0
      %p339 = por %p337, %p338
      %s341 = sadd.s32 %s340, 1
      %p344 = scmp.eq.s32.totalorder %s33, 1
      %p345 = scmp.ne.s32.totalorder %s340, %s342
      %p346 = scmp.eq.s32.totalorder %s33, 0
      %p347 = por %p345, %p346
      %p348 = scmp.ne.s32.totalorder %s340, %s342
      %p349 = scmp.eq.s32.totalorder %s38, 1
      %p350 = por %p348, %p349
      %p351 = scmp.ne.s32.totalorder %s342, %s343
      %p352 = scmp.eq.s32.totalorder %s38, 0
      %p353 = por %p351, %p352
      %p354 = scmp.ne.s32.totalorder %s342, %s343
      %p355 = scmp.eq.s32.totalorder %s39, 1
      %p356 = por %p354, %p355
      %p358 = scmp.ne.s32.totalorder %s343, %s357
      %p359 = scmp.eq.s32.totalorder %s39, 0
      %p360 = por %p358, %p359
      %s362 = sadd.s32 %s361, 1
      %p365 = scmp.eq.s32.totalorder %s33, 1
      %p366 = scmp.ne.s32.totalorder %s361, %s363
      %p367 = scmp.eq.s32.totalorder %s33, 0
      %p368 = por %p366, %p367
      %p369 = scmp.ne.s32.totalorder %s361, %s363
      %p370 = scmp.eq.s32.totalorder %s38, 1
      %p371 = por %p369, %p370
      %p372 = scmp.ne.s32.totalorder %s363, %s364
      %p373 = scmp.eq.s32.totalorder %s38, 0
      %p374 = por %p372, %p373
      %p375 = scmp.ne.s32.totalorder %s363, %s364
      %p376 = scmp.eq.s32.totalorder %s39, 1
      %p377 = por %p375, %p376
      %p379 = scmp.ne.s32.totalorder %s364, %s378
      %p380 = scmp.eq.s32.totalorder %s39, 0
      %p381 = por %p379, %p380
      %s383 = sadd.s32 %s382, 1
      %p386 = scmp.eq.s32.totalorder %s33, 1
      %p387 = scmp.ne.s32.totalorder %s382, %s384
      %p388 = scmp.eq.s32.totalorder %s33, 0
      %p389 = por %p387, %p388
      %p390 = scmp.ne.s32.totalorder %s382, %s384
      %p391 = scmp.eq.s32.totalorder %s38, 1
      %p392 = por %p390, %p391
      %p393 = scmp.ne.s32.totalorder %s384, %s385
      %p394 = scmp.eq.s32.totalorder %s38, 0
      %p395 = por %p393, %p394
      %p396 = scmp.ne.s32.totalorder %s384, %s385
      %p397 = scmp.eq.s32.totalorder %s39, 1
      %p398 = por %p396, %p397
      %p400 = scmp.ne.s32.totalorder %s385, %s399
      %p401 = scmp.eq.s32.totalorder %s39, 0
      %p402 = por %p400, %p401
      %s404 = sadd.s32 %s403, 1
      %p407 = scmp.eq.s32.totalorder %s33, 1
      %p408 = scmp.ne.s32.totalorder %s403, %s405
      %p409 = scmp.eq.s32.totalorder %s33, 0
      %p410 = por %p408, %p409
      %p411 = scmp.ne.s32.totalorder %s403, %s405
      %p412 = scmp.eq.s32.totalorder %s38, 1
      %p413 = por %p411, %p412
      %p414 = scmp.ne.s32.totalorder %s405, %s406
      %p415 = scmp.eq.s32.totalorder %s38, 0
      %p416 = por %p414, %p415
      %p417 = scmp.ne.s32.totalorder %s405, %s406
      %p418 = scmp.eq.s32.totalorder %s39, 1
      %p419 = por %p417, %p418
      %p421 = scmp.ne.s32.totalorder %s406, %s420
      %p422 = scmp.eq.s32.totalorder %s39, 0
      %p423 = por %p421, %p422
      %s424 = ssub.s32 %s33, %s40
      %p425 = scmp.eq.s32.totalorder %s424, 0
      %s427 = sadd.s32 %s426, 1
      %s428 = scalar_select %p425, %s426, %s427
      %p431 = pneg %p425
      %p432 = scmp.eq.s32.totalorder %s33, 1
      %p433 = por %p431, %p432
      %p434 = scmp.ne.s32.totalorder %s426, %s429
      %p435 = scmp.eq.s32.totalorder %s33, 0
      %p436 = por %p434, %p435
      %p437 = scmp.ne.s32.totalorder %s426, %s429
      %p438 = scmp.eq.s32.totalorder %s38, 1
      %p439 = por %p437, %p438
      %p440 = scmp.ne.s32.totalorder %s429, %s430
      %p441 = scmp.eq.s32.totalorder %s38, 0
      %p442 = por %p440, %p441
      %p443 = scmp.ne.s32.totalorder %s429, %s430
      %p444 = scmp.eq.s32.totalorder %s39, 1
      %p445 = por %p443, %p444
      %p447 = scmp.ne.s32.totalorder %s430, %s446
      %p448 = scmp.eq.s32.totalorder %s39, 0
      %p449 = por %p447, %p448
      %s450 = ssub.s32 %s33, %s40
      %p451 = scmp.eq.s32.totalorder %s450, 0
      %s453 = sadd.s32 %s452, 1
      %s454 = scalar_select %p451, %s452, %s453
      %p457 = pneg %p451
      %p458 = scmp.eq.s32.totalorder %s33, 1
      %p459 = por %p457, %p458
      %p460 = scmp.ne.s32.totalorder %s452, %s455
      %p461 = scmp.eq.s32.totalorder %s33, 0
      %p462 = por %p460, %p461
      %p463 = scmp.ne.s32.totalorder %s452, %s455
      %p464 = scmp.eq.s32.totalorder %s38, 1
      %p465 = por %p463, %p464
      %p466 = scmp.ne.s32.totalorder %s455, %s456
      %p467 = scmp.eq.s32.totalorder %s38, 0
      %p468 = por %p466, %p467
      %p469 = scmp.ne.s32.totalorder %s455, %s456
      %p470 = scmp.eq.s32.totalorder %s39, 1
      %p471 = por %p469, %p470
      %p473 = scmp.ne.s32.totalorder %s456, %s472
      %p474 = scmp.eq.s32.totalorder %s39, 0
      %p475 = por %p473, %p474
      %s476 = ssub.s32 %s33, %s40
      %p477 = scmp.eq.s32.totalorder %s476, 0
      %s479 = sadd.s32 %s478, 1
      %s480 = scalar_select %p477, %s478, %s479
      %p483 = pneg %p477
      %p484 = scmp.eq.s32.totalorder %s33, 1
      %p485 = por %p483, %p484
      %p486 = scmp.ne.s32.totalorder %s478, %s481
      %p487 = scmp.eq.s32.totalorder %s33, 0
      %p488 = por %p486, %p487
      %p489 = scmp.ne.s32.totalorder %s478, %s481
      %p490 = scmp.eq.s32.totalorder %s38, 1
      %p491 = por %p489, %p490
      %p492 = scmp.ne.s32.totalorder %s481, %s482
      %p493 = scmp.eq.s32.totalorder %s38, 0
      %p494 = por %p492, %p493
      %p495 = scmp.ne.s32.totalorder %s481, %s482
      %p496 = scmp.eq.s32.totalorder %s39, 1
      %p497 = por %p495, %p496
      %p499 = scmp.ne.s32.totalorder %s482, %s498
      %p500 = scmp.eq.s32.totalorder %s39, 0
      %p501 = por %p499, %p500
      %p502 = scmp.le.s32.totalorder 1, %s33
      %p503 = scmp.lt.s32.totalorder %s33, 3
      %p504 = pnand %p502, %p503
      %p505 = pneg %p504
      // Predicated region
      $region9: #{_lambda_.1} parent=5 // pred_check
        _
      $region10: #{_lambda_.1} parent=5 // pred_check_branch
        %507 = sbr.rel (%p504) target = $region12
      $region11: #{_lambda_.1} parent=5 // pred_region
        %s508 = ssub.s32 %s33, 1
        // Predicated region
        $region13: #{_lambda_.1} parent=11 // pred_check
          %p509 = pneg %p80
        $region14: #{_lambda_.1} parent=11 // pred_check_branch
          %511 = sbr.rel (%p509) target = $region16
        $region15: #{_lambda_.1} parent=11 // pred_region
          _
        $region16: #{_lambda_.1} parent=11 // pred_fallthru
          _
        // Predicated region
        $region17: #{_lambda_.1} parent=11 // pred_check
          %p512 = pneg %p101
        $region18: #{_lambda_.1} parent=11 // pred_check_branch
          %514 = sbr.rel (%p512) target = $region20
        $region19: #{_lambda_.1} parent=11 // pred_region
          _
        $region20: #{_lambda_.1} parent=11 // pred_fallthru
          _
        // Predicated region
        $region21: #{_lambda_.1} parent=11 // pred_check
          %p515 = pneg %p122
        $region22: #{_lambda_.1} parent=11 // pred_check_branch
          %517 = sbr.rel (%p515) target = $region24
        $region23: #{_lambda_.1} parent=11 // pred_region
          _
        $region24: #{_lambda_.1} parent=11 // pred_fallthru
          _
        // Predicated region
        $region25: #{_lambda_.1} parent=11 // pred_check
          %p518 = pneg %p143
        $region26: #{_lambda_.1} parent=11 // pred_check_branch
          %520 = sbr.rel (%p518) target = $region28
        $region27: #{_lambda_.1} parent=11 // pred_region
          _
        $region28: #{_lambda_.1} parent=11 // pred_fallthru
          _
        // Predicated region
        $region29: #{_lambda_.1} parent=11 // pred_check
          %p521 = pneg %p164
        $region30: #{_lambda_.1} parent=11 // pred_check_branch
          %523 = sbr.rel (%p521) target = $region32
        $region31: #{_lambda_.1} parent=11 // pred_region
          _
        $region32: #{_lambda_.1} parent=11 // pred_fallthru
          _
        // Predicated region
        $region33: #{_lambda_.1} parent=11 // pred_check
          %p524 = pneg %p185
        $region34: #{_lambda_.1} parent=11 // pred_check_branch
          %526 = sbr.rel (%p524) target = $region36
        $region35: #{_lambda_.1} parent=11 // pred_region
          _
        $region36: #{_lambda_.1} parent=11 // pred_fallthru
          _
        // Predicated region
        $region37: #{_lambda_.1} parent=11 // pred_check
          %p527 = pneg %p206
        $region38: #{_lambda_.1} parent=11 // pred_check_branch
          %529 = sbr.rel (%p527) target = $region40
        $region39: #{_lambda_.1} parent=11 // pred_region
          _
        $region40: #{_lambda_.1} parent=11 // pred_fallthru
          _
        // Predicated region
        $region41: #{_lambda_.1} parent=11 // pred_check
          %p530 = pneg %p227
        $region42: #{_lambda_.1} parent=11 // pred_check_branch
          %532 = sbr.rel (%p530) target = $region44
        $region43: #{_lambda_.1} parent=11 // pred_region
          _
        $region44: #{_lambda_.1} parent=11 // pred_fallthru
          _
        // Predicated region
        $region45: #{_lambda_.1} parent=11 // pred_check
          %p533 = pneg %p248
        $region46: #{_lambda_.1} parent=11 // pred_check_branch
          %535 = sbr.rel (%p533) target = $region48
        $region47: #{_lambda_.1} parent=11 // pred_region
          _
        $region48: #{_lambda_.1} parent=11 // pred_fallthru
          _
        // Predicated region
        $region49: #{_lambda_.1} parent=11 // pred_check
          %p536 = pneg %p269
        $region50: #{_lambda_.1} parent=11 // pred_check_branch
          %538 = sbr.rel (%p536) target = $region52
        $region51: #{_lambda_.1} parent=11 // pred_region
          _
        $region52: #{_lambda_.1} parent=11 // pred_fallthru
          _
        // Predicated region
        $region53: #{_lambda_.1} parent=11 // pred_check
          %p539 = pneg %p290
        $region54: #{_lambda_.1} parent=11 // pred_check_branch
          %541 = sbr.rel (%p539) target = $region56
        $region55: #{_lambda_.1} parent=11 // pred_region
          _
        $region56: #{_lambda_.1} parent=11 // pred_fallthru
          _
        // Predicated region
        $region57: #{_lambda_.1} parent=11 // pred_check
          %p542 = pneg %p311
        $region58: #{_lambda_.1} parent=11 // pred_check_branch
          %544 = sbr.rel (%p542) target = $region60
        $region59: #{_lambda_.1} parent=11 // pred_region
          _
        $region60: #{_lambda_.1} parent=11 // pred_fallthru
          _
        // Predicated region
        $region61: #{_lambda_.1} parent=11 // pred_check
          %p545 = pneg %p332
        $region62: #{_lambda_.1} parent=11 // pred_check_branch
          %547 = sbr.rel (%p545) target = $region64
        $region63: #{_lambda_.1} parent=11 // pred_region
          _
        $region64: #{_lambda_.1} parent=11 // pred_fallthru
          _
        // Predicated region
        $region65: #{_lambda_.1} parent=11 // pred_check
          %p548 = pneg %p353
        $region66: #{_lambda_.1} parent=11 // pred_check_branch
          %550 = sbr.rel (%p548) target = $region68
        $region67: #{_lambda_.1} parent=11 // pred_region
          _
        $region68: #{_lambda_.1} parent=11 // pred_fallthru
          _
        // Predicated region
        $region69: #{_lambda_.1} parent=11 // pred_check
          %p551 = pneg %p374
        $region70: #{_lambda_.1} parent=11 // pred_check_branch
          %553 = sbr.rel (%p551) target = $region72
        $region71: #{_lambda_.1} parent=11 // pred_region
          _
        $region72: #{_lambda_.1} parent=11 // pred_fallthru
          _
        // Predicated region
        $region73: #{_lambda_.1} parent=11 // pred_check
          %p554 = pneg %p395
        $region74: #{_lambda_.1} parent=11 // pred_check_branch
          %556 = sbr.rel (%p554) target = $region76
        $region75: #{_lambda_.1} parent=11 // pred_region
          _
        $region76: #{_lambda_.1} parent=11 // pred_fallthru
          _
        // Predicated region
        $region77: #{_lambda_.1} parent=11 // pred_check
          %p557 = pneg %p416
        $region78: #{_lambda_.1} parent=11 // pred_check_branch
          %559 = sbr.rel (%p557) target = $region80
        $region79: #{_lambda_.1} parent=11 // pred_region
          _
        $region80: #{_lambda_.1} parent=11 // pred_fallthru
          _
      $region12: #{_lambda_.1} parent=5 // pred_fallthru
        _
      %p560 = scmp.lt.s32.totalorder %s33, 2
      // Predicated region
      $region81: #{_lambda_.1} parent=5 // pred_check
        %p561 = pneg %p560
      $region82: #{_lambda_.1} parent=5 // pred_check_branch
        %563 = sbr.rel (%p561) target = $region84
      $region83: #{_lambda_.1} parent=5 // pred_region
        // Predicated region
        $region85: #{_lambda_.1} parent=83 // pred_check
          %p564 = pneg %p53
        $region86: #{_lambda_.1} parent=83 // pred_check_branch
          %566 = sbr.rel (%p564) target = $region88
        $region87: #{_lambda_.1} parent=83 // pred_region
          %p567 = scmp.lt.s32.totalorder %s33, 1
          %s568 = scalar_select %p567, %s33, 1
          %s569 = smul.addr %s568, 32
          %s570 = smul.addr %s569, 8
          %s571 = scalar_lea.vmem %s0, %s570
        $region88: #{_lambda_.1} parent=83 // pred_fallthru
          _
      $region84: #{_lambda_.1} parent=5 // pred_fallthru
        _
      %p572 = scmp.le.s32.totalorder 1, %s33
      %p573 = scmp.lt.s32.totalorder %s33, 3
      %p574 = pnand %p572, %p573
      %p575 = pneg %p574
      // Predicated region
      $region89: #{_lambda_.1} parent=5 // pred_check
        _
      $region90: #{_lambda_.1} parent=5 // pred_check_branch
        %577 = sbr.rel (%p574) target = $region92
      $region91: #{_lambda_.1} parent=5 // pred_region
        %s578 = ssub.s32 %s33, 1
        %p579 = scmp.lt.s32.totalorder %s38, 1
        %s580 = scalar_select %p579, %s38, 1
        %s581 = smul.addr %s580, 32
        %s582 = smul.addr %s581, 8
        %s583 = scalar_lea.vmem %s0, %s582
        %p584 = pneg %p59
        %p585 = pneg %p56
        %p586 = pneg %p80
        %p587 = pneg %p77
        %p588 = pneg %p101
        %p589 = pneg %p98
        %p590 = pneg %p122
        %p591 = pneg %p119
        %p592 = pneg %p143
        %p593 = pneg %p140
        %p594 = pneg %p164
        %p595 = pneg %p161
        %p596 = pneg %p185
        %p597 = pneg %p182
        %p598 = pneg %p206
        %p599 = pneg %p203
        %p600 = pneg %p227
        %p601 = pneg %p224
        %p602 = pneg %p248
        %p603 = pneg %p245
        %p604 = pneg %p269
        %p605 = pneg %p266
        %p606 = pneg %p290
        %p607 = pneg %p287
        %p608 = pneg %p311
        %p609 = pneg %p308
        %p610 = pneg %p332
        %p611 = pneg %p329
        %p612 = pneg %p353
        %p613 = pneg %p350
        %p614 = pneg %p374
        %p615 = pneg %p371
        %p616 = pneg %p395
        %p617 = pneg %p392
        %p618 = pneg %p416
        %p619 = pneg %p413
        %p620 = pneg %p442
        %p621 = pneg %p439
        %p622 = scmp.lt.s32.totalorder %s38, 1
        %s623 = scalar_select %p622, %s38, 1
        %s624 = smul.addr %s623, 8
        %s625 = smul.addr %s624, 8
        %s626 = scalar_lea.vmem %s18, %s625
        %p627 = pneg %p468
        %p628 = pneg %p465
        %s629 = sand.u32 %s455, 1
        %s630 = scalar_lea.sflag [#allocation6], %s629
        %s631 = sand.u32 %s455, 1
        %s632 = scalar_lea.vmem [#allocation5], %s631
        %p633 = pneg %p494
        %p634 = pneg %p491
        %s635 = sand.u32 %s481, 1
        %s636 = scalar_lea.sflag [#allocation8], %s635
        %s637 = sand.u32 %s481, 1
        %s638 = scalar_lea.vmem [#allocation7], %s637
        %p639 = scmp.lt.s32.totalorder %s38, 1
        %s640 = scalar_select %p639, %s38, 1
        %s641 = smul.addr %s640, 32
        %s642 = smul.addr %s641, 8
        %s643 = scalar_lea.vmem %s0, %s642
        %p644 = scmp.lt.s32.totalorder %s38, 1
        %s645 = scalar_select %p644, %s38, 1
        %s646 = smul.addr %s645, 8
        %s647 = smul.addr %s646, 8
        %s648 = scalar_lea.vmem %s18, %s647
        %vm649 = vcmask 31744
        %650 = vst.msk [vmem:[#allocation2] sm:$0xff] %vm649, 0.0
        %651 = vst.msk [vmem:[#allocation2 + $0x8] sm:$0xff] %vm649, 0.0
        %vm652 = vcmask 25600
        %653 = vst.msk [vmem:[#allocation2 + $0x10] sm:$0x3] %vm652, 0.0
        %654 = vst.msk [vmem:[#allocation2 + $0x18] sm:$0xff] %vm649, 0.0
        %655 = vst.msk [vmem:[#allocation2 + $0x20] sm:$0xff] %vm649, 0.0
        %656 = vst.msk [vmem:[#allocation2 + $0x28] sm:$0x3] %vm652, 0.0
        %657 = vst.msk [vmem:[#allocation2 + $0x30] sm:$0xff] %vm649, 0.0
        %658 = vst.msk [vmem:[#allocation2 + $0x38] sm:$0xff] %vm649, 0.0
        %659 = vst.msk [vmem:[#allocation2 + $0x40] sm:$0x3] %vm652, 0.0
        %660 = vst.msk [vmem:[#allocation2 + $0x48] sm:$0xff] %vm649, 0.0
        %661 = vst.msk [vmem:[#allocation2 + $0x50] sm:$0xff] %vm649, 0.0
        %662 = vst.msk [vmem:[#allocation2 + $0x58] sm:$0x3] %vm652, 0.0
        %663 = vst.msk [vmem:[#allocation2 + $0x60] sm:$0xff] %vm649, 0.0
        %664 = vst.msk [vmem:[#allocation2 + $0x68] sm:$0xff] %vm649, 0.0
        %665 = vst.msk [vmem:[#allocation2 + $0x70] sm:$0x3] %vm652, 0.0
        %666 = vst.msk [vmem:[#allocation2 + $0x78] sm:$0xff] %vm649, 0.0
        %667 = vst.msk [vmem:[#allocation2 + $0x80] sm:$0xff] %vm649, 0.0
        %668 = vst.msk [vmem:[#allocation2 + $0x88] sm:$0x3] %vm652, 0.0
        %669 = vst.msk [vmem:[#allocation2 + $0x90] sm:$0xff] %vm649, 0.0
        %670 = vst.msk [vmem:[#allocation2 + $0x98] sm:$0xff] %vm649, 0.0
        %671 = vst.msk [vmem:[#allocation2 + $0xa0] sm:$0x3] %vm652, 0.0
        %672 = vst.msk [vmem:[#allocation2 + $0xa8] sm:$0xff] %vm649, 0.0
        %673 = vst.msk [vmem:[#allocation2 + $0xb0] sm:$0xff] %vm649, 0.0
        %674 = vst.msk [vmem:[#allocation2 + $0xb8] sm:$0x3] %vm652, 0.0
        %675 = vst.msk [vmem:[#allocation2 + $0xc0] sm:$0xff] %vm649, 0.0
        %676 = vst.msk [vmem:[#allocation2 + $0xc8] sm:$0xff] %vm649, 0.0
        %677 = vst.msk [vmem:[#allocation2 + $0xd0] sm:$0x3] %vm652, 0.0
        %678 = vst.msk [vmem:[#allocation2 + $0xd8] sm:$0xff] %vm649, 0.0
        %679 = vst.msk [vmem:[#allocation2 + $0xe0] sm:$0xff] %vm649, 0.0
        %680 = vst.msk [vmem:[#allocation2 + $0xe8] sm:$0x3] %vm652, 0.0
        %681 = vst.msk [vmem:[#allocation2 + $0xf0] sm:$0xff] %vm649, 0.0
        %682 = vst.msk [vmem:[#allocation2 + $0xf8] sm:$0xff] %vm649, 0.0
        %683 = vst.msk [vmem:[#allocation2 + $0x100] sm:$0x3] %vm652, 0.0
        %684 = vst.msk [vmem:[#allocation2 + $0x108] sm:$0xff] %vm649, 0.0
        %685 = vst.msk [vmem:[#allocation2 + $0x110] sm:$0xff] %vm649, 0.0
        %686 = vst.msk [vmem:[#allocation2 + $0x118] sm:$0x3] %vm652, 0.0
        %687 = vst.msk [vmem:[#allocation2 + $0x120] sm:$0xff] %vm649, 0.0
        %688 = vst.msk [vmem:[#allocation2 + $0x128] sm:$0xff] %vm649, 0.0
        %689 = vst.msk [vmem:[#allocation2 + $0x130] sm:$0x3] %vm652, 0.0
        %690 = vst.msk [vmem:[#allocation2 + $0x138] sm:$0xff] %vm649, 0.0
        %691 = vst.msk [vmem:[#allocation2 + $0x140] sm:$0xff] %vm649, 0.0
        %692 = vst.msk [vmem:[#allocation2 + $0x148] sm:$0x3] %vm652, 0.0
        %693 = vst.msk [vmem:[#allocation2 + $0x150] sm:$0xff] %vm649, 0.0
        %694 = vst.msk [vmem:[#allocation2 + $0x158] sm:$0xff] %vm649, 0.0
        %695 = vst.msk [vmem:[#allocation2 + $0x160] sm:$0x3] %vm652, 0.0
        %696 = vst.msk [vmem:[#allocation2 + $0x168] sm:$0xff] %vm649, 0.0
        %697 = vst.msk [vmem:[#allocation2 + $0x170] sm:$0xff] %vm649, 0.0
        %698 = vst.msk [vmem:[#allocation2 + $0x178] sm:$0x3] %vm652, 0.0
        %699 = vst.msk [vmem:[#allocation2 + $0x180] sm:$0xff] %vm649, 0.0
        %700 = vst.msk [vmem:[#allocation2 + $0x188] sm:$0xff] %vm649, 0.0
        %701 = vst.msk [vmem:[#allocation2 + $0x190] sm:$0x3] %vm652, 0.0
        %702 = vst.msk [vmem:[#allocation2 + $0x198] sm:$0xff] %vm649, 0.0
        %703 = vst.msk [vmem:[#allocation2 + $0x1a0] sm:$0xff] %vm649, 0.0
        %704 = vst.msk [vmem:[#allocation2 + $0x1a8] sm:$0x3] %vm652, 0.0
        %vm705 = vcmask 64512
        %706 = vst.msk [vmem:[#allocation3] sm:$0xff] %vm705, 0.0
        %vm707 = vcmask 58368
        %708 = vst.msk [vmem:[#allocation3 + $0x8] sm:$0x3] %vm707, 0.0
        %709 = vst.msk [vmem:[#allocation3 + $0x10] sm:$0xff] %vm705, 0.0
        %710 = vst.msk [vmem:[#allocation3 + $0x18] sm:$0x3] %vm707, 0.0
        %711 = vst.msk [vmem:[#allocation3 + $0x20] sm:$0xff] %vm705, 0.0
        %712 = vst.msk [vmem:[#allocation3 + $0x28] sm:$0x3] %vm707, 0.0
        %713 = vst.msk [vmem:[#allocation3 + $0x30] sm:$0xff] %vm705, 0.0
        %714 = vst.msk [vmem:[#allocation3 + $0x38] sm:$0x3] %vm707, 0.0
        %715 = vst.msk [vmem:[#allocation3 + $0x40] sm:$0xff] %vm705, 0.0
        %716 = vst.msk [vmem:[#allocation3 + $0x48] sm:$0x3] %vm707, 0.0
        %717 = vst.msk [vmem:[#allocation3 + $0x50] sm:$0xff] %vm705, 0.0
        %718 = vst.msk [vmem:[#allocation3 + $0x58] sm:$0x3] %vm707, 0.0
        %719 = vst.msk [vmem:[#allocation3 + $0x60] sm:$0xff] %vm705, 0.0
        %720 = vst.msk [vmem:[#allocation3 + $0x68] sm:$0x3] %vm707, 0.0
        %721 = vst.msk [vmem:[#allocation3 + $0x70] sm:$0xff] %vm705, 0.0
        %722 = vst.msk [vmem:[#allocation3 + $0x78] sm:$0x3] %vm707, 0.0
        %723 = vst.msk [vmem:[#allocation3 + $0x80] sm:$0xff] %vm705, 0.0
        %724 = vst.msk [vmem:[#allocation3 + $0x88] sm:$0x3] %vm707, 0.0
        %725 = vst.msk [vmem:[#allocation3 + $0x90] sm:$0xff] %vm705, 0.0
        %726 = vst.msk [vmem:[#allocation3 + $0x98] sm:$0x3] %vm707, 0.0
        %v727 = vld [vmem:[%s643] sm:$0xff]
        %v728 = vld [vmem:[%s643 + $0x8] sm:$0xff]
        %v729 = vld [vmem:[%s643 + $0x10] sm:$0xff]
        %v730 = vld [vmem:[%s643 + $0x18] sm:$0xff]
        %v731 = vld [vmem:[%s643 + $0x20] sm:$0xff]
        %v732 = vld [vmem:[%s643 + $0x28] sm:$0xff]
        %v733 = vld [vmem:[%s643 + $0x30] sm:$0xff]
        %v734 = vld [vmem:[%s643 + $0x38] sm:$0xff]
        %v735 = vld [vmem:[%s643 + $0x40] sm:$0xff]
        %v736 = vld [vmem:[%s643 + $0x48] sm:$0xff]
        %v737 = vld [vmem:[%s643 + $0x50] sm:$0xff]
        %v738 = vld [vmem:[%s643 + $0x58] sm:$0xff]
        %v739 = vld [vmem:[%s643 + $0x60] sm:$0xff]
        %v740 = vld [vmem:[%s643 + $0x68] sm:$0xff]
        %v741 = vld [vmem:[%s643 + $0x70] sm:$0xff]
        %v742 = vld [vmem:[%s643 + $0x78] sm:$0xff]
        %v743 = vld [vmem:[%s643 + $0x80] sm:$0xff]
        %v744 = vld [vmem:[%s643 + $0x88] sm:$0xff]
        %v745 = vld [vmem:[%s643 + $0x90] sm:$0xff]
        %v746 = vld [vmem:[%s643 + $0x98] sm:$0xff]
        %v747 = vld [vmem:[%s643 + $0xa0] sm:$0xff]
        %v748 = vld [vmem:[%s643 + $0xa8] sm:$0xff]
        %v749 = vld [vmem:[%s643 + $0xb0] sm:$0xff]
        %v750 = vld [vmem:[%s643 + $0xb8] sm:$0xff]
        %v751 = vld [vmem:[%s643 + $0xc0] sm:$0xff]
        %v752 = vld [vmem:[%s643 + $0xc8] sm:$0xff]
        %v753 = vld [vmem:[%s643 + $0xd0] sm:$0xff]
        %v754 = vld [vmem:[%s643 + $0xd8] sm:$0xff]
        %v755 = vld [vmem:[%s643 + $0xe0] sm:$0xff]
        %v756 = vld [vmem:[%s643 + $0xe8] sm:$0xff]
        %v757 = vld [vmem:[%s643 + $0xf0] sm:$0xff]
        %v758 = vld [vmem:[%s643 + $0xf8] sm:$0xff]
        %s759 = scalar_lea.vmem [#allocation2], 24
        %760 = vst.msk [vmem:[%s759 + $0x1] sm:$0xff] %vm649, %v727
        %761 = vst.msk [vmem:[%s759 + $0x9] sm:$0xff] %vm649, %v728
        %762 = vst.msk [vmem:[%s759 + $0x19] sm:$0xff] %vm649, %v729
        %763 = vst.msk [vmem:[%s759 + $0x21] sm:$0xff] %vm649, %v730
        %764 = vst.msk [vmem:[%s759 + $0x31] sm:$0xff] %vm649, %v731
        %765 = vst.msk [vmem:[%s759 + $0x39] sm:$0xff] %vm649, %v732
        %766 = vst.msk [vmem:[%s759 + $0x49] sm:$0xff] %vm649, %v733
        %767 = vst.msk [vmem:[%s759 + $0x51] sm:$0xff] %vm649, %v734
        %768 = vst.msk [vmem:[%s759 + $0x61] sm:$0xff] %vm649, %v735
        %769 = vst.msk [vmem:[%s759 + $0x69] sm:$0xff] %vm649, %v736
        %770 = vst.msk [vmem:[%s759 + $0x79] sm:$0xff] %vm649, %v737
        %771 = vst.msk [vmem:[%s759 + $0x81] sm:$0xff] %vm649, %v738
        %772 = vst.msk [vmem:[%s759 + $0x91] sm:$0xff] %vm649, %v739
        %773 = vst.msk [vmem:[%s759 + $0x99] sm:$0xff] %vm649, %v740
        %774 = vst.msk [vmem:[%s759 + $0xa9] sm:$0xff] %vm649, %v741
        %775 = vst.msk [vmem:[%s759 + $0xb1] sm:$0xff] %vm649, %v742
        %776 = vst.msk [vmem:[%s759 + $0xc1] sm:$0xff] %vm649, %v743
        %777 = vst.msk [vmem:[%s759 + $0xc9] sm:$0xff] %vm649, %v744
        %778 = vst.msk [vmem:[%s759 + $0xd9] sm:$0xff] %vm649, %v745
        %779 = vst.msk [vmem:[%s759 + $0xe1] sm:$0xff] %vm649, %v746
        %780 = vst.msk [vmem:[%s759 + $0xf1] sm:$0xff] %vm649, %v747
        %781 = vst.msk [vmem:[%s759 + $0xf9] sm:$0xff] %vm649, %v748
        %782 = vst.msk [vmem:[%s759 + $0x109] sm:$0xff] %vm649, %v749
        %783 = vst.msk [vmem:[%s759 + $0x111] sm:$0xff] %vm649, %v750
        %784 = vst.msk [vmem:[%s759 + $0x121] sm:$0xff] %vm649, %v751
        %785 = vst.msk [vmem:[%s759 + $0x129] sm:$0xff] %vm649, %v752
        %786 = vst.msk [vmem:[%s759 + $0x139] sm:$0xff] %vm649, %v753
        %787 = vst.msk [vmem:[%s759 + $0x141] sm:$0xff] %vm649, %v754
        %788 = vst.msk [vmem:[%s759 + $0x151] sm:$0xff] %vm649, %v755
        %789 = vst.msk [vmem:[%s759 + $0x159] sm:$0xff] %vm649, %v756
        %790 = vst.msk [vmem:[%s759 + $0x169] sm:$0xff] %vm649, %v757
        %791 = vst.msk [vmem:[%s759 + $0x171] sm:$0xff] %vm649, %v758
        %v792 = vld [vmem:[#allocation2] ss:$2 sm:$0xff]
        %s793 = scalar_lea.vmem [#allocation2], 48
        %v794 = vld [vmem:[%s793] ss:$2 sm:$0xff]
        %s795 = scalar_lea.vmem [#allocation2], 96
        %v796 = vld [vmem:[%s795] ss:$2 sm:$0xff]
        %s797 = scalar_lea.vmem [#allocation2], 144
        %v798 = vld [vmem:[%s797] ss:$2 sm:$0xff]
        %s799 = scalar_lea.vmem [#allocation2], 192
        %v800 = vld [vmem:[%s799] ss:$2 sm:$0xff]
        %s801 = scalar_lea.vmem [#allocation2], 240
        %v802 = vld [vmem:[%s801] ss:$2 sm:$0xff]
        %s803 = scalar_lea.vmem [#allocation2], 288
        %v804 = vld [vmem:[%s803] ss:$2 sm:$0xff]
        %s805 = scalar_lea.vmem [#allocation2], 336
        %v806 = vld [vmem:[%s805] ss:$2 sm:$0xff]
        %807 = vst.msk [vmem:[#allocation4] sm:$0xff] %vm649, %v792
        %808 = vst.msk [vmem:[#allocation4 + $0x8] sm:$0xff] %vm649, %v794
        %809 = vst.msk [vmem:[#allocation4 + $0x10] sm:$0xff] %vm649, %v796
        %810 = vst.msk [vmem:[#allocation4 + $0x18] sm:$0xff] %vm649, %v798
        %811 = vst.msk [vmem:[#allocation4 + $0x20] sm:$0xff] %vm649, %v800
        %812 = vst.msk [vmem:[#allocation4 + $0x28] sm:$0xff] %vm649, %v802
        %813 = vst.msk [vmem:[#allocation4 + $0x30] sm:$0xff] %vm649, %v804
        %814 = vst.msk [vmem:[#allocation4 + $0x38] sm:$0xff] %vm649, %v806
        %s815 = scalar_lea.vmem [#allocation2], 1
        %v816 = vld [vmem:[%s815] ss:$2 sm:$0xff]
        %s817 = scalar_lea.vmem [#allocation2], 49
        %v818 = vld [vmem:[%s817] ss:$2 sm:$0xff]
        %s819 = scalar_lea.vmem [#allocation2], 97
        %v820 = vld [vmem:[%s819] ss:$2 sm:$0xff]
        %s821 = scalar_lea.vmem [#allocation2], 145
        %v822 = vld [vmem:[%s821] ss:$2 sm:$0xff]
        %s823 = scalar_lea.vmem [#allocation2], 193
        %v824 = vld [vmem:[%s823] ss:$2 sm:$0xff]
        %s825 = scalar_lea.vmem [#allocation2], 241
        %v826 = vld [vmem:[%s825] ss:$2 sm:$0xff]
        %s827 = scalar_lea.vmem [#allocation2], 289
        %v828 = vld [vmem:[%s827] ss:$2 sm:$0xff]
        %s829 = scalar_lea.vmem [#allocation2], 337
        %v830 = vld [vmem:[%s829] ss:$2 sm:$0xff]
        %839 = vrot.lane.b32.xlu0 %v816, 4
        %v840 = vpop.permute.xlu0 %839
        %841 = vrot.lane.b32.xlu0 %v818, 4
        %v842 = vpop.permute.xlu0 %841
        %843 = vrot.lane.b32.xlu0 %v820, 4
        %v844 = vpop.permute.xlu0 %843
        %845 = vrot.lane.b32.xlu0 %v822, 4
        %v846 = vpop.permute.xlu0 %845
        %847 = vrot.lane.b32.xlu0 %v824, 4
        %v848 = vpop.permute.xlu0 %847
        %849 = vrot.lane.b32.xlu0 %v826, 4
        %v850 = vpop.permute.xlu0 %849
        %851 = vrot.lane.b32.xlu0 %v828, 4
        %v852 = vpop.permute.xlu0 %851
        %853 = vrot.lane.b32.xlu0 %v830, 4
        %v854 = vpop.permute.xlu0 %853
        %vm863 = vcmask 64544
        %864 = vst.msk [vmem:[#allocation4] sm:$0xff] %vm863, %v840
        %865 = vst.msk [vmem:[#allocation4 + $0x8] sm:$0xff] %vm863, %v842
        %866 = vst.msk [vmem:[#allocation4 + $0x10] sm:$0xff] %vm863, %v844
        %867 = vst.msk [vmem:[#allocation4 + $0x18] sm:$0xff] %vm863, %v846
        %868 = vst.msk [vmem:[#allocation4 + $0x20] sm:$0xff] %vm863, %v848
        %869 = vst.msk [vmem:[#allocation4 + $0x28] sm:$0xff] %vm863, %v850
        %870 = vst.msk [vmem:[#allocation4 + $0x30] sm:$0xff] %vm863, %v852
        %871 = vst.msk [vmem:[#allocation4 + $0x38] sm:$0xff] %vm863, %v854
        %s872 = scalar_lea.vmem [#allocation2], 2
        %v873 = vld [vmem:[%s872] ss:$2 sm:$0xff]
        %s874 = scalar_lea.vmem [#allocation2], 50
        %v875 = vld [vmem:[%s874] ss:$2 sm:$0xff]
        %s876 = scalar_lea.vmem [#allocation2], 98
        %v877 = vld [vmem:[%s876] ss:$2 sm:$0xff]
        %s878 = scalar_lea.vmem [#allocation2], 146
        %v879 = vld [vmem:[%s878] ss:$2 sm:$0xff]
        %s880 = scalar_lea.vmem [#allocation2], 194
        %v881 = vld [vmem:[%s880] ss:$2 sm:$0xff]
        %s882 = scalar_lea.vmem [#allocation2], 242
        %v883 = vld [vmem:[%s882] ss:$2 sm:$0xff]
        %s884 = scalar_lea.vmem [#allocation2], 290
        %v885 = vld [vmem:[%s884] ss:$2 sm:$0xff]
        %s886 = scalar_lea.vmem [#allocation2], 338
        %v887 = vld [vmem:[%s886] ss:$2 sm:$0xff]
        %896 = vrot.lane.b32.xlu0 %v873, 8
        %v897 = vpop.permute.xlu0 %896
        %898 = vrot.lane.b32.xlu0 %v875, 8
        %v899 = vpop.permute.xlu0 %898
        %900 = vrot.lane.b32.xlu0 %v877, 8
        %v901 = vpop.permute.xlu0 %900
        %902 = vrot.lane.b32.xlu0 %v879, 8
        %v903 = vpop.permute.xlu0 %902
        %904 = vrot.lane.b32.xlu0 %v881, 8
        %v905 = vpop.permute.xlu0 %904
        %906 = vrot.lane.b32.xlu0 %v883, 8
        %v907 = vpop.permute.xlu0 %906
        %908 = vrot.lane.b32.xlu0 %v885, 8
        %v909 = vpop.permute.xlu0 %908
        %910 = vrot.lane.b32.xlu0 %v887, 8
        %v911 = vpop.permute.xlu0 %910
        %vm920 = vcmask 97344
        %921 = vst.msk [vmem:[#allocation4] sm:$0xff] %vm920, %v897
        %922 = vst.msk [vmem:[#allocation4 + $0x8] sm:$0xff] %vm920, %v899
        %923 = vst.msk [vmem:[#allocation4 + $0x10] sm:$0xff] %vm920, %v901
        %924 = vst.msk [vmem:[#allocation4 + $0x18] sm:$0xff] %vm920, %v903
        %925 = vst.msk [vmem:[#allocation4 + $0x20] sm:$0xff] %vm920, %v905
        %926 = vst.msk [vmem:[#allocation4 + $0x28] sm:$0xff] %vm920, %v907
        %927 = vst.msk [vmem:[#allocation4 + $0x30] sm:$0xff] %vm920, %v909
        %928 = vst.msk [vmem:[#allocation4 + $0x38] sm:$0xff] %vm920, %v911
        %v929 = vld [vmem:[%s759] ss:$2 sm:$0xff]
        %s930 = scalar_lea.vmem %s759, 48 [#allocation2]
        %v931 = vld [vmem:[%s930] ss:$2 sm:$0xff]
        %s932 = scalar_lea.vmem %s759, 96 [#allocation2]
        %v933 = vld [vmem:[%s932] ss:$2 sm:$0xff]
        %s934 = scalar_lea.vmem %s759, 144 [#allocation2]
        %v935 = vld [vmem:[%s934] ss:$2 sm:$0xff]
        %s936 = scalar_lea.vmem %s759, 192 [#allocation2]
        %v937 = vld [vmem:[%s936] ss:$2 sm:$0xff]
        %s938 = scalar_lea.vmem %s759, 240 [#allocation2]
        %v939 = vld [vmem:[%s938] ss:$2 sm:$0xff]
        %s940 = scalar_lea.vmem %s759, 288 [#allocation2]
        %v941 = vld [vmem:[%s940] ss:$2 sm:$0xff]
        %s942 = scalar_lea.vmem %s759, 336 [#allocation2]
        %v943 = vld [vmem:[%s942] ss:$2 sm:$0xff]
        %952 = vrot.lane.b32.xlu0 %v929, 12
        %v953 = vpop.permute.xlu0 %952
        %954 = vrot.lane.b32.xlu0 %v931, 12
        %v955 = vpop.permute.xlu0 %954
        %956 = vrot.lane.b32.xlu0 %v933, 12
        %v957 = vpop.permute.xlu0 %956
        %958 = vrot.lane.b32.xlu0 %v935, 12
        %v959 = vpop.permute.xlu0 %958
        %960 = vrot.lane.b32.xlu0 %v937, 12
        %v961 = vpop.permute.xlu0 %960
        %962 = vrot.lane.b32.xlu0 %v939, 12
        %v963 = vpop.permute.xlu0 %962
        %964 = vrot.lane.b32.xlu0 %v941, 12
        %v965 = vpop.permute.xlu0 %964
        %966 = vrot.lane.b32.xlu0 %v943, 12
        %v967 = vpop.permute.xlu0 %966
        %vm976 = vcmask 130144
        %977 = vst.msk [vmem:[#allocation4] sm:$0xff] %vm976, %v953
        %978 = vst.msk [vmem:[#allocation4 + $0x8] sm:$0xff] %vm976, %v955
        %979 = vst.msk [vmem:[#allocation4 + $0x10] sm:$0xff] %vm976, %v957
        %980 = vst.msk [vmem:[#allocation4 + $0x18] sm:$0xff] %vm976, %v959
        %981 = vst.msk [vmem:[#allocation4 + $0x20] sm:$0xff] %vm976, %v961
        %982 = vst.msk [vmem:[#allocation4 + $0x28] sm:$0xff] %vm976, %v963
        %983 = vst.msk [vmem:[#allocation4 + $0x30] sm:$0xff] %vm976, %v965
        %984 = vst.msk [vmem:[#allocation4 + $0x38] sm:$0xff] %vm976, %v967
        %s985 = scalar_lea.vmem %s759, 1 [#allocation2]
        %v986 = vld [vmem:[%s985] ss:$2 sm:$0xff]
        %s987 = scalar_lea.vmem %s759, 49 [#allocation2]
        %v988 = vld [vmem:[%s987] ss:$2 sm:$0xff]
        %s989 = scalar_lea.vmem %s759, 97 [#allocation2]
        %v990 = vld [vmem:[%s989] ss:$2 sm:$0xff]
        %s991 = scalar_lea.vmem %s759, 145 [#allocation2]
        %v992 = vld [vmem:[%s991] ss:$2 sm:$0xff]
        %s993 = scalar_lea.vmem %s759, 193 [#allocation2]
        %v994 = vld [vmem:[%s993] ss:$2 sm:$0xff]
        %s995 = scalar_lea.vmem %s759, 241 [#allocation2]
        %v996 = vld [vmem:[%s995] ss:$2 sm:$0xff]
        %s997 = scalar_lea.vmem %s759, 289 [#allocation2]
        %v998 = vld [vmem:[%s997] ss:$2 sm:$0xff]
        %s999 = scalar_lea.vmem %s759, 337 [#allocation2]
        %v1000 = vld [vmem:[%s999] ss:$2 sm:$0xff]
        %1009 = vrot.lane.b32.xlu0 %v986, 16
        %v1010 = vpop.permute.xlu0 %1009
        %1011 = vrot.lane.b32.xlu0 %v988, 16
        %v1012 = vpop.permute.xlu0 %1011
        %1013 = vrot.lane.b32.xlu0 %v990, 16
        %v1014 = vpop.permute.xlu0 %1013
        %1015 = vrot.lane.b32.xlu0 %v992, 16
        %v1016 = vpop.permute.xlu0 %1015
        %1017 = vrot.lane.b32.xlu0 %v994, 16
        %v1018 = vpop.permute.xlu0 %1017
        %1019 = vrot.lane.b32.xlu0 %v996, 16
        %v1020 = vpop.permute.xlu0 %1019
        %1021 = vrot.lane.b32.xlu0 %v998, 16
        %v1022 = vpop.permute.xlu0 %1021
        %1023 = vrot.lane.b32.xlu0 %v1000, 16
        %v1024 = vpop.permute.xlu0 %1023
        %vm1033 = vcmask 162944
        %1034 = vst.msk [vmem:[#allocation4] sm:$0xff] %vm1033, %v1010
        %1035 = vst.msk [vmem:[#allocation4 + $0x8] sm:$0xff] %vm1033, %v1012
        %1036 = vst.msk [vmem:[#allocation4 + $0x10] sm:$0xff] %vm1033, %v1014
        %1037 = vst.msk [vmem:[#allocation4 + $0x18] sm:$0xff] %vm1033, %v1016
        %1038 = vst.msk [vmem:[#allocation4 + $0x20] sm:$0xff] %vm1033, %v1018
        %1039 = vst.msk [vmem:[#allocation4 + $0x28] sm:$0xff] %vm1033, %v1020
        %1040 = vst.msk [vmem:[#allocation4 + $0x30] sm:$0xff] %vm1033, %v1022
        %1041 = vst.msk [vmem:[#allocation4 + $0x38] sm:$0xff] %vm1033, %v1024
        %s1042 = scalar_lea.vmem %s759, 2 [#allocation2]
        %v1043 = vld [vmem:[%s1042] ss:$2 sm:$0xff]
        %s1044 = scalar_lea.vmem %s759, 50 [#allocation2]
        %v1045 = vld [vmem:[%s1044] ss:$2 sm:$0xff]
        %s1046 = scalar_lea.vmem %s759, 98 [#allocation2]
        %v1047 = vld [vmem:[%s1046] ss:$2 sm:$0xff]
        %s1048 = scalar_lea.vmem %s759, 146 [#allocation2]
        %v1049 = vld [vmem:[%s1048] ss:$2 sm:$0xff]
        %s1050 = scalar_lea.vmem %s759, 194 [#allocation2]
        %v1051 = vld [vmem:[%s1050] ss:$2 sm:$0xff]
        %s1052 = scalar_lea.vmem %s759, 242 [#allocation2]
        %v1053 = vld [vmem:[%s1052] ss:$2 sm:$0xff]
        %s1054 = scalar_lea.vmem %s759, 290 [#allocation2]
        %v1055 = vld [vmem:[%s1054] ss:$2 sm:$0xff]
        %s1056 = scalar_lea.vmem %s759, 338 [#allocation2]
        %v1057 = vld [vmem:[%s1056] ss:$2 sm:$0xff]
        %1066 = vrot.lane.b32.xlu0 %v1043, 20
        %v1067 = vpop.permute.xlu0 %1066
        %1068 = vrot.lane.b32.xlu0 %v1045, 20
        %v1069 = vpop.permute.xlu0 %1068
        %1070 = vrot.lane.b32.xlu0 %v1047, 20
        %v1071 = vpop.permute.xlu0 %1070
        %1072 = vrot.lane.b32.xlu0 %v1049, 20
        %v1073 = vpop.permute.xlu0 %1072
        %1074 = vrot.lane.b32.xlu0 %v1051, 20
        %v1075 = vpop.permute.xlu0 %1074
        %1076 = vrot.lane.b32.xlu0 %v1053, 20
        %v1077 = vpop.permute.xlu0 %1076
        %1078 = vrot.lane.b32.xlu0 %v1055, 20
        %v1079 = vpop.permute.xlu0 %1078
        %1080 = vrot.lane.b32.xlu0 %v1057, 20
        %v1081 = vpop.permute.xlu0 %1080
        %vm1090 = vcmask 195744
        %1091 = vst.msk [vmem:[#allocation4] sm:$0xff] %vm1090, %v1067
        %1092 = vst.msk [vmem:[#allocation4 + $0x8] sm:$0xff] %vm1090, %v1069
        %1093 = vst.msk [vmem:[#allocation4 + $0x10] sm:$0xff] %vm1090, %v1071
        %1094 = vst.msk [vmem:[#allocation4 + $0x18] sm:$0xff] %vm1090, %v1073
        %1095 = vst.msk [vmem:[#allocation4 + $0x20] sm:$0xff] %vm1090, %v1075
        %1096 = vst.msk [vmem:[#allocation4 + $0x28] sm:$0xff] %vm1090, %v1077
        %1097 = vst.msk [vmem:[#allocation4 + $0x30] sm:$0xff] %vm1090, %v1079
        %1098 = vst.msk [vmem:[#allocation4 + $0x38] sm:$0xff] %vm1090, %v1081
        %s1099 = scalar_lea.vmem [#allocation2], 48
        %v1100 = vld [vmem:[%s1099] ss:$2 sm:$0xff]
        %s1101 = scalar_lea.vmem %s1099, 48 [#allocation2]
        %v1102 = vld [vmem:[%s1101] ss:$2 sm:$0xff]
        %s1103 = scalar_lea.vmem %s1099, 96 [#allocation2]
        %v1104 = vld [vmem:[%s1103] ss:$2 sm:$0xff]
        %s1105 = scalar_lea.vmem %s1099, 144 [#allocation2]
        %v1106 = vld [vmem:[%s1105] ss:$2 sm:$0xff]
        %s1107 = scalar_lea.vmem %s1099, 192 [#allocation2]
        %v1108 = vld [vmem:[%s1107] ss:$2 sm:$0xff]
        %s1109 = scalar_lea.vmem %s1099, 240 [#allocation2]
        %v1110 = vld [vmem:[%s1109] ss:$2 sm:$0xff]
        %s1111 = scalar_lea.vmem %s1099, 288 [#allocation2]
        %v1112 = vld [vmem:[%s1111] ss:$2 sm:$0xff]
        %s1113 = scalar_lea.vmem %s1099, 336 [#allocation2]
        %v1114 = vld [vmem:[%s1113] ss:$2 sm:$0xff]
        %1123 = vrot.lane.b32.xlu0 %v1100, 24
        %v1124 = vpop.permute.xlu0 %1123
        %1125 = vrot.lane.b32.xlu0 %v1102, 24
        %v1126 = vpop.permute.xlu0 %1125
        %1127 = vrot.lane.b32.xlu0 %v1104, 24
        %v1128 = vpop.permute.xlu0 %1127
        %1129 = vrot.lane.b32.xlu0 %v1106, 24
        %v1130 = vpop.permute.xlu0 %1129
        %1131 = vrot.lane.b32.xlu0 %v1108, 24
        %v1132 = vpop.permute.xlu0 %1131
        %1133 = vrot.lane.b32.xlu0 %v1110, 24
        %v1134 = vpop.permute.xlu0 %1133
        %1135 = vrot.lane.b32.xlu0 %v1112, 24
        %v1136 = vpop.permute.xlu0 %1135
        %1137 = vrot.lane.b32.xlu0 %v1114, 24
        %v1138 = vpop.permute.xlu0 %1137
        %vm1147 = vcmask 228544
        %1148 = vst.msk [vmem:[#allocation4] sm:$0xff] %vm1147, %v1124
        %1149 = vst.msk [vmem:[#allocation4 + $0x8] sm:$0xff] %vm1147, %v1126
        %1150 = vst.msk [vmem:[#allocation4 + $0x10] sm:$0xff] %vm1147, %v1128
        %1151 = vst.msk [vmem:[#allocation4 + $0x18] sm:$0xff] %vm1147, %v1130
        %1152 = vst.msk [vmem:[#allocation4 + $0x20] sm:$0xff] %vm1147, %v1132
        %1153 = vst.msk [vmem:[#allocation4 + $0x28] sm:$0xff] %vm1147, %v1134
        %1154 = vst.msk [vmem:[#allocation4 + $0x30] sm:$0xff] %vm1147, %v1136
        %1155 = vst.msk [vmem:[#allocation4 + $0x38] sm:$0xff] %vm1147, %v1138
        %s1156 = scalar_lea.vmem %s1099, 1 [#allocation2]
        %v1157 = vld [vmem:[%s1156] ss:$2 sm:$0xff]
        %s1158 = scalar_lea.vmem %s1099, 49 [#allocation2]
        %v1159 = vld [vmem:[%s1158] ss:$2 sm:$0xff]
        %s1160 = scalar_lea.vmem %s1099, 97 [#allocation2]
        %v1161 = vld [vmem:[%s1160] ss:$2 sm:$0xff]
        %s1162 = scalar_lea.vmem %s1099, 145 [#allocation2]
        %v1163 = vld [vmem:[%s1162] ss:$2 sm:$0xff]
        %s1164 = scalar_lea.vmem %s1099, 193 [#allocation2]
        %v1165 = vld [vmem:[%s1164] ss:$2 sm:$0xff]
        %s1166 = scalar_lea.vmem %s1099, 241 [#allocation2]
        %v1167 = vld [vmem:[%s1166] ss:$2 sm:$0xff]
        %s1168 = scalar_lea.vmem %s1099, 289 [#allocation2]
        %v1169 = vld [vmem:[%s1168] ss:$2 sm:$0xff]
        %s1170 = scalar_lea.vmem %s1099, 337 [#allocation2]
        %v1171 = vld [vmem:[%s1170] ss:$2 sm:$0xff]
        %1180 = vrot.lane.b32.xlu0 %v1157, 28
        %v1181 = vpop.permute.xlu0 %1180
        %1182 = vrot.lane.b32.xlu0 %v1159, 28
        %v1183 = vpop.permute.xlu0 %1182
        %1184 = vrot.lane.b32.xlu0 %v1161, 28
        %v1185 = vpop.permute.xlu0 %1184
        %1186 = vrot.lane.b32.xlu0 %v1163, 28
        %v1187 = vpop.permute.xlu0 %1186
        %1188 = vrot.lane.b32.xlu0 %v1165, 28
        %v1189 = vpop.permute.xlu0 %1188
        %1190 = vrot.lane.b32.xlu0 %v1167, 28
        %v1191 = vpop.permute.xlu0 %1190
        %1192 = vrot.lane.b32.xlu0 %v1169, 28
        %v1193 = vpop.permute.xlu0 %1192
        %1194 = vrot.lane.b32.xlu0 %v1171, 28
        %v1195 = vpop.permute.xlu0 %1194
        %vm1204 = vcmask 261344
        %1205 = vst.msk [vmem:[#allocation4] sm:$0xff] %vm1204, %v1181
        %1206 = vst.msk [vmem:[#allocation4 + $0x8] sm:$0xff] %vm1204, %v1183
        %1207 = vst.msk [vmem:[#allocation4 + $0x10] sm:$0xff] %vm1204, %v1185
        %1208 = vst.msk [vmem:[#allocation4 + $0x18] sm:$0xff] %vm1204, %v1187
        %1209 = vst.msk [vmem:[#allocation4 + $0x20] sm:$0xff] %vm1204, %v1189
        %1210 = vst.msk [vmem:[#allocation4 + $0x28] sm:$0xff] %vm1204, %v1191
        %1211 = vst.msk [vmem:[#allocation4 + $0x30] sm:$0xff] %vm1204, %v1193
        %1212 = vst.msk [vmem:[#allocation4 + $0x38] sm:$0xff] %vm1204, %v1195
        %s1213 = scalar_lea.vmem %s1099, 2 [#allocation2]
        %v1214 = vld [vmem:[%s1213] ss:$2 sm:$0xff]
        %s1215 = scalar_lea.vmem %s1099, 50 [#allocation2]
        %v1216 = vld [vmem:[%s1215] ss:$2 sm:$0xff]
        %s1217 = scalar_lea.vmem %s1099, 98 [#allocation2]
        %v1218 = vld [vmem:[%s1217] ss:$2 sm:$0xff]
        %s1219 = scalar_lea.vmem %s1099, 146 [#allocation2]
        %v1220 = vld [vmem:[%s1219] ss:$2 sm:$0xff]
        %s1221 = scalar_lea.vmem %s1099, 194 [#allocation2]
        %v1222 = vld [vmem:[%s1221] ss:$2 sm:$0xff]
        %s1223 = scalar_lea.vmem %s1099, 242 [#allocation2]
        %v1224 = vld [vmem:[%s1223] ss:$2 sm:$0xff]
        %s1225 = scalar_lea.vmem %s1099, 290 [#allocation2]
        %v1226 = vld [vmem:[%s1225] ss:$2 sm:$0xff]
        %s1227 = scalar_lea.vmem %s1099, 338 [#allocation2]
        %v1228 = vld [vmem:[%s1227] ss:$2 sm:$0xff]
        %1237 = vrot.lane.b32.xlu0 %v1214, 32
        %v1238 = vpop.permute.xlu0 %1237
        %1239 = vrot.lane.b32.xlu0 %v1216, 32
        %v1240 = vpop.permute.xlu0 %1239
        %1241 = vrot.lane.b32.xlu0 %v1218, 32
        %v1242 = vpop.permute.xlu0 %1241
        %1243 = vrot.lane.b32.xlu0 %v1220, 32
        %v1244 = vpop.permute.xlu0 %1243
        %1245 = vrot.lane.b32.xlu0 %v1222, 32
        %v1246 = vpop.permute.xlu0 %1245
        %1247 = vrot.lane.b32.xlu0 %v1224, 32
        %v1248 = vpop.permute.xlu0 %1247
        %1249 = vrot.lane.b32.xlu0 %v1226, 32
        %v1250 = vpop.permute.xlu0 %1249
        %1251 = vrot.lane.b32.xlu0 %v1228, 32
        %v1252 = vpop.permute.xlu0 %1251
        %vm1261 = vcmask 294144
        %1262 = vst.msk [vmem:[#allocation4] sm:$0xff] %vm1261, %v1238
        %1263 = vst.msk [vmem:[#allocation4 + $0x8] sm:$0xff] %vm1261, %v1240
        %1264 = vst.msk [vmem:[#allocation4 + $0x10] sm:$0xff] %vm1261, %v1242
        %1265 = vst.msk [vmem:[#allocation4 + $0x18] sm:$0xff] %vm1261, %v1244
        %1266 = vst.msk [vmem:[#allocation4 + $0x20] sm:$0xff] %vm1261, %v1246
        %1267 = vst.msk [vmem:[#allocation4 + $0x28] sm:$0xff] %vm1261, %v1248
        %1268 = vst.msk [vmem:[#allocation4 + $0x30] sm:$0xff] %vm1261, %v1250
        %1269 = vst.msk [vmem:[#allocation4 + $0x38] sm:$0xff] %vm1261, %v1252
        %v1270 = vld [vmem:[#allocation4] sm:$0xff]
        %v1271 = vld [vmem:[#allocation4 + $0x8] sm:$0xff]
        %v1272 = vld [vmem:[#allocation4 + $0x10] sm:$0xff]
        %v1273 = vld [vmem:[#allocation4 + $0x18] sm:$0xff]
        %v1274 = vld [vmem:[#allocation4 + $0x20] sm:$0xff]
        %v1275 = vld [vmem:[#allocation4 + $0x28] sm:$0xff]
        %v1276 = vld [vmem:[#allocation4 + $0x30] sm:$0xff]
        %v1277 = vld [vmem:[#allocation4 + $0x38] sm:$0xff]
        %v1278 = vld [vmem:[%s1] sm:$0xff]
        %v1279 = vld [vmem:[%s1 + $0x8] sm:$0xff]
        %v1280 = vld [vmem:[%s1 + $0x10] sm:$0xff]
        %v1281 = vld [vmem:[%s1 + $0x18] sm:$0xff]
        %v1282 = vld [vmem:[%s1 + $0x20] sm:$0xf]
        %vm1283 = vcmask 293888
        %v1285 = vsel %vm1283, %v1270, 0
        %v1288 = vsel %vm1283, %v1271, 0
        %v1291 = vsel %vm1283, %v1272, 0
        %v1294 = vsel %vm1283, %v1273, 0
        %v1297 = vsel %vm1283, %v1274, 0
        %v1300 = vsel %vm1283, %v1275, 0
        %v1303 = vsel %vm1283, %v1276, 0
        %v1306 = vsel %vm1283, %v1277, 0
        %vm1308 = vcmask 1043456
        %v1310 = vsel %vm1308, %v1282, 0
        %1312 = vmatpush.msra.mxu0 0.0
        %1313 = vmatpush.msra.mxu0 0.0
        %1314 = vmatpush.msra.mxu0 0.0
        %1315 = vmatpush.msra.mxu0 0.0
        %1316 = vmatpush.msra.mxu0 0.0
        %1317 = vmatpush.msra.mxu0 0.0
        %1318 = vmatpush.msra.mxu0 0.0
        %1319 = vmatpush.msra.mxu0 0.0
        %1320 = vmatpush.msra.mxu0 0.0
        %1321 = vmatpush.msra.mxu0 0.0
        %1322 = vmatpush.msra.mxu0 0.0
        %1323 = vmatpush.msra.mxu0 %v1310
        %1324 = vmatpush.msra.mxu0 %v1281
        %1325 = vmatpush.msra.mxu0 %v1280
        %1326 = vmatpush.msra.mxu0 %v1279
        %1327 = vmatpush.msra.mxu0 %v1278
        %1328 = vmatmul.f32.gmra.mxu0 %v1285
        %v1329 = vpop.f32.mrf.mxu0
        %v1330 = vadd.f32 0.0, %v1329
        %1331 = vmatmul.f32.gmra.mxu0 %v1288
        %v1332 = vpop.f32.mrf.mxu0
        %v1333 = vadd.f32 0.0, %v1332
        %1334 = vmatmul.f32.gmra.mxu0 %v1291
        %v1335 = vpop.f32.mrf.mxu0
        %v1336 = vadd.f32 0.0, %v1335
        %1337 = vmatmul.f32.gmra.mxu0 %v1294
        %v1338 = vpop.f32.mrf.mxu0
        %v1339 = vadd.f32 0.0, %v1338
        %1340 = vmatmul.f32.gmra.mxu0 %v1297
        %v1341 = vpop.f32.mrf.mxu0
        %v1342 = vadd.f32 0.0, %v1341
        %1343 = vmatmul.f32.gmra.mxu0 %v1300
        %v1344 = vpop.f32.mrf.mxu0
        %v1345 = vadd.f32 0.0, %v1344
        %1346 = vmatmul.f32.gmra.mxu0 %v1303
        %v1347 = vpop.f32.mrf.mxu0
        %v1348 = vadd.f32 0.0, %v1347
        %1349 = vmatmul.f32.gmra.mxu0 %v1306
        %v1350 = vpop.f32.mrf.mxu0
        %v1351 = vadd.f32 0.0, %v1350
        %1352 = vdwg.mxu0
        %v1353 = vld [vmem:[%s2] sm:$0x1]
        %v1355 = vperm.slane %v1353, 0
        %v1357 = vmul.f32 %v1330, %v1355
        %v1358 = vmul.f32 %v1333, %v1355
        %v1359 = vmul.f32 %v1336, %v1355
        %v1360 = vmul.f32 %v1339, %v1355
        %v1361 = vmul.f32 %v1342, %v1355
        %v1362 = vmul.f32 %v1345, %v1355
        %v1363 = vmul.f32 %v1348, %v1355
        %v1364 = vmul.f32 %v1351, %v1355
        %v1365 = vld [vmem:[%s3] sm:$0x1]
        %v1367 = vperm.slane %v1365, 0
        %v1369 = vadd.f32 %v1357, %v1367
        %v1370 = vadd.f32 %v1358, %v1367
        %v1371 = vadd.f32 %v1359, %v1367
        %v1372 = vadd.f32 %v1360, %v1367
        %v1373 = vadd.f32 %v1361, %v1367
        %v1374 = vadd.f32 %v1362, %v1367
        %v1375 = vadd.f32 %v1363, %v1367
        %v1376 = vadd.f32 %v1364, %v1367
        %v1377 = vmax.f32 %v1369, 0.0
        %v1378 = vmax.f32 %v1370, 0.0
        %v1379 = vmax.f32 %v1371, 0.0
        %v1380 = vmax.f32 %v1372, 0.0
        %v1381 = vmax.f32 %v1373, 0.0
        %v1382 = vmax.f32 %v1374, 0.0
        %v1383 = vmax.f32 %v1375, 0.0
        %v1384 = vmax.f32 %v1376, 0.0
        %v1385 = vld [vmem:[%s985] ss:$2 sm:$0xff]
        %v1386 = vld [vmem:[%s987] ss:$2 sm:$0xff]
        %v1387 = vld [vmem:[%s989] ss:$2 sm:$0xff]
        %v1388 = vld [vmem:[%s991] ss:$2 sm:$0xff]
        %v1389 = vld [vmem:[%s993] ss:$2 sm:$0xff]
        %v1390 = vld [vmem:[%s995] ss:$2 sm:$0xff]
        %v1391 = vld [vmem:[%s997] ss:$2 sm:$0xff]
        %v1392 = vld [vmem:[%s999] ss:$2 sm:$0xff]
        %v1393 = vld [vmem:[%s7] sm:$0xf]
        %v1395 = vsel %vm649, %v1385, 0
        %v1398 = vsel %vm649, %v1386, 0
        %v1401 = vsel %vm649, %v1387, 0
        %v1404 = vsel %vm649, %v1388, 0
        %v1407 = vsel %vm649, %v1389, 0
        %v1410 = vsel %vm649, %v1390, 0
        %v1413 = vsel %vm649, %v1391, 0
        %v1416 = vsel %vm649, %v1392, 0
        %v1419 = vsel %vm1308, %v1393, 0
        %1421 = vmatpush.msra.mxu0 0.0
        %1422 = vmatpush.msra.mxu0 0.0
        %1423 = vmatpush.msra.mxu0 0.0
        %1424 = vmatpush.msra.mxu0 0.0
        %1425 = vmatpush.msra.mxu0 0.0
        %1426 = vmatpush.msra.mxu0 0.0
        %1427 = vmatpush.msra.mxu0 0.0
        %1428 = vmatpush.msra.mxu0 0.0
        %1429 = vmatpush.msra.mxu0 0.0
        %1430 = vmatpush.msra.mxu0 0.0
        %1431 = vmatpush.msra.mxu0 0.0
        %1432 = vmatpush.msra.mxu0 0.0
        %1433 = vmatpush.msra.mxu0 0.0
        %1434 = vmatpush.msra.mxu0 0.0
        %1435 = vmatpush.msra.mxu0 0.0
        %1436 = vmatpush.msra.mxu0 %v1419
        %1437 = vmatmul.f32.gmra.mxu0 %v1395
        %v1438 = vpop.f32.mrf.mxu0
        %v1439 = vadd.f32 0.0, %v1438
        %1440 = vmatmul.f32.gmra.mxu0 %v1398
        %v1441 = vpop.f32.mrf.mxu0
        %v1442 = vadd.f32 0.0, %v1441
        %1443 = vmatmul.f32.gmra.mxu0 %v1401
        %v1444 = vpop.f32.mrf.mxu0
        %v1445 = vadd.f32 0.0, %v1444
        %1446 = vmatmul.f32.gmra.mxu0 %v1404
        %v1447 = vpop.f32.mrf.mxu0
        %v1448 = vadd.f32 0.0, %v1447
        %1449 = vmatmul.f32.gmra.mxu0 %v1407
        %v1450 = vpop.f32.mrf.mxu0
        %v1451 = vadd.f32 0.0, %v1450
        %1452 = vmatmul.f32.gmra.mxu0 %v1410
        %v1453 = vpop.f32.mrf.mxu0
        %v1454 = vadd.f32 0.0, %v1453
        %1455 = vmatmul.f32.gmra.mxu0 %v1413
        %v1456 = vpop.f32.mrf.mxu0
        %v1457 = vadd.f32 0.0, %v1456
        %1458 = vmatmul.f32.gmra.mxu0 %v1416
        %v1459 = vpop.f32.mrf.mxu0
        %v1460 = vadd.f32 0.0, %v1459
        %1461 = vdwg.mxu0
        %v1462 = vld [vmem:[%s8] sm:$0x1]
        %v1464 = vperm.slane %v1462, 0
        %v1466 = vmul.f32 %v1439, %v1464
        %v1467 = vmul.f32 %v1442, %v1464
        %v1468 = vmul.f32 %v1445, %v1464
        %v1469 = vmul.f32 %v1448, %v1464
        %v1470 = vmul.f32 %v1451, %v1464
        %v1471 = vmul.f32 %v1454, %v1464
        %v1472 = vmul.f32 %v1457, %v1464
        %v1473 = vmul.f32 %v1460, %v1464
        %v1474 = vld [vmem:[%s9] sm:$0x1]
        %v1476 = vperm.slane %v1474, 0
        %v1478 = vadd.f32 %v1466, %v1476
        %v1479 = vadd.f32 %v1467, %v1476
        %v1480 = vadd.f32 %v1468, %v1476
        %v1481 = vadd.f32 %v1469, %v1476
        %v1482 = vadd.f32 %v1470, %v1476
        %v1483 = vadd.f32 %v1471, %v1476
        %v1484 = vadd.f32 %v1472, %v1476
        %v1485 = vadd.f32 %v1473, %v1476
        %s1486 = scalar_lea.vmem [#allocation3], 16
        %1487 = vst.msk [vmem:[%s1486 + $0x1] sm:$0xff] %vm705, %v1377
        %1488 = vst.msk [vmem:[%s1486 + $0x11] sm:$0xff] %vm705, %v1378
        %1489 = vst.msk [vmem:[%s1486 + $0x21] sm:$0xff] %vm705, %v1379
        %1490 = vst.msk [vmem:[%s1486 + $0x31] sm:$0xff] %vm705, %v1380
        %1491 = vst.msk [vmem:[%s1486 + $0x41] sm:$0xff] %vm705, %v1381
        %1492 = vst.msk [vmem:[%s1486 + $0x51] sm:$0xff] %vm705, %v1382
        %1493 = vst.msk [vmem:[%s1486 + $0x61] sm:$0xff] %vm705, %v1383
        %1494 = vst.msk [vmem:[%s1486 + $0x71] sm:$0xff] %vm705, %v1384
        %v1495 = vld [vmem:[#allocation3] sm:$0xff]
        %v1496 = vld [vmem:[#allocation3 + $0x10] sm:$0xff]
        %v1497 = vld [vmem:[#allocation3 + $0x20] sm:$0xff]
        %v1498 = vld [vmem:[#allocation3 + $0x30] sm:$0xff]
        %v1499 = vld [vmem:[#allocation3 + $0x40] sm:$0xff]
        %v1500 = vld [vmem:[#allocation3 + $0x50] sm:$0xff]
        %v1501 = vld [vmem:[#allocation3 + $0x60] sm:$0xff]
        %v1502 = vld [vmem:[#allocation3 + $0x70] sm:$0xff]
        %1503 = vst.msk [vmem:[#allocation4] sm:$0xff] %vm705, %v1495
        %1504 = vst.msk [vmem:[#allocation4 + $0x8] sm:$0xff] %vm705, %v1496
        %1505 = vst.msk [vmem:[#allocation4 + $0x10] sm:$0xff] %vm705, %v1497
        %1506 = vst.msk [vmem:[#allocation4 + $0x18] sm:$0xff] %vm705, %v1498
        %1507 = vst.msk [vmem:[#allocation4 + $0x20] sm:$0xff] %vm705, %v1499
        %1508 = vst.msk [vmem:[#allocation4 + $0x28] sm:$0xff] %vm705, %v1500
        %1509 = vst.msk [vmem:[#allocation4 + $0x30] sm:$0xff] %vm705, %v1501
        %1510 = vst.msk [vmem:[#allocation4 + $0x38] sm:$0xff] %vm705, %v1502
        %v1511 = vld [vmem:[#allocation3 + $0x1] sm:$0xff]
        %v1512 = vld [vmem:[#allocation3 + $0x11] sm:$0xff]
        %v1513 = vld [vmem:[#allocation3 + $0x21] sm:$0xff]
        %v1514 = vld [vmem:[#allocation3 + $0x31] sm:$0xff]
        %v1515 = vld [vmem:[#allocation3 + $0x41] sm:$0xff]
        %v1516 = vld [vmem:[#allocation3 + $0x51] sm:$0xff]
        %v1517 = vld [vmem:[#allocation3 + $0x61] sm:$0xff]
        %v1518 = vld [vmem:[#allocation3 + $0x71] sm:$0xff]
        %1527 = vrot.lane.b32.xlu0 %v1511, 8
        %v1528 = vpop.permute.xlu0 %1527
        %1529 = vrot.lane.b32.xlu0 %v1512, 8
        %v1530 = vpop.permute.xlu0 %1529
        %1531 = vrot.lane.b32.xlu0 %v1513, 8
        %v1532 = vpop.permute.xlu0 %1531
        %1533 = vrot.lane.b32.xlu0 %v1514, 8
        %v1534 = vpop.permute.xlu0 %1533
        %1535 = vrot.lane.b32.xlu0 %v1515, 8
        %v1536 = vpop.permute.xlu0 %1535
        %1537 = vrot.lane.b32.xlu0 %v1516, 8
        %v1538 = vpop.permute.xlu0 %1537
        %1539 = vrot.lane.b32.xlu0 %v1517, 8
        %v1540 = vpop.permute.xlu0 %1539
        %1541 = vrot.lane.b32.xlu0 %v1518, 8
        %v1542 = vpop.permute.xlu0 %1541
        %vm1551 = vcmask 130112
        %1552 = vst.msk [vmem:[#allocation4] sm:$0xff] %vm1551, %v1528
        %1553 = vst.msk [vmem:[#allocation4 + $0x8] sm:$0xff] %vm1551, %v1530
        %1554 = vst.msk [vmem:[#allocation4 + $0x10] sm:$0xff] %vm1551, %v1532
        %1555 = vst.msk [vmem:[#allocation4 + $0x18] sm:$0xff] %vm1551, %v1534
        %1556 = vst.msk [vmem:[#allocation4 + $0x20] sm:$0xff] %vm1551, %v1536
        %1557 = vst.msk [vmem:[#allocation4 + $0x28] sm:$0xff] %vm1551, %v1538
        %1558 = vst.msk [vmem:[#allocation4 + $0x30] sm:$0xff] %vm1551, %v1540
        %1559 = vst.msk [vmem:[#allocation4 + $0x38] sm:$0xff] %vm1551, %v1542
        %v1560 = vld [vmem:[#allocation3 + $0x2] sm:$0xff]
        %v1561 = vld [vmem:[#allocation3 + $0x12] sm:$0xff]
        %v1562 = vld [vmem:[#allocation3 + $0x22] sm:$0xff]
        %v1563 = vld [vmem:[#allocation3 + $0x32] sm:$0xff]
        %v1564 = vld [vmem:[#allocation3 + $0x42] sm:$0xff]
        %v1565 = vld [vmem:[#allocation3 + $0x52] sm:$0xff]
        %v1566 = vld [vmem:[#allocation3 + $0x62] sm:$0xff]
        %v1567 = vld [vmem:[#allocation3 + $0x72] sm:$0xff]
        %1576 = vrot.lane.b32.xlu0 %v1560, 16
        %v1577 = vpop.permute.xlu0 %1576
        %1578 = vrot.lane.b32.xlu0 %v1561, 16
        %v1579 = vpop.permute.xlu0 %1578
        %1580 = vrot.lane.b32.xlu0 %v1562, 16
        %v1581 = vpop.permute.xlu0 %1580
        %1582 = vrot.lane.b32.xlu0 %v1563, 16
        %v1583 = vpop.permute.xlu0 %1582
        %1584 = vrot.lane.b32.xlu0 %v1564, 16
        %v1585 = vpop.permute.xlu0 %1584
        %1586 = vrot.lane.b32.xlu0 %v1565, 16
        %v1587 = vpop.permute.xlu0 %1586
        %1588 = vrot.lane.b32.xlu0 %v1566, 16
        %v1589 = vpop.permute.xlu0 %1588
        %1590 = vrot.lane.b32.xlu0 %v1567, 16
        %v1591 = vpop.permute.xlu0 %1590
        %vm1600 = vcmask 195712
        %1601 = vst.msk [vmem:[#allocation4] sm:$0xff] %vm1600, %v1577
        %1602 = vst.msk [vmem:[#allocation4 + $0x8] sm:$0xff] %vm1600, %v1579
        %1603 = vst.msk [vmem:[#allocation4 + $0x10] sm:$0xff] %vm1600, %v1581
        %1604 = vst.msk [vmem:[#allocation4 + $0x18] sm:$0xff] %vm1600, %v1583
        %1605 = vst.msk [vmem:[#allocation4 + $0x20] sm:$0xff] %vm1600, %v1585
        %1606 = vst.msk [vmem:[#allocation4 + $0x28] sm:$0xff] %vm1600, %v1587
        %1607 = vst.msk [vmem:[#allocation4 + $0x30] sm:$0xff] %vm1600, %v1589
        %1608 = vst.msk [vmem:[#allocation4 + $0x38] sm:$0xff] %vm1600, %v1591
        %v1609 = vld [vmem:[%s1486] sm:$0xff]
        %v1610 = vld [vmem:[%s1486 + $0x10] sm:$0xff]
        %v1611 = vld [vmem:[%s1486 + $0x20] sm:$0xff]
        %v1612 = vld [vmem:[%s1486 + $0x30] sm:$0xff]
        %v1613 = vld [vmem:[%s1486 + $0x40] sm:$0xff]
        %v1614 = vld [vmem:[%s1486 + $0x50] sm:$0xff]
        %v1615 = vld [vmem:[%s1486 + $0x60] sm:$0xff]
        %v1616 = vld [vmem:[%s1486 + $0x70] sm:$0xff]
        %1625 = vrot.lane.b32.xlu0 %v1609, 24
        %v1626 = vpop.permute.xlu0 %1625
        %1627 = vrot.lane.b32.xlu0 %v1610, 24
        %v1628 = vpop.permute.xlu0 %1627
        %1629 = vrot.lane.b32.xlu0 %v1611, 24
        %v1630 = vpop.permute.xlu0 %1629
        %1631 = vrot.lane.b32.xlu0 %v1612, 24
        %v1632 = vpop.permute.xlu0 %1631
        %1633 = vrot.lane.b32.xlu0 %v1613, 24
        %v1634 = vpop.permute.xlu0 %1633
        %1635 = vrot.lane.b32.xlu0 %v1614, 24
        %v1636 = vpop.permute.xlu0 %1635
        %1637 = vrot.lane.b32.xlu0 %v1615, 24
        %v1638 = vpop.permute.xlu0 %1637
        %1639 = vrot.lane.b32.xlu0 %v1616, 24
        %v1640 = vpop.permute.xlu0 %1639
        %vm1649 = vcmask 261312
        %1650 = vst.msk [vmem:[#allocation4] sm:$0xff] %vm1649, %v1626
        %1651 = vst.msk [vmem:[#allocation4 + $0x8] sm:$0xff] %vm1649, %v1628
        %1652 = vst.msk [vmem:[#allocation4 + $0x10] sm:$0xff] %vm1649, %v1630
        %1653 = vst.msk [vmem:[#allocation4 + $0x18] sm:$0xff] %vm1649, %v1632
        %1654 = vst.msk [vmem:[#allocation4 + $0x20] sm:$0xff] %vm1649, %v1634
        %1655 = vst.msk [vmem:[#allocation4 + $0x28] sm:$0xff] %vm1649, %v1636
        %1656 = vst.msk [vmem:[#allocation4 + $0x30] sm:$0xff] %vm1649, %v1638
        %1657 = vst.msk [vmem:[#allocation4 + $0x38] sm:$0xff] %vm1649, %v1640
        %v1658 = vld [vmem:[%s1486 + $0x1] sm:$0xff]
        %v1659 = vld [vmem:[%s1486 + $0x11] sm:$0xff]
        %v1660 = vld [vmem:[%s1486 + $0x21] sm:$0xff]
        %v1661 = vld [vmem:[%s1486 + $0x31] sm:$0xff]
        %v1662 = vld [vmem:[%s1486 + $0x41] sm:$0xff]
        %v1663 = vld [vmem:[%s1486 + $0x51] sm:$0xff]
        %v1664 = vld [vmem:[%s1486 + $0x61] sm:$0xff]
        %v1665 = vld [vmem:[%s1486 + $0x71] sm:$0xff]
        %1674 = vrot.lane.b32.xlu0 %v1658, 32
        %v1675 = vpop.permute.xlu0 %1674
        %1676 = vrot.lane.b32.xlu0 %v1659, 32
        %v1677 = vpop.permute.xlu0 %1676
        %1678 = vrot.lane.b32.xlu0 %v1660, 32
        %v1679 = vpop.permute.xlu0 %1678
        %1680 = vrot.lane.b32.xlu0 %v1661, 32
        %v1681 = vpop.permute.xlu0 %1680
        %1682 = vrot.lane.b32.xlu0 %v1662, 32
        %v1683 = vpop.permute.xlu0 %1682
        %1684 = vrot.lane.b32.xlu0 %v1663, 32
        %v1685 = vpop.permute.xlu0 %1684
        %1686 = vrot.lane.b32.xlu0 %v1664, 32
        %v1687 = vpop.permute.xlu0 %1686
        %1688 = vrot.lane.b32.xlu0 %v1665, 32
        %v1689 = vpop.permute.xlu0 %1688
        %vm1698 = vcmask 326912
        %1699 = vst.msk [vmem:[#allocation4] sm:$0xff] %vm1698, %v1675
        %1700 = vst.msk [vmem:[#allocation4 + $0x8] sm:$0xff] %vm1698, %v1677
        %1701 = vst.msk [vmem:[#allocation4 + $0x10] sm:$0xff] %vm1698, %v1679
        %1702 = vst.msk [vmem:[#allocation4 + $0x18] sm:$0xff] %vm1698, %v1681
        %1703 = vst.msk [vmem:[#allocation4 + $0x20] sm:$0xff] %vm1698, %v1683
        %1704 = vst.msk [vmem:[#allocation4 + $0x28] sm:$0xff] %vm1698, %v1685
        %1705 = vst.msk [vmem:[#allocation4 + $0x30] sm:$0xff] %vm1698, %v1687
        %1706 = vst.msk [vmem:[#allocation4 + $0x38] sm:$0xff] %vm1698, %v1689
        %v1707 = vld [vmem:[%s1486 + $0x2] sm:$0xff]
        %v1708 = vld [vmem:[%s1486 + $0x12] sm:$0xff]
        %v1709 = vld [vmem:[%s1486 + $0x22] sm:$0xff]
        %v1710 = vld [vmem:[%s1486 + $0x32] sm:$0xff]
        %v1711 = vld [vmem:[%s1486 + $0x42] sm:$0xff]
        %v1712 = vld [vmem:[%s1486 + $0x52] sm:$0xff]
        %v1713 = vld [vmem:[%s1486 + $0x62] sm:$0xff]
        %v1714 = vld [vmem:[%s1486 + $0x72] sm:$0xff]
        %1723 = vrot.lane.b32.xlu0 %v1707, 40
        %v1724 = vpop.permute.xlu0 %1723
        %1725 = vrot.lane.b32.xlu0 %v1708, 40
        %v1726 = vpop.permute.xlu0 %1725
        %1727 = vrot.lane.b32.xlu0 %v1709, 40
        %v1728 = vpop.permute.xlu0 %1727
        %1729 = vrot.lane.b32.xlu0 %v1710, 40
        %v1730 = vpop.permute.xlu0 %1729
        %1731 = vrot.lane.b32.xlu0 %v1711, 40
        %v1732 = vpop.permute.xlu0 %1731
        %1733 = vrot.lane.b32.xlu0 %v1712, 40
        %v1734 = vpop.permute.xlu0 %1733
        %1735 = vrot.lane.b32.xlu0 %v1713, 40
        %v1736 = vpop.permute.xlu0 %1735
        %1737 = vrot.lane.b32.xlu0 %v1714, 40
        %v1738 = vpop.permute.xlu0 %1737
        %vm1747 = vcmask 392512
        %1748 = vst.msk [vmem:[#allocation4] sm:$0xff] %vm1747, %v1724
        %1749 = vst.msk [vmem:[#allocation4 + $0x8] sm:$0xff] %vm1747, %v1726
        %1750 = vst.msk [vmem:[#allocation4 + $0x10] sm:$0xff] %vm1747, %v1728
        %1751 = vst.msk [vmem:[#allocation4 + $0x18] sm:$0xff] %vm1747, %v1730
        %1752 = vst.msk [vmem:[#allocation4 + $0x20] sm:$0xff] %vm1747, %v1732
        %1753 = vst.msk [vmem:[#allocation4 + $0x28] sm:$0xff] %vm1747, %v1734
        %1754 = vst.msk [vmem:[#allocation4 + $0x30] sm:$0xff] %vm1747, %v1736
        %1755 = vst.msk [vmem:[#allocation4 + $0x38] sm:$0xff] %vm1747, %v1738
        %s1756 = scalar_lea.vmem [#allocation3], 32
        %v1757 = vld [vmem:[%s1756] sm:$0xff]
        %v1758 = vld [vmem:[%s1756 + $0x10] sm:$0xff]
        %v1759 = vld [vmem:[%s1756 + $0x20] sm:$0xff]
        %v1760 = vld [vmem:[%s1756 + $0x30] sm:$0xff]
        %v1761 = vld [vmem:[%s1756 + $0x40] sm:$0xff]
        %v1762 = vld [vmem:[%s1756 + $0x50] sm:$0xff]
        %v1763 = vld [vmem:[%s1756 + $0x60] sm:$0xff]
        %v1764 = vld [vmem:[%s1756 + $0x70] sm:$0xff]
        %1773 = vrot.lane.b32.xlu0 %v1757, 48
        %v1774 = vpop.permute.xlu0 %1773
        %1775 = vrot.lane.b32.xlu0 %v1758, 48
        %v1776 = vpop.permute.xlu0 %1775
        %1777 = vrot.lane.b32.xlu0 %v1759, 48
        %v1778 = vpop.permute.xlu0 %1777
        %1779 = vrot.lane.b32.xlu0 %v1760, 48
        %v1780 = vpop.permute.xlu0 %1779
        %1781 = vrot.lane.b32.xlu0 %v1761, 48
        %v1782 = vpop.permute.xlu0 %1781
        %1783 = vrot.lane.b32.xlu0 %v1762, 48
        %v1784 = vpop.permute.xlu0 %1783
        %1785 = vrot.lane.b32.xlu0 %v1763, 48
        %v1786 = vpop.permute.xlu0 %1785
        %1787 = vrot.lane.b32.xlu0 %v1764, 48
        %v1788 = vpop.permute.xlu0 %1787
        %vm1797 = vcmask 458112
        %1798 = vst.msk [vmem:[#allocation4] sm:$0xff] %vm1797, %v1774
        %1799 = vst.msk [vmem:[#allocation4 + $0x8] sm:$0xff] %vm1797, %v1776
        %1800 = vst.msk [vmem:[#allocation4 + $0x10] sm:$0xff] %vm1797, %v1778
        %1801 = vst.msk [vmem:[#allocation4 + $0x18] sm:$0xff] %vm1797, %v1780
        %1802 = vst.msk [vmem:[#allocation4 + $0x20] sm:$0xff] %vm1797, %v1782
        %1803 = vst.msk [vmem:[#allocation4 + $0x28] sm:$0xff] %vm1797, %v1784
        %1804 = vst.msk [vmem:[#allocation4 + $0x30] sm:$0xff] %vm1797, %v1786
        %1805 = vst.msk [vmem:[#allocation4 + $0x38] sm:$0xff] %vm1797, %v1788
        %v1806 = vld [vmem:[%s1756 + $0x1] sm:$0xff]
        %v1807 = vld [vmem:[%s1756 + $0x11] sm:$0xff]
        %v1808 = vld [vmem:[%s1756 + $0x21] sm:$0xff]
        %v1809 = vld [vmem:[%s1756 + $0x31] sm:$0xff]
        %v1810 = vld [vmem:[%s1756 + $0x41] sm:$0xff]
        %v1811 = vld [vmem:[%s1756 + $0x51] sm:$0xff]
        %v1812 = vld [vmem:[%s1756 + $0x61] sm:$0xff]
        %v1813 = vld [vmem:[%s1756 + $0x71] sm:$0xff]
        %1822 = vrot.lane.b32.xlu0 %v1806, 56
        %v1823 = vpop.permute.xlu0 %1822
        %1824 = vrot.lane.b32.xlu0 %v1807, 56
        %v1825 = vpop.permute.xlu0 %1824
        %1826 = vrot.lane.b32.xlu0 %v1808, 56
        %v1827 = vpop.permute.xlu0 %1826
        %1828 = vrot.lane.b32.xlu0 %v1809, 56
        %v1829 = vpop.permute.xlu0 %1828
        %1830 = vrot.lane.b32.xlu0 %v1810, 56
        %v1831 = vpop.permute.xlu0 %1830
        %1832 = vrot.lane.b32.xlu0 %v1811, 56
        %v1833 = vpop.permute.xlu0 %1832
        %1834 = vrot.lane.b32.xlu0 %v1812, 56
        %v1835 = vpop.permute.xlu0 %1834
        %1836 = vrot.lane.b32.xlu0 %v1813, 56
        %v1837 = vpop.permute.xlu0 %1836
        %vm1846 = vcmask 523712
        %1847 = vst.msk [vmem:[#allocation4] sm:$0xff] %vm1846, %v1823
        %1848 = vst.msk [vmem:[#allocation4 + $0x8] sm:$0xff] %vm1846, %v1825
        %1849 = vst.msk [vmem:[#allocation4 + $0x10] sm:$0xff] %vm1846, %v1827
        %1850 = vst.msk [vmem:[#allocation4 + $0x18] sm:$0xff] %vm1846, %v1829
        %1851 = vst.msk [vmem:[#allocation4 + $0x20] sm:$0xff] %vm1846, %v1831
        %1852 = vst.msk [vmem:[#allocation4 + $0x28] sm:$0xff] %vm1846, %v1833
        %1853 = vst.msk [vmem:[#allocation4 + $0x30] sm:$0xff] %vm1846, %v1835
        %1854 = vst.msk [vmem:[#allocation4 + $0x38] sm:$0xff] %vm1846, %v1837
        %v1855 = vld [vmem:[%s1756 + $0x2] sm:$0xff]
        %v1856 = vld [vmem:[%s1756 + $0x12] sm:$0xff]
        %v1857 = vld [vmem:[%s1756 + $0x22] sm:$0xff]
        %v1858 = vld [vmem:[%s1756 + $0x32] sm:$0xff]
        %v1859 = vld [vmem:[%s1756 + $0x42] sm:$0xff]
        %v1860 = vld [vmem:[%s1756 + $0x52] sm:$0xff]
        %v1861 = vld [vmem:[%s1756 + $0x62] sm:$0xff]
        %v1862 = vld [vmem:[%s1756 + $0x72] sm:$0xff]
        %1871 = vrot.lane.b32.xlu0 %v1855, 64
        %v1872 = vpop.permute.xlu0 %1871
        %1873 = vrot.lane.b32.xlu0 %v1856, 64
        %v1874 = vpop.permute.xlu0 %1873
        %1875 = vrot.lane.b32.xlu0 %v1857, 64
        %v1876 = vpop.permute.xlu0 %1875
        %1877 = vrot.lane.b32.xlu0 %v1858, 64
        %v1878 = vpop.permute.xlu0 %1877
        %1879 = vrot.lane.b32.xlu0 %v1859, 64
        %v1880 = vpop.permute.xlu0 %1879
        %1881 = vrot.lane.b32.xlu0 %v1860, 64
        %v1882 = vpop.permute.xlu0 %1881
        %1883 = vrot.lane.b32.xlu0 %v1861, 64
        %v1884 = vpop.permute.xlu0 %1883
        %1885 = vrot.lane.b32.xlu0 %v1862, 64
        %v1886 = vpop.permute.xlu0 %1885
        %vm1895 = vcmask 589312
        %1896 = vst.msk [vmem:[#allocation4] sm:$0xff] %vm1895, %v1872
        %1897 = vst.msk [vmem:[#allocation4 + $0x8] sm:$0xff] %vm1895, %v1874
        %1898 = vst.msk [vmem:[#allocation4 + $0x10] sm:$0xff] %vm1895, %v1876
        %1899 = vst.msk [vmem:[#allocation4 + $0x18] sm:$0xff] %vm1895, %v1878
        %1900 = vst.msk [vmem:[#allocation4 + $0x20] sm:$0xff] %vm1895, %v1880
        %1901 = vst.msk [vmem:[#allocation4 + $0x28] sm:$0xff] %vm1895, %v1882
        %1902 = vst.msk [vmem:[#allocation4 + $0x30] sm:$0xff] %vm1895, %v1884
        %1903 = vst.msk [vmem:[#allocation4 + $0x38] sm:$0xff] %vm1895, %v1886
        %v1904 = vld [vmem:[#allocation4] sm:$0xff]
        %v1905 = vld [vmem:[#allocation4 + $0x8] sm:$0xff]
        %v1906 = vld [vmem:[#allocation4 + $0x10] sm:$0xff]
        %v1907 = vld [vmem:[#allocation4 + $0x18] sm:$0xff]
        %v1908 = vld [vmem:[#allocation4 + $0x20] sm:$0xff]
        %v1909 = vld [vmem:[#allocation4 + $0x28] sm:$0xff]
        %v1910 = vld [vmem:[#allocation4 + $0x30] sm:$0xff]
        %v1911 = vld [vmem:[#allocation4 + $0x38] sm:$0xff]
        %v1912 = vld [vmem:[%s4] sm:$0xff]
        %v1913 = vld [vmem:[%s4 + $0x8] sm:$0xff]
        %v1914 = vld [vmem:[%s4 + $0x10] sm:$0xff]
        %v1915 = vld [vmem:[%s4 + $0x18] sm:$0xff]
        %v1916 = vld [vmem:[%s4 + $0x20] sm:$0xff]
        %v1917 = vld [vmem:[%s4 + $0x28] sm:$0xff]
        %v1918 = vld [vmem:[%s4 + $0x30] sm:$0xff]
        %v1919 = vld [vmem:[%s4 + $0x38] sm:$0xff]
        %v1920 = vld [vmem:[%s4 + $0x40] sm:$0xff]
        %vm1921 = vcmask 588800
        %v1923 = vsel %vm1921, %v1904, 0
        %v1926 = vsel %vm1921, %v1905, 0
        %v1929 = vsel %vm1921, %v1906, 0
        %v1932 = vsel %vm1921, %v1907, 0
        %v1935 = vsel %vm1921, %v1908, 0
        %v1938 = vsel %vm1921, %v1909, 0
        %v1941 = vsel %vm1921, %v1910, 0
        %v1944 = vsel %vm1921, %v1911, 0
        %1946 = vmatpush.msra.mxu0 0.0
        %1947 = vmatpush.msra.mxu0 0.0
        %1948 = vmatpush.msra.mxu0 0.0
        %1949 = vmatpush.msra.mxu0 0.0
        %1950 = vmatpush.msra.mxu0 0.0
        %1951 = vmatpush.msra.mxu0 0.0
        %1952 = vmatpush.msra.mxu0 0.0
        %1953 = vmatpush.msra.mxu0 %v1920
        %1954 = vmatpush.msra.mxu0 %v1919
        %1955 = vmatpush.msra.mxu0 %v1918
        %1956 = vmatpush.msra.mxu0 %v1917
        %1957 = vmatpush.msra.mxu0 %v1916
        %1958 = vmatpush.msra.mxu0 %v1915
        %1959 = vmatpush.msra.mxu0 %v1914
        %1960 = vmatpush.msra.mxu0 %v1913
        %1961 = vmatpush.msra.mxu0 %v1912
        %1962 = vmatmul.f32.gmra.mxu0 %v1923
        %v1963 = vpop.f32.mrf.mxu0
        %v1964 = vadd.f32 0.0, %v1963
        %1965 = vmatmul.f32.gmra.mxu0 %v1926
        %v1966 = vpop.f32.mrf.mxu0
        %v1967 = vadd.f32 0.0, %v1966
        %1968 = vmatmul.f32.gmra.mxu0 %v1929
        %v1969 = vpop.f32.mrf.mxu0
        %v1970 = vadd.f32 0.0, %v1969
        %1971 = vmatmul.f32.gmra.mxu0 %v1932
        %v1972 = vpop.f32.mrf.mxu0
        %v1973 = vadd.f32 0.0, %v1972
        %1974 = vmatmul.f32.gmra.mxu0 %v1935
        %v1975 = vpop.f32.mrf.mxu0
        %v1976 = vadd.f32 0.0, %v1975
        %1977 = vmatmul.f32.gmra.mxu0 %v1938
        %v1978 = vpop.f32.mrf.mxu0
        %v1979 = vadd.f32 0.0, %v1978
        %1980 = vmatmul.f32.gmra.mxu0 %v1941
        %v1981 = vpop.f32.mrf.mxu0
        %v1982 = vadd.f32 0.0, %v1981
        %1983 = vmatmul.f32.gmra.mxu0 %v1944
        %v1984 = vpop.f32.mrf.mxu0
        %v1985 = vadd.f32 0.0, %v1984
        %1986 = vdwg.mxu0
        %v1987 = vld [vmem:[%s5] sm:$0x1]
        %v1989 = vperm.slane %v1987, 0
        %v1991 = vmul.f32 %v1964, %v1989
        %v1992 = vmul.f32 %v1967, %v1989
        %v1993 = vmul.f32 %v1970, %v1989
        %v1994 = vmul.f32 %v1973, %v1989
        %v1995 = vmul.f32 %v1976, %v1989
        %v1996 = vmul.f32 %v1979, %v1989
        %v1997 = vmul.f32 %v1982, %v1989
        %v1998 = vmul.f32 %v1985, %v1989
        %v1999 = vld [vmem:[%s6] sm:$0x1]
        %v2001 = vperm.slane %v1999, 0
        %v2003 = vadd.f32 %v1991, %v2001
        %v2004 = vadd.f32 %v1992, %v2001
        %v2005 = vadd.f32 %v1993, %v2001
        %v2006 = vadd.f32 %v1994, %v2001
        %v2007 = vadd.f32 %v1995, %v2001
        %v2008 = vadd.f32 %v1996, %v2001
        %v2009 = vadd.f32 %v1997, %v2001
        %v2010 = vadd.f32 %v1998, %v2001
        %v2011 = vadd.f32 %v2003, %v1478
        %v2012 = vadd.f32 %v2004, %v1479
        %v2013 = vadd.f32 %v2005, %v1480
        %v2014 = vadd.f32 %v2006, %v1481
        %v2015 = vadd.f32 %v2007, %v1482
        %v2016 = vadd.f32 %v2008, %v1483
        %v2017 = vadd.f32 %v2009, %v1484
        %v2018 = vadd.f32 %v2010, %v1485
        %v2019 = vmax.f32 %v2011, 0.0
        %v2020 = vmax.f32 %v2012, 0.0
        %v2021 = vmax.f32 %v2013, 0.0
        %v2022 = vmax.f32 %v2014, 0.0
        %v2023 = vmax.f32 %v2015, 0.0
        %v2024 = vmax.f32 %v2016, 0.0
        %v2025 = vmax.f32 %v2017, 0.0
        %v2026 = vmax.f32 %v2018, 0.0
        %2027 = vst.msk [vmem:[%s1486 + $0x1] sm:$0xff] %vm705, %v2019
        %2028 = vst.msk [vmem:[%s1486 + $0x11] sm:$0xff] %vm705, %v2020
        %2029 = vst.msk [vmem:[%s1486 + $0x21] sm:$0xff] %vm705, %v2021
        %2030 = vst.msk [vmem:[%s1486 + $0x31] sm:$0xff] %vm705, %v2022
        %2031 = vst.msk [vmem:[%s1486 + $0x41] sm:$0xff] %vm705, %v2023
        %2032 = vst.msk [vmem:[%s1486 + $0x51] sm:$0xff] %vm705, %v2024
        %2033 = vst.msk [vmem:[%s1486 + $0x61] sm:$0xff] %vm705, %v2025
        %2034 = vst.msk [vmem:[%s1486 + $0x71] sm:$0xff] %vm705, %v2026
        %v2035 = vld [vmem:[#allocation3] sm:$0xff]
        %v2036 = vld [vmem:[#allocation3 + $0x10] sm:$0xff]
        %v2037 = vld [vmem:[#allocation3 + $0x20] sm:$0xff]
        %v2038 = vld [vmem:[#allocation3 + $0x30] sm:$0xff]
        %v2039 = vld [vmem:[#allocation3 + $0x40] sm:$0xff]
        %v2040 = vld [vmem:[#allocation3 + $0x50] sm:$0xff]
        %v2041 = vld [vmem:[#allocation3 + $0x60] sm:$0xff]
        %v2042 = vld [vmem:[#allocation3 + $0x70] sm:$0xff]
        %2043 = vst.msk [vmem:[#allocation4] sm:$0xff] %vm705, %v2035
        %2044 = vst.msk [vmem:[#allocation4 + $0x8] sm:$0xff] %vm705, %v2036
        %2045 = vst.msk [vmem:[#allocation4 + $0x10] sm:$0xff] %vm705, %v2037
        %2046 = vst.msk [vmem:[#allocation4 + $0x18] sm:$0xff] %vm705, %v2038
        %2047 = vst.msk [vmem:[#allocation4 + $0x20] sm:$0xff] %vm705, %v2039
        %2048 = vst.msk [vmem:[#allocation4 + $0x28] sm:$0xff] %vm705, %v2040
        %2049 = vst.msk [vmem:[#allocation4 + $0x30] sm:$0xff] %vm705, %v2041
        %2050 = vst.msk [vmem:[#allocation4 + $0x38] sm:$0xff] %vm705, %v2042
        %v2051 = vld [vmem:[#allocation3 + $0x1] sm:$0xff]
        %v2052 = vld [vmem:[#allocation3 + $0x11] sm:$0xff]
        %v2053 = vld [vmem:[#allocation3 + $0x21] sm:$0xff]
        %v2054 = vld [vmem:[#allocation3 + $0x31] sm:$0xff]
        %v2055 = vld [vmem:[#allocation3 + $0x41] sm:$0xff]
        %v2056 = vld [vmem:[#allocation3 + $0x51] sm:$0xff]
        %v2057 = vld [vmem:[#allocation3 + $0x61] sm:$0xff]
        %v2058 = vld [vmem:[#allocation3 + $0x71] sm:$0xff]
        %2067 = vrot.lane.b32.xlu0 %v2051, 8
        %v2068 = vpop.permute.xlu0 %2067
        %2069 = vrot.lane.b32.xlu0 %v2052, 8
        %v2070 = vpop.permute.xlu0 %2069
        %2071 = vrot.lane.b32.xlu0 %v2053, 8
        %v2072 = vpop.permute.xlu0 %2071
        %2073 = vrot.lane.b32.xlu0 %v2054, 8
        %v2074 = vpop.permute.xlu0 %2073
        %2075 = vrot.lane.b32.xlu0 %v2055, 8
        %v2076 = vpop.permute.xlu0 %2075
        %2077 = vrot.lane.b32.xlu0 %v2056, 8
        %v2078 = vpop.permute.xlu0 %2077
        %2079 = vrot.lane.b32.xlu0 %v2057, 8
        %v2080 = vpop.permute.xlu0 %2079
        %2081 = vrot.lane.b32.xlu0 %v2058, 8
        %v2082 = vpop.permute.xlu0 %2081
        %2091 = vst.msk [vmem:[#allocation4] sm:$0xff] %vm1551, %v2068
        %2092 = vst.msk [vmem:[#allocation4 + $0x8] sm:$0xff] %vm1551, %v2070
        %2093 = vst.msk [vmem:[#allocation4 + $0x10] sm:$0xff] %vm1551, %v2072
        %2094 = vst.msk [vmem:[#allocation4 + $0x18] sm:$0xff] %vm1551, %v2074
        %2095 = vst.msk [vmem:[#allocation4 + $0x20] sm:$0xff] %vm1551, %v2076
        %2096 = vst.msk [vmem:[#allocation4 + $0x28] sm:$0xff] %vm1551, %v2078
        %2097 = vst.msk [vmem:[#allocation4 + $0x30] sm:$0xff] %vm1551, %v2080
        %2098 = vst.msk [vmem:[#allocation4 + $0x38] sm:$0xff] %vm1551, %v2082
        %v2099 = vld [vmem:[#allocation3 + $0x2] sm:$0xff]
        %v2100 = vld [vmem:[#allocation3 + $0x12] sm:$0xff]
        %v2101 = vld [vmem:[#allocation3 + $0x22] sm:$0xff]
        %v2102 = vld [vmem:[#allocation3 + $0x32] sm:$0xff]
        %v2103 = vld [vmem:[#allocation3 + $0x42] sm:$0xff]
        %v2104 = vld [vmem:[#allocation3 + $0x52] sm:$0xff]
        %v2105 = vld [vmem:[#allocation3 + $0x62] sm:$0xff]
        %v2106 = vld [vmem:[#allocation3 + $0x72] sm:$0xff]
        %2115 = vrot.lane.b32.xlu0 %v2099, 16
        %v2116 = vpop.permute.xlu0 %2115
        %2117 = vrot.lane.b32.xlu0 %v2100, 16
        %v2118 = vpop.permute.xlu0 %2117
        %2119 = vrot.lane.b32.xlu0 %v2101, 16
        %v2120 = vpop.permute.xlu0 %2119
        %2121 = vrot.lane.b32.xlu0 %v2102, 16
        %v2122 = vpop.permute.xlu0 %2121
        %2123 = vrot.lane.b32.xlu0 %v2103, 16
        %v2124 = vpop.permute.xlu0 %2123
        %2125 = vrot.lane.b32.xlu0 %v2104, 16
        %v2126 = vpop.permute.xlu0 %2125
        %2127 = vrot.lane.b32.xlu0 %v2105, 16
        %v2128 = vpop.permute.xlu0 %2127
        %2129 = vrot.lane.b32.xlu0 %v2106, 16
        %v2130 = vpop.permute.xlu0 %2129
        %2139 = vst.msk [vmem:[#allocation4] sm:$0xff] %vm1600, %v2116
        %2140 = vst.msk [vmem:[#allocation4 + $0x8] sm:$0xff] %vm1600, %v2118
        %2141 = vst.msk [vmem:[#allocation4 + $0x10] sm:$0xff] %vm1600, %v2120
        %2142 = vst.msk [vmem:[#allocation4 + $0x18] sm:$0xff] %vm1600, %v2122
        %2143 = vst.msk [vmem:[#allocation4 + $0x20] sm:$0xff] %vm1600, %v2124
        %2144 = vst.msk [vmem:[#allocation4 + $0x28] sm:$0xff] %vm1600, %v2126
        %2145 = vst.msk [vmem:[#allocation4 + $0x30] sm:$0xff] %vm1600, %v2128
        %2146 = vst.msk [vmem:[#allocation4 + $0x38] sm:$0xff] %vm1600, %v2130
        %v2147 = vld [vmem:[%s1486] sm:$0xff]
        %v2148 = vld [vmem:[%s1486 + $0x10] sm:$0xff]
        %v2149 = vld [vmem:[%s1486 + $0x20] sm:$0xff]
        %v2150 = vld [vmem:[%s1486 + $0x30] sm:$0xff]
        %v2151 = vld [vmem:[%s1486 + $0x40] sm:$0xff]
        %v2152 = vld [vmem:[%s1486 + $0x50] sm:$0xff]
        %v2153 = vld [vmem:[%s1486 + $0x60] sm:$0xff]
        %v2154 = vld [vmem:[%s1486 + $0x70] sm:$0xff]
        %2163 = vrot.lane.b32.xlu0 %v2147, 24
        %v2164 = vpop.permute.xlu0 %2163
        %2165 = vrot.lane.b32.xlu0 %v2148, 24
        %v2166 = vpop.permute.xlu0 %2165
        %2167 = vrot.lane.b32.xlu0 %v2149, 24
        %v2168 = vpop.permute.xlu0 %2167
        %2169 = vrot.lane.b32.xlu0 %v2150, 24
        %v2170 = vpop.permute.xlu0 %2169
        %2171 = vrot.lane.b32.xlu0 %v2151, 24
        %v2172 = vpop.permute.xlu0 %2171
        %2173 = vrot.lane.b32.xlu0 %v2152, 24
        %v2174 = vpop.permute.xlu0 %2173
        %2175 = vrot.lane.b32.xlu0 %v2153, 24
        %v2176 = vpop.permute.xlu0 %2175
        %2177 = vrot.lane.b32.xlu0 %v2154, 24
        %v2178 = vpop.permute.xlu0 %2177
        %2187 = vst.msk [vmem:[#allocation4] sm:$0xff] %vm1649, %v2164
        %2188 = vst.msk [vmem:[#allocation4 + $0x8] sm:$0xff] %vm1649, %v2166
        %2189 = vst.msk [vmem:[#allocation4 + $0x10] sm:$0xff] %vm1649, %v2168
        %2190 = vst.msk [vmem:[#allocation4 + $0x18] sm:$0xff] %vm1649, %v2170
        %2191 = vst.msk [vmem:[#allocation4 + $0x20] sm:$0xff] %vm1649, %v2172
        %2192 = vst.msk [vmem:[#allocation4 + $0x28] sm:$0xff] %vm1649, %v2174
        %2193 = vst.msk [vmem:[#allocation4 + $0x30] sm:$0xff] %vm1649, %v2176
        %2194 = vst.msk [vmem:[#allocation4 + $0x38] sm:$0xff] %vm1649, %v2178
        %v2195 = vld [vmem:[%s1486 + $0x1] sm:$0xff]
        %v2196 = vld [vmem:[%s1486 + $0x11] sm:$0xff]
        %v2197 = vld [vmem:[%s1486 + $0x21] sm:$0xff]
        %v2198 = vld [vmem:[%s1486 + $0x31] sm:$0xff]
        %v2199 = vld [vmem:[%s1486 + $0x41] sm:$0xff]
        %v2200 = vld [vmem:[%s1486 + $0x51] sm:$0xff]
        %v2201 = vld [vmem:[%s1486 + $0x61] sm:$0xff]
        %v2202 = vld [vmem:[%s1486 + $0x71] sm:$0xff]
        %2211 = vrot.lane.b32.xlu0 %v2195, 32
        %v2212 = vpop.permute.xlu0 %2211
        %2213 = vrot.lane.b32.xlu0 %v2196, 32
        %v2214 = vpop.permute.xlu0 %2213
        %2215 = vrot.lane.b32.xlu0 %v2197, 32
        %v2216 = vpop.permute.xlu0 %2215
        %2217 = vrot.lane.b32.xlu0 %v2198, 32
        %v2218 = vpop.permute.xlu0 %2217
        %2219 = vrot.lane.b32.xlu0 %v2199, 32
        %v2220 = vpop.permute.xlu0 %2219
        %2221 = vrot.lane.b32.xlu0 %v2200, 32
        %v2222 = vpop.permute.xlu0 %2221
        %2223 = vrot.lane.b32.xlu0 %v2201, 32
        %v2224 = vpop.permute.xlu0 %2223
        %2225 = vrot.lane.b32.xlu0 %v2202, 32
        %v2226 = vpop.permute.xlu0 %2225
        %2235 = vst.msk [vmem:[#allocation4] sm:$0xff] %vm1698, %v2212
        %2236 = vst.msk [vmem:[#allocation4 + $0x8] sm:$0xff] %vm1698, %v2214
        %2237 = vst.msk [vmem:[#allocation4 + $0x10] sm:$0xff] %vm1698, %v2216
        %2238 = vst.msk [vmem:[#allocation4 + $0x18] sm:$0xff] %vm1698, %v2218
        %2239 = vst.msk [vmem:[#allocation4 + $0x20] sm:$0xff] %vm1698, %v2220
        %2240 = vst.msk [vmem:[#allocation4 + $0x28] sm:$0xff] %vm1698, %v2222
        %2241 = vst.msk [vmem:[#allocation4 + $0x30] sm:$0xff] %vm1698, %v2224
        %2242 = vst.msk [vmem:[#allocation4 + $0x38] sm:$0xff] %vm1698, %v2226
        %v2243 = vld [vmem:[%s1486 + $0x2] sm:$0xff]
        %v2244 = vld [vmem:[%s1486 + $0x12] sm:$0xff]
        %v2245 = vld [vmem:[%s1486 + $0x22] sm:$0xff]
        %v2246 = vld [vmem:[%s1486 + $0x32] sm:$0xff]
        %v2247 = vld [vmem:[%s1486 + $0x42] sm:$0xff]
        %v2248 = vld [vmem:[%s1486 + $0x52] sm:$0xff]
        %v2249 = vld [vmem:[%s1486 + $0x62] sm:$0xff]
        %v2250 = vld [vmem:[%s1486 + $0x72] sm:$0xff]
        %2259 = vrot.lane.b32.xlu0 %v2243, 40
        %v2260 = vpop.permute.xlu0 %2259
        %2261 = vrot.lane.b32.xlu0 %v2244, 40
        %v2262 = vpop.permute.xlu0 %2261
        %2263 = vrot.lane.b32.xlu0 %v2245, 40
        %v2264 = vpop.permute.xlu0 %2263
        %2265 = vrot.lane.b32.xlu0 %v2246, 40
        %v2266 = vpop.permute.xlu0 %2265
        %2267 = vrot.lane.b32.xlu0 %v2247, 40
        %v2268 = vpop.permute.xlu0 %2267
        %2269 = vrot.lane.b32.xlu0 %v2248, 40
        %v2270 = vpop.permute.xlu0 %2269
        %2271 = vrot.lane.b32.xlu0 %v2249, 40
        %v2272 = vpop.permute.xlu0 %2271
        %2273 = vrot.lane.b32.xlu0 %v2250, 40
        %v2274 = vpop.permute.xlu0 %2273
        %2283 = vst.msk [vmem:[#allocation4] sm:$0xff] %vm1747, %v2260
        %2284 = vst.msk [vmem:[#allocation4 + $0x8] sm:$0xff] %vm1747, %v2262
        %2285 = vst.msk [vmem:[#allocation4 + $0x10] sm:$0xff] %vm1747, %v2264
        %2286 = vst.msk [vmem:[#allocation4 + $0x18] sm:$0xff] %vm1747, %v2266
        %2287 = vst.msk [vmem:[#allocation4 + $0x20] sm:$0xff] %vm1747, %v2268
        %2288 = vst.msk [vmem:[#allocation4 + $0x28] sm:$0xff] %vm1747, %v2270
        %2289 = vst.msk [vmem:[#allocation4 + $0x30] sm:$0xff] %vm1747, %v2272
        %2290 = vst.msk [vmem:[#allocation4 + $0x38] sm:$0xff] %vm1747, %v2274
        %v2291 = vld [vmem:[%s1756] sm:$0xff]
        %v2292 = vld [vmem:[%s1756 + $0x10] sm:$0xff]
        %v2293 = vld [vmem:[%s1756 + $0x20] sm:$0xff]
        %v2294 = vld [vmem:[%s1756 + $0x30] sm:$0xff]
        %v2295 = vld [vmem:[%s1756 + $0x40] sm:$0xff]
        %v2296 = vld [vmem:[%s1756 + $0x50] sm:$0xff]
        %v2297 = vld [vmem:[%s1756 + $0x60] sm:$0xff]
        %v2298 = vld [vmem:[%s1756 + $0x70] sm:$0xff]
        %2307 = vrot.lane.b32.xlu0 %v2291, 48
        %v2308 = vpop.permute.xlu0 %2307
        %2309 = vrot.lane.b32.xlu0 %v2292, 48
        %v2310 = vpop.permute.xlu0 %2309
        %2311 = vrot.lane.b32.xlu0 %v2293, 48
        %v2312 = vpop.permute.xlu0 %2311
        %2313 = vrot.lane.b32.xlu0 %v2294, 48
        %v2314 = vpop.permute.xlu0 %2313
        %2315 = vrot.lane.b32.xlu0 %v2295, 48
        %v2316 = vpop.permute.xlu0 %2315
        %2317 = vrot.lane.b32.xlu0 %v2296, 48
        %v2318 = vpop.permute.xlu0 %2317
        %2319 = vrot.lane.b32.xlu0 %v2297, 48
        %v2320 = vpop.permute.xlu0 %2319
        %2321 = vrot.lane.b32.xlu0 %v2298, 48
        %v2322 = vpop.permute.xlu0 %2321
        %2331 = vst.msk [vmem:[#allocation4] sm:$0xff] %vm1797, %v2308
        %2332 = vst.msk [vmem:[#allocation4 + $0x8] sm:$0xff] %vm1797, %v2310
        %2333 = vst.msk [vmem:[#allocation4 + $0x10] sm:$0xff] %vm1797, %v2312
        %2334 = vst.msk [vmem:[#allocation4 + $0x18] sm:$0xff] %vm1797, %v2314
        %2335 = vst.msk [vmem:[#allocation4 + $0x20] sm:$0xff] %vm1797, %v2316
        %2336 = vst.msk [vmem:[#allocation4 + $0x28] sm:$0xff] %vm1797, %v2318
        %2337 = vst.msk [vmem:[#allocation4 + $0x30] sm:$0xff] %vm1797, %v2320
        %2338 = vst.msk [vmem:[#allocation4 + $0x38] sm:$0xff] %vm1797, %v2322
        %v2339 = vld [vmem:[%s1756 + $0x1] sm:$0xff]
        %v2340 = vld [vmem:[%s1756 + $0x11] sm:$0xff]
        %v2341 = vld [vmem:[%s1756 + $0x21] sm:$0xff]
        %v2342 = vld [vmem:[%s1756 + $0x31] sm:$0xff]
        %v2343 = vld [vmem:[%s1756 + $0x41] sm:$0xff]
        %v2344 = vld [vmem:[%s1756 + $0x51] sm:$0xff]
        %v2345 = vld [vmem:[%s1756 + $0x61] sm:$0xff]
        %v2346 = vld [vmem:[%s1756 + $0x71] sm:$0xff]
        %2355 = vrot.lane.b32.xlu0 %v2339, 56
        %v2356 = vpop.permute.xlu0 %2355
        %2357 = vrot.lane.b32.xlu0 %v2340, 56
        %v2358 = vpop.permute.xlu0 %2357
        %2359 = vrot.lane.b32.xlu0 %v2341, 56
        %v2360 = vpop.permute.xlu0 %2359
        %2361 = vrot.lane.b32.xlu0 %v2342, 56
        %v2362 = vpop.permute.xlu0 %2361
        %2363 = vrot.lane.b32.xlu0 %v2343, 56
        %v2364 = vpop.permute.xlu0 %2363
        %2365 = vrot.lane.b32.xlu0 %v2344, 56
        %v2366 = vpop.permute.xlu0 %2365
        %2367 = vrot.lane.b32.xlu0 %v2345, 56
        %v2368 = vpop.permute.xlu0 %2367
        %2369 = vrot.lane.b32.xlu0 %v2346, 56
        %v2370 = vpop.permute.xlu0 %2369
        %2379 = vst.msk [vmem:[#allocation4] sm:$0xff] %vm1846, %v2356
        %2380 = vst.msk [vmem:[#allocation4 + $0x8] sm:$0xff] %vm1846, %v2358
        %2381 = vst.msk [vmem:[#allocation4 + $0x10] sm:$0xff] %vm1846, %v2360
        %2382 = vst.msk [vmem:[#allocation4 + $0x18] sm:$0xff] %vm1846, %v2362
        %2383 = vst.msk [vmem:[#allocation4 + $0x20] sm:$0xff] %vm1846, %v2364
        %2384 = vst.msk [vmem:[#allocation4 + $0x28] sm:$0xff] %vm1846, %v2366
        %2385 = vst.msk [vmem:[#allocation4 + $0x30] sm:$0xff] %vm1846, %v2368
        %2386 = vst.msk [vmem:[#allocation4 + $0x38] sm:$0xff] %vm1846, %v2370
        %v2387 = vld [vmem:[%s1756 + $0x2] sm:$0xff]
        %v2388 = vld [vmem:[%s1756 + $0x12] sm:$0xff]
        %v2389 = vld [vmem:[%s1756 + $0x22] sm:$0xff]
        %v2390 = vld [vmem:[%s1756 + $0x32] sm:$0xff]
        %v2391 = vld [vmem:[%s1756 + $0x42] sm:$0xff]
        %v2392 = vld [vmem:[%s1756 + $0x52] sm:$0xff]
        %v2393 = vld [vmem:[%s1756 + $0x62] sm:$0xff]
        %v2394 = vld [vmem:[%s1756 + $0x72] sm:$0xff]
        %2403 = vrot.lane.b32.xlu0 %v2387, 64
        %v2404 = vpop.permute.xlu0 %2403
        %2405 = vrot.lane.b32.xlu0 %v2388, 64
        %v2406 = vpop.permute.xlu0 %2405
        %2407 = vrot.lane.b32.xlu0 %v2389, 64
        %v2408 = vpop.permute.xlu0 %2407
        %2409 = vrot.lane.b32.xlu0 %v2390, 64
        %v2410 = vpop.permute.xlu0 %2409
        %2411 = vrot.lane.b32.xlu0 %v2391, 64
        %v2412 = vpop.permute.xlu0 %2411
        %2413 = vrot.lane.b32.xlu0 %v2392, 64
        %v2414 = vpop.permute.xlu0 %2413
        %2415 = vrot.lane.b32.xlu0 %v2393, 64
        %v2416 = vpop.permute.xlu0 %2415
        %2417 = vrot.lane.b32.xlu0 %v2394, 64
        %v2418 = vpop.permute.xlu0 %2417
        %2427 = vst.msk [vmem:[#allocation4] sm:$0xff] %vm1895, %v2404
        %2428 = vst.msk [vmem:[#allocation4 + $0x8] sm:$0xff] %vm1895, %v2406
        %2429 = vst.msk [vmem:[#allocation4 + $0x10] sm:$0xff] %vm1895, %v2408
        %2430 = vst.msk [vmem:[#allocation4 + $0x18] sm:$0xff] %vm1895, %v2410
        %2431 = vst.msk [vmem:[#allocation4 + $0x20] sm:$0xff] %vm1895, %v2412
        %2432 = vst.msk [vmem:[#allocation4 + $0x28] sm:$0xff] %vm1895, %v2414
        %2433 = vst.msk [vmem:[#allocation4 + $0x30] sm:$0xff] %vm1895, %v2416
        %2434 = vst.msk [vmem:[#allocation4 + $0x38] sm:$0xff] %vm1895, %v2418
        %v2435 = vld [vmem:[#allocation4] sm:$0xff]
        %v2436 = vld [vmem:[#allocation4 + $0x8] sm:$0xff]
        %v2437 = vld [vmem:[#allocation4 + $0x10] sm:$0xff]
        %v2438 = vld [vmem:[#allocation4 + $0x18] sm:$0xff]
        %v2439 = vld [vmem:[#allocation4 + $0x20] sm:$0xff]
        %v2440 = vld [vmem:[#allocation4 + $0x28] sm:$0xff]
        %v2441 = vld [vmem:[#allocation4 + $0x30] sm:$0xff]
        %v2442 = vld [vmem:[#allocation4 + $0x38] sm:$0xff]
        %v2443 = vld [vmem:[%s10] sm:$0xff]
        %v2444 = vld [vmem:[%s10 + $0x8] sm:$0xff]
        %v2445 = vld [vmem:[%s10 + $0x10] sm:$0xff]
        %v2446 = vld [vmem:[%s10 + $0x18] sm:$0xff]
        %v2447 = vld [vmem:[%s10 + $0x20] sm:$0xff]
        %v2448 = vld [vmem:[%s10 + $0x28] sm:$0xff]
        %v2449 = vld [vmem:[%s10 + $0x30] sm:$0xff]
        %v2450 = vld [vmem:[%s10 + $0x38] sm:$0xff]
        %v2451 = vld [vmem:[%s10 + $0x40] sm:$0xff]
        %v2453 = vsel %vm1921, %v2435, 0
        %v2456 = vsel %vm1921, %v2436, 0
        %v2459 = vsel %vm1921, %v2437, 0
        %v2462 = vsel %vm1921, %v2438, 0
        %v2465 = vsel %vm1921, %v2439, 0
        %v2468 = vsel %vm1921, %v2440, 0
        %v2471 = vsel %vm1921, %v2441, 0
        %v2474 = vsel %vm1921, %v2442, 0
        %2476 = vmatpush.msra.mxu0 0.0
        %2477 = vmatpush.msra.mxu0 0.0
        %2478 = vmatpush.msra.mxu0 0.0
        %2479 = vmatpush.msra.mxu0 0.0
        %2480 = vmatpush.msra.mxu0 0.0
        %2481 = vmatpush.msra.mxu0 0.0
        %2482 = vmatpush.msra.mxu0 0.0
        %2483 = vmatpush.msra.mxu0 %v2451
        %2484 = vmatpush.msra.mxu0 %v2450
        %2485 = vmatpush.msra.mxu0 %v2449
        %2486 = vmatpush.msra.mxu0 %v2448
        %2487 = vmatpush.msra.mxu0 %v2447
        %2488 = vmatpush.msra.mxu0 %v2446
        %2489 = vmatpush.msra.mxu0 %v2445
        %2490 = vmatpush.msra.mxu0 %v2444
        %2491 = vmatpush.msra.mxu0 %v2443
        %2492 = vmatmul.f32.gmra.mxu0 %v2453
        %v2493 = vpop.f32.mrf.mxu0
        %v2494 = vadd.f32 0.0, %v2493
        %2495 = vmatmul.f32.gmra.mxu0 %v2456
        %v2496 = vpop.f32.mrf.mxu0
        %v2497 = vadd.f32 0.0, %v2496
        %2498 = vmatmul.f32.gmra.mxu0 %v2459
        %v2499 = vpop.f32.mrf.mxu0
        %v2500 = vadd.f32 0.0, %v2499
        %2501 = vmatmul.f32.gmra.mxu0 %v2462
        %v2502 = vpop.f32.mrf.mxu0
        %v2503 = vadd.f32 0.0, %v2502
        %2504 = vmatmul.f32.gmra.mxu0 %v2465
        %v2505 = vpop.f32.mrf.mxu0
        %v2506 = vadd.f32 0.0, %v2505
        %2507 = vmatmul.f32.gmra.mxu0 %v2468
        %v2508 = vpop.f32.mrf.mxu0
        %v2509 = vadd.f32 0.0, %v2508
        %2510 = vmatmul.f32.gmra.mxu0 %v2471
        %v2511 = vpop.f32.mrf.mxu0
        %v2512 = vadd.f32 0.0, %v2511
        %2513 = vmatmul.f32.gmra.mxu0 %v2474
        %v2514 = vpop.f32.mrf.mxu0
        %v2515 = vadd.f32 0.0, %v2514
        %2516 = vdwg.mxu0
        %v2517 = vld [vmem:[%s11] sm:$0x1]
        %v2519 = vperm.slane %v2517, 0
        %v2521 = vmul.f32 %v2494, %v2519
        %v2522 = vmul.f32 %v2497, %v2519
        %v2523 = vmul.f32 %v2500, %v2519
        %v2524 = vmul.f32 %v2503, %v2519
        %v2525 = vmul.f32 %v2506, %v2519
        %v2526 = vmul.f32 %v2509, %v2519
        %v2527 = vmul.f32 %v2512, %v2519
        %v2528 = vmul.f32 %v2515, %v2519
        %v2529 = vld [vmem:[%s12] sm:$0x1]
        %v2531 = vperm.slane %v2529, 0
        %v2533 = vadd.f32 %v2521, %v2531
        %v2534 = vadd.f32 %v2522, %v2531
        %v2535 = vadd.f32 %v2523, %v2531
        %v2536 = vadd.f32 %v2524, %v2531
        %v2537 = vadd.f32 %v2525, %v2531
        %v2538 = vadd.f32 %v2526, %v2531
        %v2539 = vadd.f32 %v2527, %v2531
        %v2540 = vadd.f32 %v2528, %v2531
        %v2541 = vmax.f32 %v2533, 0.0
        %v2542 = vmax.f32 %v2534, 0.0
        %v2543 = vmax.f32 %v2535, 0.0
        %v2544 = vmax.f32 %v2536, 0.0
        %v2545 = vmax.f32 %v2537, 0.0
        %v2546 = vmax.f32 %v2538, 0.0
        %v2547 = vmax.f32 %v2539, 0.0
        %v2548 = vmax.f32 %v2540, 0.0
        %2549 = vst.msk [vmem:[%s1486 + $0x1] sm:$0xff] %vm705, %v2541
        %2550 = vst.msk [vmem:[%s1486 + $0x11] sm:$0xff] %vm705, %v2542
        %2551 = vst.msk [vmem:[%s1486 + $0x21] sm:$0xff] %vm705, %v2543
        %2552 = vst.msk [vmem:[%s1486 + $0x31] sm:$0xff] %vm705, %v2544
        %2553 = vst.msk [vmem:[%s1486 + $0x41] sm:$0xff] %vm705, %v2545
        %2554 = vst.msk [vmem:[%s1486 + $0x51] sm:$0xff] %vm705, %v2546
        %2555 = vst.msk [vmem:[%s1486 + $0x61] sm:$0xff] %vm705, %v2547
        %2556 = vst.msk [vmem:[%s1486 + $0x71] sm:$0xff] %vm705, %v2548
        %v2557 = vld [vmem:[#allocation3] sm:$0xff]
        %v2558 = vld [vmem:[#allocation3 + $0x10] sm:$0xff]
        %v2559 = vld [vmem:[#allocation3 + $0x20] sm:$0xff]
        %v2560 = vld [vmem:[#allocation3 + $0x30] sm:$0xff]
        %v2561 = vld [vmem:[#allocation3 + $0x40] sm:$0xff]
        %v2562 = vld [vmem:[#allocation3 + $0x50] sm:$0xff]
        %v2563 = vld [vmem:[#allocation3 + $0x60] sm:$0xff]
        %v2564 = vld [vmem:[#allocation3 + $0x70] sm:$0xff]
        %2565 = vst.msk [vmem:[#allocation4] sm:$0xff] %vm705, %v2557
        %2566 = vst.msk [vmem:[#allocation4 + $0x8] sm:$0xff] %vm705, %v2558
        %2567 = vst.msk [vmem:[#allocation4 + $0x10] sm:$0xff] %vm705, %v2559
        %2568 = vst.msk [vmem:[#allocation4 + $0x18] sm:$0xff] %vm705, %v2560
        %2569 = vst.msk [vmem:[#allocation4 + $0x20] sm:$0xff] %vm705, %v2561
        %2570 = vst.msk [vmem:[#allocation4 + $0x28] sm:$0xff] %vm705, %v2562
        %2571 = vst.msk [vmem:[#allocation4 + $0x30] sm:$0xff] %vm705, %v2563
        %2572 = vst.msk [vmem:[#allocation4 + $0x38] sm:$0xff] %vm705, %v2564
        %v2573 = vld [vmem:[#allocation3 + $0x1] sm:$0xff]
        %v2574 = vld [vmem:[#allocation3 + $0x11] sm:$0xff]
        %v2575 = vld [vmem:[#allocation3 + $0x21] sm:$0xff]
        %v2576 = vld [vmem:[#allocation3 + $0x31] sm:$0xff]
        %v2577 = vld [vmem:[#allocation3 + $0x41] sm:$0xff]
        %v2578 = vld [vmem:[#allocation3 + $0x51] sm:$0xff]
        %v2579 = vld [vmem:[#allocation3 + $0x61] sm:$0xff]
        %v2580 = vld [vmem:[#allocation3 + $0x71] sm:$0xff]
        %2589 = vrot.lane.b32.xlu0 %v2573, 8
        %v2590 = vpop.permute.xlu0 %2589
        %2591 = vrot.lane.b32.xlu0 %v2574, 8
        %v2592 = vpop.permute.xlu0 %2591
        %2593 = vrot.lane.b32.xlu0 %v2575, 8
        %v2594 = vpop.permute.xlu0 %2593
        %2595 = vrot.lane.b32.xlu0 %v2576, 8
        %v2596 = vpop.permute.xlu0 %2595
        %2597 = vrot.lane.b32.xlu0 %v2577, 8
        %v2598 = vpop.permute.xlu0 %2597
        %2599 = vrot.lane.b32.xlu0 %v2578, 8
        %v2600 = vpop.permute.xlu0 %2599
        %2601 = vrot.lane.b32.xlu0 %v2579, 8
        %v2602 = vpop.permute.xlu0 %2601
        %2603 = vrot.lane.b32.xlu0 %v2580, 8
        %v2604 = vpop.permute.xlu0 %2603
        %2613 = vst.msk [vmem:[#allocation4] sm:$0xff] %vm1551, %v2590
        %2614 = vst.msk [vmem:[#allocation4 + $0x8] sm:$0xff] %vm1551, %v2592
        %2615 = vst.msk [vmem:[#allocation4 + $0x10] sm:$0xff] %vm1551, %v2594
        %2616 = vst.msk [vmem:[#allocation4 + $0x18] sm:$0xff] %vm1551, %v2596
        %2617 = vst.msk [vmem:[#allocation4 + $0x20] sm:$0xff] %vm1551, %v2598
        %2618 = vst.msk [vmem:[#allocation4 + $0x28] sm:$0xff] %vm1551, %v2600
        %2619 = vst.msk [vmem:[#allocation4 + $0x30] sm:$0xff] %vm1551, %v2602
        %2620 = vst.msk [vmem:[#allocation4 + $0x38] sm:$0xff] %vm1551, %v2604
        %v2621 = vld [vmem:[#allocation3 + $0x2] sm:$0xff]
        %v2622 = vld [vmem:[#allocation3 + $0x12] sm:$0xff]
        %v2623 = vld [vmem:[#allocation3 + $0x22] sm:$0xff]
        %v2624 = vld [vmem:[#allocation3 + $0x32] sm:$0xff]
        %v2625 = vld [vmem:[#allocation3 + $0x42] sm:$0xff]
        %v2626 = vld [vmem:[#allocation3 + $0x52] sm:$0xff]
        %v2627 = vld [vmem:[#allocation3 + $0x62] sm:$0xff]
        %v2628 = vld [vmem:[#allocation3 + $0x72] sm:$0xff]
        %2637 = vrot.lane.b32.xlu0 %v2621, 16
        %v2638 = vpop.permute.xlu0 %2637
        %2639 = vrot.lane.b32.xlu0 %v2622, 16
        %v2640 = vpop.permute.xlu0 %2639
        %2641 = vrot.lane.b32.xlu0 %v2623, 16
        %v2642 = vpop.permute.xlu0 %2641
        %2643 = vrot.lane.b32.xlu0 %v2624, 16
        %v2644 = vpop.permute.xlu0 %2643
        %2645 = vrot.lane.b32.xlu0 %v2625, 16
        %v2646 = vpop.permute.xlu0 %2645
        %2647 = vrot.lane.b32.xlu0 %v2626, 16
        %v2648 = vpop.permute.xlu0 %2647
        %2649 = vrot.lane.b32.xlu0 %v2627, 16
        %v2650 = vpop.permute.xlu0 %2649
        %2651 = vrot.lane.b32.xlu0 %v2628, 16
        %v2652 = vpop.permute.xlu0 %2651
        %2661 = vst.msk [vmem:[#allocation4] sm:$0xff] %vm1600, %v2638
        %2662 = vst.msk [vmem:[#allocation4 + $0x8] sm:$0xff] %vm1600, %v2640
        %2663 = vst.msk [vmem:[#allocation4 + $0x10] sm:$0xff] %vm1600, %v2642
        %2664 = vst.msk [vmem:[#allocation4 + $0x18] sm:$0xff] %vm1600, %v2644
        %2665 = vst.msk [vmem:[#allocation4 + $0x20] sm:$0xff] %vm1600, %v2646
        %2666 = vst.msk [vmem:[#allocation4 + $0x28] sm:$0xff] %vm1600, %v2648
        %2667 = vst.msk [vmem:[#allocation4 + $0x30] sm:$0xff] %vm1600, %v2650
        %2668 = vst.msk [vmem:[#allocation4 + $0x38] sm:$0xff] %vm1600, %v2652
        %v2669 = vld [vmem:[%s1486] sm:$0xff]
        %v2670 = vld [vmem:[%s1486 + $0x10] sm:$0xff]
        %v2671 = vld [vmem:[%s1486 + $0x20] sm:$0xff]
        %v2672 = vld [vmem:[%s1486 + $0x30] sm:$0xff]
        %v2673 = vld [vmem:[%s1486 + $0x40] sm:$0xff]
        %v2674 = vld [vmem:[%s1486 + $0x50] sm:$0xff]
        %v2675 = vld [vmem:[%s1486 + $0x60] sm:$0xff]
        %v2676 = vld [vmem:[%s1486 + $0x70] sm:$0xff]
        %2685 = vrot.lane.b32.xlu0 %v2669, 24
        %v2686 = vpop.permute.xlu0 %2685
        %2687 = vrot.lane.b32.xlu0 %v2670, 24
        %v2688 = vpop.permute.xlu0 %2687
        %2689 = vrot.lane.b32.xlu0 %v2671, 24
        %v2690 = vpop.permute.xlu0 %2689
        %2691 = vrot.lane.b32.xlu0 %v2672, 24
        %v2692 = vpop.permute.xlu0 %2691
        %2693 = vrot.lane.b32.xlu0 %v2673, 24
        %v2694 = vpop.permute.xlu0 %2693
        %2695 = vrot.lane.b32.xlu0 %v2674, 24
        %v2696 = vpop.permute.xlu0 %2695
        %2697 = vrot.lane.b32.xlu0 %v2675, 24
        %v2698 = vpop.permute.xlu0 %2697
        %2699 = vrot.lane.b32.xlu0 %v2676, 24
        %v2700 = vpop.permute.xlu0 %2699
        %2709 = vst.msk [vmem:[#allocation4] sm:$0xff] %vm1649, %v2686
        %2710 = vst.msk [vmem:[#allocation4 + $0x8] sm:$0xff] %vm1649, %v2688
        %2711 = vst.msk [vmem:[#allocation4 + $0x10] sm:$0xff] %vm1649, %v2690
        %2712 = vst.msk [vmem:[#allocation4 + $0x18] sm:$0xff] %vm1649, %v2692
        %2713 = vst.msk [vmem:[#allocation4 + $0x20] sm:$0xff] %vm1649, %v2694
        %2714 = vst.msk [vmem:[#allocation4 + $0x28] sm:$0xff] %vm1649, %v2696
        %2715 = vst.msk [vmem:[#allocation4 + $0x30] sm:$0xff] %vm1649, %v2698
        %2716 = vst.msk [vmem:[#allocation4 + $0x38] sm:$0xff] %vm1649, %v2700
        %v2717 = vld [vmem:[%s1486 + $0x1] sm:$0xff]
        %v2718 = vld [vmem:[%s1486 + $0x11] sm:$0xff]
        %v2719 = vld [vmem:[%s1486 + $0x21] sm:$0xff]
        %v2720 = vld [vmem:[%s1486 + $0x31] sm:$0xff]
        %v2721 = vld [vmem:[%s1486 + $0x41] sm:$0xff]
        %v2722 = vld [vmem:[%s1486 + $0x51] sm:$0xff]
        %v2723 = vld [vmem:[%s1486 + $0x61] sm:$0xff]
        %v2724 = vld [vmem:[%s1486 + $0x71] sm:$0xff]
        %2733 = vrot.lane.b32.xlu0 %v2717, 32
        %v2734 = vpop.permute.xlu0 %2733
        %2735 = vrot.lane.b32.xlu0 %v2718, 32
        %v2736 = vpop.permute.xlu0 %2735
        %2737 = vrot.lane.b32.xlu0 %v2719, 32
        %v2738 = vpop.permute.xlu0 %2737
        %2739 = vrot.lane.b32.xlu0 %v2720, 32
        %v2740 = vpop.permute.xlu0 %2739
        %2741 = vrot.lane.b32.xlu0 %v2721, 32
        %v2742 = vpop.permute.xlu0 %2741
        %2743 = vrot.lane.b32.xlu0 %v2722, 32
        %v2744 = vpop.permute.xlu0 %2743
        %2745 = vrot.lane.b32.xlu0 %v2723, 32
        %v2746 = vpop.permute.xlu0 %2745
        %2747 = vrot.lane.b32.xlu0 %v2724, 32
        %v2748 = vpop.permute.xlu0 %2747
        %2757 = vst.msk [vmem:[#allocation4] sm:$0xff] %vm1698, %v2734
        %2758 = vst.msk [vmem:[#allocation4 + $0x8] sm:$0xff] %vm1698, %v2736
        %2759 = vst.msk [vmem:[#allocation4 + $0x10] sm:$0xff] %vm1698, %v2738
        %2760 = vst.msk [vmem:[#allocation4 + $0x18] sm:$0xff] %vm1698, %v2740
        %2761 = vst.msk [vmem:[#allocation4 + $0x20] sm:$0xff] %vm1698, %v2742
        %2762 = vst.msk [vmem:[#allocation4 + $0x28] sm:$0xff] %vm1698, %v2744
        %2763 = vst.msk [vmem:[#allocation4 + $0x30] sm:$0xff] %vm1698, %v2746
        %2764 = vst.msk [vmem:[#allocation4 + $0x38] sm:$0xff] %vm1698, %v2748
        %v2765 = vld [vmem:[%s1486 + $0x2] sm:$0xff]
        %v2766 = vld [vmem:[%s1486 + $0x12] sm:$0xff]
        %v2767 = vld [vmem:[%s1486 + $0x22] sm:$0xff]
        %v2768 = vld [vmem:[%s1486 + $0x32] sm:$0xff]
        %v2769 = vld [vmem:[%s1486 + $0x42] sm:$0xff]
        %v2770 = vld [vmem:[%s1486 + $0x52] sm:$0xff]
        %v2771 = vld [vmem:[%s1486 + $0x62] sm:$0xff]
        %v2772 = vld [vmem:[%s1486 + $0x72] sm:$0xff]
        %2781 = vrot.lane.b32.xlu0 %v2765, 40
        %v2782 = vpop.permute.xlu0 %2781
        %2783 = vrot.lane.b32.xlu0 %v2766, 40
        %v2784 = vpop.permute.xlu0 %2783
        %2785 = vrot.lane.b32.xlu0 %v2767, 40
        %v2786 = vpop.permute.xlu0 %2785
        %2787 = vrot.lane.b32.xlu0 %v2768, 40
        %v2788 = vpop.permute.xlu0 %2787
        %2789 = vrot.lane.b32.xlu0 %v2769, 40
        %v2790 = vpop.permute.xlu0 %2789
        %2791 = vrot.lane.b32.xlu0 %v2770, 40
        %v2792 = vpop.permute.xlu0 %2791
        %2793 = vrot.lane.b32.xlu0 %v2771, 40
        %v2794 = vpop.permute.xlu0 %2793
        %2795 = vrot.lane.b32.xlu0 %v2772, 40
        %v2796 = vpop.permute.xlu0 %2795
        %2805 = vst.msk [vmem:[#allocation4] sm:$0xff] %vm1747, %v2782
        %2806 = vst.msk [vmem:[#allocation4 + $0x8] sm:$0xff] %vm1747, %v2784
        %2807 = vst.msk [vmem:[#allocation4 + $0x10] sm:$0xff] %vm1747, %v2786
        %2808 = vst.msk [vmem:[#allocation4 + $0x18] sm:$0xff] %vm1747, %v2788
        %2809 = vst.msk [vmem:[#allocation4 + $0x20] sm:$0xff] %vm1747, %v2790
        %2810 = vst.msk [vmem:[#allocation4 + $0x28] sm:$0xff] %vm1747, %v2792
        %2811 = vst.msk [vmem:[#allocation4 + $0x30] sm:$0xff] %vm1747, %v2794
        %2812 = vst.msk [vmem:[#allocation4 + $0x38] sm:$0xff] %vm1747, %v2796
        %v2813 = vld [vmem:[%s1756] sm:$0xff]
        %v2814 = vld [vmem:[%s1756 + $0x10] sm:$0xff]
        %v2815 = vld [vmem:[%s1756 + $0x20] sm:$0xff]
        %v2816 = vld [vmem:[%s1756 + $0x30] sm:$0xff]
        %v2817 = vld [vmem:[%s1756 + $0x40] sm:$0xff]
        %v2818 = vld [vmem:[%s1756 + $0x50] sm:$0xff]
        %v2819 = vld [vmem:[%s1756 + $0x60] sm:$0xff]
        %v2820 = vld [vmem:[%s1756 + $0x70] sm:$0xff]
        %2829 = vrot.lane.b32.xlu0 %v2813, 48
        %v2830 = vpop.permute.xlu0 %2829
        %2831 = vrot.lane.b32.xlu0 %v2814, 48
        %v2832 = vpop.permute.xlu0 %2831
        %2833 = vrot.lane.b32.xlu0 %v2815, 48
        %v2834 = vpop.permute.xlu0 %2833
        %2835 = vrot.lane.b32.xlu0 %v2816, 48
        %v2836 = vpop.permute.xlu0 %2835
        %2837 = vrot.lane.b32.xlu0 %v2817, 48
        %v2838 = vpop.permute.xlu0 %2837
        %2839 = vrot.lane.b32.xlu0 %v2818, 48
        %v2840 = vpop.permute.xlu0 %2839
        %2841 = vrot.lane.b32.xlu0 %v2819, 48
        %v2842 = vpop.permute.xlu0 %2841
        %2843 = vrot.lane.b32.xlu0 %v2820, 48
        %v2844 = vpop.permute.xlu0 %2843
        %2853 = vst.msk [vmem:[#allocation4] sm:$0xff] %vm1797, %v2830
        %2854 = vst.msk [vmem:[#allocation4 + $0x8] sm:$0xff] %vm1797, %v2832
        %2855 = vst.msk [vmem:[#allocation4 + $0x10] sm:$0xff] %vm1797, %v2834
        %2856 = vst.msk [vmem:[#allocation4 + $0x18] sm:$0xff] %vm1797, %v2836
        %2857 = vst.msk [vmem:[#allocation4 + $0x20] sm:$0xff] %vm1797, %v2838
        %2858 = vst.msk [vmem:[#allocation4 + $0x28] sm:$0xff] %vm1797, %v2840
        %2859 = vst.msk [vmem:[#allocation4 + $0x30] sm:$0xff] %vm1797, %v2842
        %2860 = vst.msk [vmem:[#allocation4 + $0x38] sm:$0xff] %vm1797, %v2844
        %v2861 = vld [vmem:[%s1756 + $0x1] sm:$0xff]
        %v2862 = vld [vmem:[%s1756 + $0x11] sm:$0xff]
        %v2863 = vld [vmem:[%s1756 + $0x21] sm:$0xff]
        %v2864 = vld [vmem:[%s1756 + $0x31] sm:$0xff]
        %v2865 = vld [vmem:[%s1756 + $0x41] sm:$0xff]
        %v2866 = vld [vmem:[%s1756 + $0x51] sm:$0xff]
        %v2867 = vld [vmem:[%s1756 + $0x61] sm:$0xff]
        %v2868 = vld [vmem:[%s1756 + $0x71] sm:$0xff]
        %2877 = vrot.lane.b32.xlu0 %v2861, 56
        %v2878 = vpop.permute.xlu0 %2877
        %2879 = vrot.lane.b32.xlu0 %v2862, 56
        %v2880 = vpop.permute.xlu0 %2879
        %2881 = vrot.lane.b32.xlu0 %v2863, 56
        %v2882 = vpop.permute.xlu0 %2881
        %2883 = vrot.lane.b32.xlu0 %v2864, 56
        %v2884 = vpop.permute.xlu0 %2883
        %2885 = vrot.lane.b32.xlu0 %v2865, 56
        %v2886 = vpop.permute.xlu0 %2885
        %2887 = vrot.lane.b32.xlu0 %v2866, 56
        %v2888 = vpop.permute.xlu0 %2887
        %2889 = vrot.lane.b32.xlu0 %v2867, 56
        %v2890 = vpop.permute.xlu0 %2889
        %2891 = vrot.lane.b32.xlu0 %v2868, 56
        %v2892 = vpop.permute.xlu0 %2891
        %2901 = vst.msk [vmem:[#allocation4] sm:$0xff] %vm1846, %v2878
        %2902 = vst.msk [vmem:[#allocation4 + $0x8] sm:$0xff] %vm1846, %v2880
        %2903 = vst.msk [vmem:[#allocation4 + $0x10] sm:$0xff] %vm1846, %v2882
        %2904 = vst.msk [vmem:[#allocation4 + $0x18] sm:$0xff] %vm1846, %v2884
        %2905 = vst.msk [vmem:[#allocation4 + $0x20] sm:$0xff] %vm1846, %v2886
        %2906 = vst.msk [vmem:[#allocation4 + $0x28] sm:$0xff] %vm1846, %v2888
        %2907 = vst.msk [vmem:[#allocation4 + $0x30] sm:$0xff] %vm1846, %v2890
        %2908 = vst.msk [vmem:[#allocation4 + $0x38] sm:$0xff] %vm1846, %v2892
        %v2909 = vld [vmem:[%s1756 + $0x2] sm:$0xff]
        %v2910 = vld [vmem:[%s1756 + $0x12] sm:$0xff]
        %v2911 = vld [vmem:[%s1756 + $0x22] sm:$0xff]
        %v2912 = vld [vmem:[%s1756 + $0x32] sm:$0xff]
        %v2913 = vld [vmem:[%s1756 + $0x42] sm:$0xff]
        %v2914 = vld [vmem:[%s1756 + $0x52] sm:$0xff]
        %v2915 = vld [vmem:[%s1756 + $0x62] sm:$0xff]
        %v2916 = vld [vmem:[%s1756 + $0x72] sm:$0xff]
        %2925 = vrot.lane.b32.xlu0 %v2909, 64
        %v2926 = vpop.permute.xlu0 %2925
        %2927 = vrot.lane.b32.xlu0 %v2910, 64
        %v2928 = vpop.permute.xlu0 %2927
        %2929 = vrot.lane.b32.xlu0 %v2911, 64
        %v2930 = vpop.permute.xlu0 %2929
        %2931 = vrot.lane.b32.xlu0 %v2912, 64
        %v2932 = vpop.permute.xlu0 %2931
        %2933 = vrot.lane.b32.xlu0 %v2913, 64
        %v2934 = vpop.permute.xlu0 %2933
        %2935 = vrot.lane.b32.xlu0 %v2914, 64
        %v2936 = vpop.permute.xlu0 %2935
        %2937 = vrot.lane.b32.xlu0 %v2915, 64
        %v2938 = vpop.permute.xlu0 %2937
        %2939 = vrot.lane.b32.xlu0 %v2916, 64
        %v2940 = vpop.permute.xlu0 %2939
        %2949 = vst.msk [vmem:[#allocation4] sm:$0xff] %vm1895, %v2926
        %2950 = vst.msk [vmem:[#allocation4 + $0x8] sm:$0xff] %vm1895, %v2928
        %2951 = vst.msk [vmem:[#allocation4 + $0x10] sm:$0xff] %vm1895, %v2930
        %2952 = vst.msk [vmem:[#allocation4 + $0x18] sm:$0xff] %vm1895, %v2932
        %2953 = vst.msk [vmem:[#allocation4 + $0x20] sm:$0xff] %vm1895, %v2934
        %2954 = vst.msk [vmem:[#allocation4 + $0x28] sm:$0xff] %vm1895, %v2936
        %2955 = vst.msk [vmem:[#allocation4 + $0x30] sm:$0xff] %vm1895, %v2938
        %2956 = vst.msk [vmem:[#allocation4 + $0x38] sm:$0xff] %vm1895, %v2940
        %v2957 = vld [vmem:[#allocation4] sm:$0xff]
        %v2958 = vld [vmem:[#allocation4 + $0x8] sm:$0xff]
        %v2959 = vld [vmem:[#allocation4 + $0x10] sm:$0xff]
        %v2960 = vld [vmem:[#allocation4 + $0x18] sm:$0xff]
        %v2961 = vld [vmem:[#allocation4 + $0x20] sm:$0xff]
        %v2962 = vld [vmem:[#allocation4 + $0x28] sm:$0xff]
        %v2963 = vld [vmem:[#allocation4 + $0x30] sm:$0xff]
        %v2964 = vld [vmem:[#allocation4 + $0x38] sm:$0xff]
        %v2965 = vld [vmem:[%s13] sm:$0xff]
        %v2966 = vld [vmem:[%s13 + $0x8] sm:$0xff]
        %v2967 = vld [vmem:[%s13 + $0x10] sm:$0xff]
        %v2968 = vld [vmem:[%s13 + $0x18] sm:$0xff]
        %v2969 = vld [vmem:[%s13 + $0x20] sm:$0xff]
        %v2970 = vld [vmem:[%s13 + $0x28] sm:$0xff]
        %v2971 = vld [vmem:[%s13 + $0x30] sm:$0xff]
        %v2972 = vld [vmem:[%s13 + $0x38] sm:$0xff]
        %v2973 = vld [vmem:[%s13 + $0x40] sm:$0xff]
        %v2975 = vsel %vm1921, %v2957, 0
        %v2978 = vsel %vm1921, %v2958, 0
        %v2981 = vsel %vm1921, %v2959, 0
        %v2984 = vsel %vm1921, %v2960, 0
        %v2987 = vsel %vm1921, %v2961, 0
        %v2990 = vsel %vm1921, %v2962, 0
        %v2993 = vsel %vm1921, %v2963, 0
        %v2996 = vsel %vm1921, %v2964, 0
        %2998 = vmatpush.msra.mxu0 0.0
        %2999 = vmatpush.msra.mxu0 0.0
        %3000 = vmatpush.msra.mxu0 0.0
        %3001 = vmatpush.msra.mxu0 0.0
        %3002 = vmatpush.msra.mxu0 0.0
        %3003 = vmatpush.msra.mxu0 0.0
        %3004 = vmatpush.msra.mxu0 0.0
        %3005 = vmatpush.msra.mxu0 %v2973
        %3006 = vmatpush.msra.mxu0 %v2972
        %3007 = vmatpush.msra.mxu0 %v2971
        %3008 = vmatpush.msra.mxu0 %v2970
        %3009 = vmatpush.msra.mxu0 %v2969
        %3010 = vmatpush.msra.mxu0 %v2968
        %3011 = vmatpush.msra.mxu0 %v2967
        %3012 = vmatpush.msra.mxu0 %v2966
        %3013 = vmatpush.msra.mxu0 %v2965
        %3014 = vmatmul.f32.gmra.mxu0 %v2975
        %v3015 = vpop.f32.mrf.mxu0
        %v3016 = vadd.f32 0.0, %v3015
        %3017 = vmatmul.f32.gmra.mxu0 %v2978
        %v3018 = vpop.f32.mrf.mxu0
        %v3019 = vadd.f32 0.0, %v3018
        %3020 = vmatmul.f32.gmra.mxu0 %v2981
        %v3021 = vpop.f32.mrf.mxu0
        %v3022 = vadd.f32 0.0, %v3021
        %3023 = vmatmul.f32.gmra.mxu0 %v2984
        %v3024 = vpop.f32.mrf.mxu0
        %v3025 = vadd.f32 0.0, %v3024
        %3026 = vmatmul.f32.gmra.mxu0 %v2987
        %v3027 = vpop.f32.mrf.mxu0
        %v3028 = vadd.f32 0.0, %v3027
        %3029 = vmatmul.f32.gmra.mxu0 %v2990
        %v3030 = vpop.f32.mrf.mxu0
        %v3031 = vadd.f32 0.0, %v3030
        %3032 = vmatmul.f32.gmra.mxu0 %v2993
        %v3033 = vpop.f32.mrf.mxu0
        %v3034 = vadd.f32 0.0, %v3033
        %3035 = vmatmul.f32.gmra.mxu0 %v2996
        %v3036 = vpop.f32.mrf.mxu0
        %v3037 = vadd.f32 0.0, %v3036
        %3038 = vdwg.mxu0
        %v3039 = vld [vmem:[%s14] sm:$0x1]
        %v3041 = vperm.slane %v3039, 0
        %v3043 = vmul.f32 %v3016, %v3041
        %v3044 = vmul.f32 %v3019, %v3041
        %v3045 = vmul.f32 %v3022, %v3041
        %v3046 = vmul.f32 %v3025, %v3041
        %v3047 = vmul.f32 %v3028, %v3041
        %v3048 = vmul.f32 %v3031, %v3041
        %v3049 = vmul.f32 %v3034, %v3041
        %v3050 = vmul.f32 %v3037, %v3041
        %v3051 = vld [vmem:[%s15] sm:$0x1]
        %v3053 = vperm.slane %v3051, 0
        %v3055 = vadd.f32 %v3043, %v3053
        %v3056 = vadd.f32 %v3044, %v3053
        %v3057 = vadd.f32 %v3045, %v3053
        %v3058 = vadd.f32 %v3046, %v3053
        %v3059 = vadd.f32 %v3047, %v3053
        %v3060 = vadd.f32 %v3048, %v3053
        %v3061 = vadd.f32 %v3049, %v3053
        %v3062 = vadd.f32 %v3050, %v3053
        %v3063 = vadd.f32 %v3055, %v2019
        %v3064 = vadd.f32 %v3056, %v2020
        %v3065 = vadd.f32 %v3057, %v2021
        %v3066 = vadd.f32 %v3058, %v2022
        %v3067 = vadd.f32 %v3059, %v2023
        %v3068 = vadd.f32 %v3060, %v2024
        %v3069 = vadd.f32 %v3061, %v2025
        %v3070 = vadd.f32 %v3062, %v2026
        %v3071 = vmax.f32 %v3063, 0.0
        %v3072 = vmax.f32 %v3064, 0.0
        %v3073 = vmax.f32 %v3065, 0.0
        %v3074 = vmax.f32 %v3066, 0.0
        %v3075 = vmax.f32 %v3067, 0.0
        %v3076 = vmax.f32 %v3068, 0.0
        %v3077 = vmax.f32 %v3069, 0.0
        %v3078 = vmax.f32 %v3070, 0.0
        %3079 = vst.msk [vmem:[%s648] sm:$0xff] %vm705, %v3071
        %3080 = vst.msk [vmem:[%s648 + $0x8] sm:$0xff] %vm705, %v3072
        %3081 = vst.msk [vmem:[%s648 + $0x10] sm:$0xff] %vm705, %v3073
        %3082 = vst.msk [vmem:[%s648 + $0x18] sm:$0xff] %vm705, %v3074
        %3083 = vst.msk [vmem:[%s648 + $0x20] sm:$0xff] %vm705, %v3075
        %3084 = vst.msk [vmem:[%s648 + $0x28] sm:$0xff] %vm705, %v3076
        %3085 = vst.msk [vmem:[%s648 + $0x30] sm:$0xff] %vm705, %v3077
        %3086 = vst.msk [vmem:[%s648 + $0x38] sm:$0xff] %vm705, %v3078
        %v3087 = vsel %vm705, %v3071, 0.0
        %v3088 = vsel %vm705, %v3072, 0.0
        %v3089 = vadd.f32 %v3087, %v3088
        %v3090 = vsel %vm705, %v3073, 0.0
        %v3091 = vadd.f32 %v3089, %v3090
        %v3092 = vsel %vm705, %v3074, 0.0
        %v3093 = vadd.f32 %v3091, %v3092
        %v3094 = vsel %vm705, %v3075, 0.0
        %v3095 = vadd.f32 %v3093, %v3094
        %v3096 = vsel %vm705, %v3076, 0.0
        %v3097 = vadd.f32 %v3095, %v3096
        %v3098 = vsel %vm705, %v3077, 0.0
        %v3099 = vadd.f32 %v3097, %v3098
        %v3100 = vsel %vm705, %v3078, 0.0
        %v3101 = vadd.f32 %v3099, %v3100
        %v3102 = vrot.slane %v3101, 4
        %v3103 = vadd.f32 %v3101, %v3102
        %v3104 = vrot.slane %v3103, 2
        %v3105 = vadd.f32 %v3103, %v3104
        %v3106 = vrot.slane %v3105, 1
        %v3107 = vadd.f32 %v3105, %v3106
        %v3108 = vmul.f32 %v3107, 0.015625
        %vm3109 = vcmask 57344
        %3110 = vst.msk [vmem:[%s632] sm:$0x1] %vm3109, %v3108
        %v3111 = vld [vmem:[%s16] sm:$0xff]
        %v3112 = vld [vmem:[%s17] sm:$0x1]
        %v3114 = vsel %vm705, %v3108, 0
        %3116 = vmatpush.msra.mxu0 0.0
        %3117 = vmatpush.msra.mxu0 0.0
        %3118 = vmatpush.msra.mxu0 0.0
        %3119 = vmatpush.msra.mxu0 0.0
        %3120 = vmatpush.msra.mxu0 0.0
        %3121 = vmatpush.msra.mxu0 0.0
        %3122 = vmatpush.msra.mxu0 0.0
        %3123 = vmatpush.msra.mxu0 0.0
        %3124 = vmatpush.msra.mxu0 0.0
        %3125 = vmatpush.msra.mxu0 0.0
        %3126 = vmatpush.msra.mxu0 0.0
        %3127 = vmatpush.msra.mxu0 0.0
        %3128 = vmatpush.msra.mxu0 0.0
        %3129 = vmatpush.msra.mxu0 0.0
        %3130 = vmatpush.msra.mxu0 0.0
        %3131 = vmatpush.msra.mxu0 %v3111
        %3132 = vmatmul.f32.gmra.mxu0 %v3114
        %v3133 = vpop.f32.mrf.mxu0
        %v3134 = vadd.f32 %v3112, %v3133
        %3135 = vdwg.mxu0
        %vm3136 = vcmask 73728
        %3137 = vst.msk [vmem:[%s638] sm:$0x1] %vm3136, %v3134
        %p3138 = scmp.lt.s32.totalorder %s38, 1
        %s3139 = scalar_select %p3138, %s38, 1
        %s3140 = smul.addr %s3139, 8
        %s3141 = smul.addr %s3140, 8
        %s3142 = scalar_lea.vmem %s18, %s3141
        %s3143 = sand.u32 %s455, 1
        %s3144 = scalar_lea.sflag [#allocation6], %s3143
        %s3145 = sand.u32 %s455, 1
        %s3146 = scalar_lea.vmem [#allocation5], %s3145
        %s3147 = sand.u32 %s481, 1
        %s3148 = scalar_lea.sflag [#allocation8], %s3147
        %s3149 = sand.u32 %s481, 1
        %s3150 = scalar_lea.vmem [#allocation7], %s3149
        // Predicated region
        $region93: #{_lambda_.1} parent=91 // pred_check
          %p3151 = pneg %p439
        $region94: #{_lambda_.1} parent=91 // pred_check_branch
          %3153 = sbr.rel (%p3151) target = $region96
        $region95: #{_lambda_.1} parent=91 // pred_region
          _
        $region96: #{_lambda_.1} parent=91 // pred_fallthru
          _
        // Predicated region
        $region97: #{_lambda_.1} parent=91 // pred_check
          %p3154 = pneg %p465
        $region98: #{_lambda_.1} parent=91 // pred_check_branch
          %3156 = sbr.rel (%p3154) target = $region100
        $region99: #{_lambda_.1} parent=91 // pred_region
          %3158 = vsyncadd %s3144, 0
          %s3159 = scalar_lea.hbm %s19, %s38
          %s3161 = sshll.u32 %s3146, 4
          %s3162 = int_to_ptr.vmem [resolvable:$true] %s3161
          %s3163 = sshll.u32 %s3159, 4
          %s3164 = int_to_ptr.hbm [resolvable:$true] %s3163
          %3166 = dma.vmem_to_hbm [thread:$0]  %s3162, 16, %s3164, %s3144
        $region100: #{_lambda_.1} parent=91 // pred_fallthru
          _
        // Predicated region
        $region101: #{_lambda_.1} parent=91 // pred_check
          %p3167 = pneg %p491
        $region102: #{_lambda_.1} parent=91 // pred_check_branch
          %3169 = sbr.rel (%p3167) target = $region104
        $region103: #{_lambda_.1} parent=91 // pred_region
          %3171 = vsyncadd %s3148, 0
          %s3172 = scalar_lea.hbm %s20, %s38
          %s3174 = sshll.u32 %s3150, 4
          %s3175 = int_to_ptr.vmem [resolvable:$true] %s3174
          %s3176 = sshll.u32 %s3172, 4
          %s3177 = int_to_ptr.hbm [resolvable:$true] %s3176
          %3179 = dma.vmem_to_hbm [thread:$0]  %s3175, 16, %s3177, %s3148
        $region104: #{_lambda_.1} parent=91 // pred_fallthru
          _
      $region92: #{_lambda_.1} parent=5 // pred_fallthru
        _
      %p3180 = scmp.le.s32.totalorder 2, %s33
      // Predicated region
      $region105: #{_lambda_.1} parent=5 // pred_check
        %p3181 = pneg %p3180
      $region106: #{_lambda_.1} parent=5 // pred_check_branch
        %3183 = sbr.rel (%p3181) target = $region108
      $region107: #{_lambda_.1} parent=5 // pred_region
        %s3184 = ssub.s32 %s33, 2
        // Predicated region
        $region109: #{_lambda_.1} parent=107 // pred_check
          %p3185 = pneg %p445
        $region110: #{_lambda_.1} parent=107 // pred_check_branch
          %3187 = sbr.rel (%p3185) target = $region112
        $region111: #{_lambda_.1} parent=107 // pred_region
          %p3188 = scmp.lt.s32.totalorder %s39, 1
          %s3189 = scalar_select %p3188, %s39, 1
          %s3190 = smul.addr %s3189, 8
          %s3191 = smul.addr %s3190, 8
          %s3192 = scalar_lea.vmem %s18, %s3191
        $region112: #{_lambda_.1} parent=107 // pred_fallthru
          _
        // Predicated region
        $region113: #{_lambda_.1} parent=107 // pred_check
          %p3193 = pneg %p471
        $region114: #{_lambda_.1} parent=107 // pred_check_branch
          %3195 = sbr.rel (%p3193) target = $region116
        $region115: #{_lambda_.1} parent=107 // pred_region
          %s3196 = sand.u32 %s456, 1
          %s3197 = scalar_lea.sflag [#allocation6], %s3196
          %s3198 = sand.u32 %s456, 1
          %s3199 = scalar_lea.vmem [#allocation5], %s3198
          %3201 = dma.done %s3197, 16
        $region116: #{_lambda_.1} parent=107 // pred_fallthru
          _
        // Predicated region
        $region117: #{_lambda_.1} parent=107 // pred_check
          %p3202 = pneg %p497
        $region118: #{_lambda_.1} parent=107 // pred_check_branch
          %3204 = sbr.rel (%p3202) target = $region120
        $region119: #{_lambda_.1} parent=107 // pred_region
          %s3205 = sand.u32 %s482, 1
          %s3206 = scalar_lea.sflag [#allocation8], %s3205
          %s3207 = sand.u32 %s482, 1
          %s3208 = scalar_lea.vmem [#allocation7], %s3207
          %3210 = dma.done %s3206, 16
        $region120: #{_lambda_.1} parent=107 // pred_fallthru
          _
      $region108: #{_lambda_.1} parent=5 // pred_fallthru
        _
    $region6: #{_lambda_.1} parent=1 // loop_footer
      %s37 = sadd.s32 1, %s33
    $region7: #{_lambda_.1} parent=1 // loop_footer_branch
      %32 = sbr.rel target = $region3
    $region8: #{_lambda_.1} parent=1 // loop_exit
      _
    %3211 = vsyncpa [#allocation6], 1
    %s3212 = scalar_lea.sflag [#allocation6], 1
    %3213 = vsyncpa %s3212, 1
    %3214 = vsyncpa [#allocation8], 1
    %s3215 = scalar_lea.sflag [#allocation8], 1
    %3216 = vsyncpa %s3215, 1

</llo_original>
